<compile_context>
chip_gen: v6e
topology: v6e:2x2x1
jax: 0.10.0
libtpu: 0.0.40
codegen_flags: <defaults>
</compile_context>

<pallas_src>
import math

import jax
import jax.numpy as jnp
from jax.experimental import pallas as pl
from jax.experimental.pallas import tpu as pltpu

# Small, self-consistent shapes (dim % n_heads == 0, head_dim even for RoPE).
B, S, D = 2, 8, 64           # batch, seq, model dim
H = 4                        # n_heads (n_kv_heads defaults to n_heads)
DH = D // H                  # head_dim = 16
HIDDEN = 4 * D               # FFN hidden dim = 256
BS = B * S
EPS = float(jnp.finfo(jnp.float32).eps)   # nn.RMSNorm(dim) default eps
SCALE = 1.0 / math.sqrt(DH)  # SDPA default scale

assert D % S == 0            # required by the scramble->wo fold below
assert DH % 2 == 0


# ---------------------------------------------------------------------------
# Fused kernel: RMSNorm -> fused QKV -> RoPE -> causal MHA (all heads, one
# score matmul) -> scramble folded into wo -> residual -> RMSNorm -> SwiGLU
# FFN -> residual.  Single invocation, batch folded into the row dimension.
# ---------------------------------------------------------------------------
def _encoder_kernel(x_ref, anw_ref, wqkv_ref, bqkv_ref, cos_ref, sine_ref,
                    sino_ref, hmask_ref, cbias_ref, wo_ref, bo_ref, fnw_ref,
                    w12_ref, w3_ref, o_ref, yt_ref):
    x = x_ref[...]                                            # (BS, D) f32

    # ---- RMSNorm (attention_norm) ----
    xn = x * jax.lax.rsqrt(jnp.mean(x * x, axis=-1, keepdims=True) + EPS)
    xn = xn * anw_ref[...]

    # ---- fused Q/K/V projection: one (BS,D)x(D,3D) bf16 matmul, f32 accum ----
    qkv = jnp.dot(xn.astype(jnp.bfloat16), wqkv_ref[...],
                  preferred_element_type=jnp.float32) + bqkv_ref[...]   # (BS, 3D)

    # ---- rotary embedding on the contiguous [q | k] 128-lane slab ----
    #   out[2i]   = x[2i]*cos - x[2i+1]*sin
    #   out[2i+1] = x[2i]*sin + x[2i+1]*cos
    # pair-swap via two lane rolls (XLU slot); the +/- sign and the lane-parity
    # selection are pre-folded into the two sin tables -> no iota / where.
    qk = qkv[:, :2 * D]                                       # (BS, 2D) == (16, 128)
    qk = (qk * cos_ref[...]
          + pltpu.roll(qk, 2 * D - 1, axis=1) * sine_ref[...]   # lane j <- lane j+1
          + pltpu.roll(qk, 1, axis=1) * sino_ref[...])          # lane j <- lane j-1
    v = qkv[:, 2 * D:]                                        # (BS, D)

    hmask = hmask_ref[...]                                    # (H*S, D)   0/1 head blocks
    cbias = cbias_ref[...]                                    # (H*S, S)   0 / -1e30 causal
    wo = wo_ref[...]                                          # (D, D)     bf16

    attn_rows = []
    for b in range(B):                                        # B=2, unrolled
        r0 = b * S
        qb = qk[r0:r0 + S, :D]                                # (S, D)
        kb = qk[r0:r0 + S, D:]                                # (S, D)
        vb = v[r0:r0 + S, :]                                  # (S, D)

        # ---- all-head scores with ONE matmul: sublane-tile Q over heads,
        #      mask to the per-head column block, contract against K ----
        q_rep = jnp.concatenate([qb] * H, axis=0) * hmask     # (H*S, D)
        scores = jax.lax.dot_general(                          # q_rep @ kb^T
            q_rep, kb, (((1,), (1,)), ((), ())),
            preferred_element_type=jnp.float32) * SCALE + cbias   # (H*S, S)

        # ---- softmax over keys (lane axis) ----
        m = jnp.max(scores, axis=-1, keepdims=True)
        pmat = jnp.exp(scores - m)
        pmat = pmat * pl.reciprocal(jnp.sum(pmat, axis=-1, keepdims=True),
                                    approx=True)

        # ---- per-head P·V, stored head-transposed: yt[h*DH+d, s] = y[h, s, d]
        #      (this is exactly the flat (H, DH, S) order of the torch tensor
        #      just before its .view(B, S, -1)) ----
        yt_blocks = []
        for h in range(H):
            p_h = pmat[h * S:(h + 1) * S, :]                  # (S, S)
            v_h = vb[:, h * DH:(h + 1) * DH]                  # (S, DH)
            yt_blocks.append(
                jnp.dot(p_h, v_h, preferred_element_type=jnp.float32).T)  # (DH, S)
        yt_ref[...] = jnp.concatenate(yt_blocks, axis=0)      # (D, S)

        # ---- module's y.transpose(-1,-2).view(B,S,-1) scramble folded into the
        #      output projection:  scr[s, 8a+r] == yt[8s+a, r]  implies
        #        scr @ wo == sum_a  yt[a::8, :] @ wo[8a:8a+8, :]
        #      -> 8 strided reads feeding 8 accumulated MXU matmuls, no scr
        #      scratch, no masked column stores. ----
        acc = jnp.zeros((S, D), jnp.float32)
        for a in range(D // S):
            g = yt_ref[pl.ds(a, S, stride=D // S), :]         # (S, S)
            acc = acc + jnp.dot(g.astype(jnp.bfloat16),
                                wo[a * S:(a + 1) * S, :],
                                preferred_element_type=jnp.float32)
        attn_rows.append(acc)

    attn = jnp.concatenate(attn_rows, axis=0)                 # (BS, D)

    # ---- output projection bias + residual ----
    h1 = x + attn + bo_ref[...]

    # ---- RMSNorm (ffn_norm) + SwiGLU FFN (fused w1|w2) + residual ----
    hn = h1 * jax.lax.rsqrt(jnp.mean(h1 * h1, axis=-1, keepdims=True) + EPS)
    hn = hn * fnw_ref[...]
    x12 = jnp.dot(hn.astype(jnp.bfloat16), w12_ref[...],
                  preferred_element_type=jnp.float32)          # (BS, 2*HIDDEN)
    x1, x2 = x12[:, :HIDDEN], x12[:, HIDDEN:]
    hid = x1 * jax.nn.sigmoid(x1) * x2                         # silu(x1) * x2
    o_ref[...] = h1 + jnp.dot(hid.astype(jnp.bfloat16), w3_ref[...],
                              preferred_element_type=jnp.float32)


# ---------------------------------------------------------------------------
# Wrapper
# ---------------------------------------------------------------------------
def encoder_block_pallas(x, p):
    x2 = x.reshape(BS, D)
    inputs = (x2, p["attn_norm"], p["wqkv_bf16"], p["bqkv"], p["cos_qk"],
              p["sin_even_qk"], p["sin_odd_qk"], p["head_mask"],
              p["causal_bias"], p["wo_bf16"], p["bo"], p["ffn_norm"],
              p["w12_bf16"], p["w3_bf16"])

    flops = (2 * BS * D * 3 * D            # qkv
             + 2 * 2 * B * H * S * S * DH  # scores + P.V
             + 2 * BS * D * D              # wo
             + 2 * BS * D * 2 * HIDDEN     # w1|w2
             + 2 * BS * HIDDEN * D)        # w3
    transcendentals = B * H * S * S + BS * HIDDEN + 2 * BS
    bytes_accessed = (sum(int(a.size) * int(a.dtype.itemsize) for a in inputs)
                      + BS * D * 4)

    vmem_spec = pl.BlockSpec(memory_space=pltpu.MemorySpace.VMEM)
    out = pl.pallas_call(
        _encoder_kernel,
        out_shape=jax.ShapeDtypeStruct((BS, D), jnp.float32),
        in_specs=[vmem_spec] * len(inputs),
        out_specs=vmem_spec,
        scratch_shapes=[pltpu.VMEM((D, S), jnp.float32)],   # head-transposed y
        cost_estimate=pl.CostEstimate(flops=flops,
                                      transcendentals=transcendentals,
                                      bytes_accessed=bytes_accessed),
        # TODO(synk): on v7x only, benchmark a grid=(B,) + ("parallel",) megacore
        # split against this single-step variant before adopting it.
    )(*inputs)
    return out.reshape(B, S, D)


# ---------------------------------------------------------------------------
# Deterministic parameters, rotary / mask tables, fused bf16 weights
# ---------------------------------------------------------------------------
def make_params(key):
    ks = jax.random.split(key, 11)
    sc = 0.05
    nrm = lambda k, shape: sc * jax.random.normal(k, shape, jnp.float32)
    p = {
        "attn_norm": jnp.ones((1, D), jnp.float32),   # nn.RMSNorm init
        "ffn_norm": jnp.ones((1, D), jnp.float32),
        "wq": nrm(ks[0], (D, D)), "bq": nrm(ks[1], (1, D)),
        "wk": nrm(ks[2], (D, D)), "bk": nrm(ks[3], (1, D)),
        "wv": nrm(ks[4], (D, D)), "bv": nrm(ks[5], (1, D)),
        "wo": nrm(ks[6], (D, D)), "bo": nrm(ks[7], (1, D)),
        "w1": nrm(ks[8], (D, HIDDEN)),     # bias=False
        "w2": nrm(ks[9], (D, HIDDEN)),     # bias=False
        "w3": nrm(ks[10], (HIDDEN, D)),    # bias=False
    }
    # LLaMA rotary frequency tables: freqs[m, i] = m / 10000^(2i/head_dim)
    theta = 1.0 / (10000.0 ** (jnp.arange(0, DH, 2, dtype=jnp.float32) / DH))
    freqs = jnp.outer(jnp.arange(S, dtype=jnp.float32), theta)    # (S, DH//2)
    p["cos_half"] = jnp.cos(freqs)
    p["sin_half"] = jnp.sin(freqs)
    # lane-aligned (S, D) tables: each freq repeated for its (2i, 2i+1) pair,
    # tiled across heads.
    cos_full = jnp.tile(jnp.repeat(p["cos_half"], 2, axis=-1), (1, H))   # (S, D)
    sin_full = jnp.tile(jnp.repeat(p["sin_half"], 2, axis=-1), (1, H))   # (S, D)
    even = (jnp.arange(D) % 2) == 0
    sin_even = jnp.where(even[None, :], -sin_full, 0.0)   # multiplies roll(lane+1)
    sin_odd = jnp.where(even[None, :], 0.0, sin_full)     # multiplies roll(lane-1)
    # tables for the fused [q | k] slab (width 2*D), tiled over the folded batch
    p["cos_qk"] = jnp.tile(jnp.tile(cos_full, (1, 2)), (B, 1))           # (BS, 2D)
    p["sin_even_qk"] = jnp.tile(jnp.tile(sin_even, (1, 2)), (B, 1))
    p["sin_odd_qk"] = jnp.tile(jnp.tile(sin_odd, (1, 2)), (B, 1))
    # fused weights (bf16 copies for the kernel; f32 originals for the reference)
    p["wqkv"] = jnp.concatenate([p["wq"], p["wk"], p["wv"]], axis=1)     # (D, 3D)
    p["bqkv"] = jnp.concatenate([p["bq"], p["bk"], p["bv"]], axis=1)     # (1, 3D)
    p["w12"] = jnp.concatenate([p["w1"], p["w2"]], axis=1)               # (D, 2*HIDDEN)
    p["wqkv_bf16"] = p["wqkv"].astype(jnp.bfloat16)
    p["wo_bf16"] = p["wo"].astype(jnp.bfloat16)
    p["w12_bf16"] = p["w12"].astype(jnp.bfloat16)
    p["w3_bf16"] = p["w3"].astype(jnp.bfloat16)
    # constant attention tables
    head_ids = jnp.repeat(jnp.arange(H), S)                              # (H*S,)
    col_head = jnp.arange(D) // DH                                       # (D,)
    p["head_mask"] = (head_ids[:, None] == col_head[None, :]).astype(jnp.float32)
    tri = jnp.where(jnp.tril(jnp.ones((S, S), bool)), 0.0, -1e30).astype(jnp.float32)
    p["causal_bias"] = jnp.tile(tri, (H, 1))                             # (H*S, S)
    return p


# ---------------------------------------------------------------------------
# Pure-JAX reference (mirrors the PyTorch module, including the transpose bug)
# ---------------------------------------------------------------------------
def encoder_block_reference(x, p):
    def rms(v, w):
        return v * jax.lax.rsqrt(jnp.mean(v * v, axis=-1, keepdims=True) + EPS) * w

    def rope(t):
        tr = t.reshape(B, S, H, DH // 2, 2)
        t0, t1 = tr[..., 0], tr[..., 1]
        c = p["cos_half"][None, :, None, :]
        sn = p["sin_half"][None, :, None, :]
        return jnp.stack([t0 * c - t1 * sn, t0 * sn + t1 * c], axis=-1).reshape(B, S, D)

    xn = rms(x, p["attn_norm"])
    q = xn @ p["wq"] + p["bq"]
    k = xn @ p["wk"] + p["bk"]
    v = xn @ p["wv"] + p["bv"]
    q, k = rope(q), rope(k)
    q4 = q.reshape(B, S, H, DH).transpose(0, 2, 1, 3)
    k4 = k.reshape(B, S, H, DH).transpose(0, 2, 1, 3)
    v4 = v.reshape(B, S, H, DH).transpose(0, 2, 1, 3)
    scores = jnp.einsum("bhqd,bhkd->bhqk", q4, k4) / math.sqrt(DH)
    mask = jnp.tril(jnp.ones((S, S), bool))
    scores = jnp.where(mask, scores, -jnp.inf)
    attn = jax.nn.softmax(scores, axis=-1)
    y = jnp.einsum("bhqk,bhkd->bhqd", attn, v4)
    # module's exact (buggy) reshape: transpose(-1,-2).contiguous().view(B, S, -1)
    y = jnp.swapaxes(y, -1, -2).reshape(B, S, D)
    h = x + (y @ p["wo"] + p["bo"])
    hn = rms(h, p["ffn_norm"])
    hidden = jax.nn.silu(hn @ p["w1"]) * (hn @ p["w2"])
    return h + hidden @ p["w3"]


if __name__ == "__main__":
    key = jax.random.PRNGKey(0)
    kp, kx = jax.random.split(key)
    params = make_params(kp)
    x = jax.random.normal(kx, (B, S, D), jnp.float32)

    out = encoder_block_pallas(x, params)
    out = jax.block_until_ready(out)

    ref = encoder_block_reference(x, params)
    assert out.shape == (B, S, D)
    err = float(jnp.max(jnp.abs(out - ref)))
    assert jnp.allclose(out, ref, atol=2e-2, rtol=2e-2), err

    print("KERNEL_OK")
</pallas_src>

<mosaic_0001>
module attributes {stable_mosaic.version = 11 : i64} {
  func.func @_encoder_kernel(%arg0: memref<16x64xf32, #tpu.memory_space<vmem>>, %arg1: memref<1x64xf32, #tpu.memory_space<vmem>>, %arg2: memref<64x192xbf16, #tpu.memory_space<vmem>>, %arg3: memref<1x192xf32, #tpu.memory_space<vmem>>, %arg4: memref<16x128xf32, #tpu.memory_space<vmem>>, %arg5: memref<16x128xf32, #tpu.memory_space<vmem>>, %arg6: memref<16x128xf32, #tpu.memory_space<vmem>>, %arg7: memref<32x64xf32, #tpu.memory_space<vmem>>, %arg8: memref<32x8xf32, #tpu.memory_space<vmem>>, %arg9: memref<64x64xbf16, #tpu.memory_space<vmem>>, %arg10: memref<1x64xf32, #tpu.memory_space<vmem>>, %arg11: memref<1x64xf32, #tpu.memory_space<vmem>>, %arg12: memref<64x512xbf16, #tpu.memory_space<vmem>>, %arg13: memref<256x64xbf16, #tpu.memory_space<vmem>>, %arg14: memref<16x64xf32, #tpu.memory_space<vmem>>, %arg15: memref<64x8xf32, #tpu.memory_space<vmem>>) attributes {dimension_semantics = [], scalar_prefetch = 0 : i64, scratch_operands = 1 : i64, tpu.core_type = #tpu.core_type<tc>} {
    %c0 = arith.constant 0 : index
    %c0_0 = arith.constant 0 : index
    %0 = vector.load %arg0[%c0, %c0_0] : memref<16x64xf32, #tpu.memory_space<vmem>>, vector<16x64xf32>
    %1 = arith.mulf %0, %0 : vector<16x64xf32>
    %cst = arith.constant dense<0.000000e+00> : vector<16xf32>
    %2 = vector.multi_reduction <add>, %1, %cst [1] : vector<16x64xf32> to vector<16xf32>
    %3 = vector.shape_cast %2 : vector<16xf32> to vector<16x1xf32>
    %cst_1 = arith.constant 6.400000e+01 : f32
    %4 = vector.broadcast %cst_1 : f32 to vector<16x1xf32>
    %5 = arith.divf %3, %4 : vector<16x1xf32>
    %cst_2 = arith.constant 1.1920929E-7 : f32
    %6 = vector.broadcast %cst_2 : f32 to vector<16x1xf32>
    %7 = arith.addf %5, %6 : vector<16x1xf32>
    %8 = math.rsqrt %7 : vector<16x1xf32>
    %9 = vector.broadcast %8 : vector<16x1xf32> to vector<16x64xf32>
    %10 = arith.mulf %0, %9 : vector<16x64xf32>
    %c0_3 = arith.constant 0 : index
    %c0_4 = arith.constant 0 : index
    %11 = vector.load %arg1[%c0_3, %c0_4] : memref<1x64xf32, #tpu.memory_space<vmem>>, vector<1x64xf32>
    %12 = vector.broadcast %11 : vector<1x64xf32> to vector<16x64xf32>
    %13 = arith.mulf %10, %12 : vector<16x64xf32>
    %14 = arith.truncf %13 : vector<16x64xf32> to vector<16x64xbf16>
    %c0_5 = arith.constant 0 : index
    %c0_6 = arith.constant 0 : index
    %15 = vector.load %arg2[%c0_5, %c0_6] : memref<64x192xbf16, #tpu.memory_space<vmem>>, vector<64x192xbf16>
    %cst_7 = arith.constant dense<0.000000e+00> : vector<16x192xf32>
    %16 = tpu.matmul %14, %15, %cst_7 {dimension_numbers = #tpu.dot_dimension_numbers<[1], [0], [0], [1], [0, 0, 1, 1], [], []>} : vector<16x64xbf16>, vector<64x192xbf16>, vector<16x192xf32> -> vector<16x192xf32>
    %c0_8 = arith.constant 0 : index
    %c0_9 = arith.constant 0 : index
    %17 = vector.load %arg3[%c0_8, %c0_9] : memref<1x192xf32, #tpu.memory_space<vmem>>, vector<1x192xf32>
    %18 = vector.broadcast %17 : vector<1x192xf32> to vector<16x192xf32>
    %19 = arith.addf %16, %18 : vector<16x192xf32>
    %20 = vector.extract_strided_slice %19 {offsets = [0, 0], sizes = [16, 128], strides = [1, 1]} : vector<16x192xf32> to vector<16x128xf32>
    %c0_10 = arith.constant 0 : index
    %c0_11 = arith.constant 0 : index
    %21 = vector.load %arg4[%c0_10, %c0_11] : memref<16x128xf32, #tpu.memory_space<vmem>>, vector<16x128xf32>
    %22 = arith.mulf %20, %21 : vector<16x128xf32>
    %c127_i32 = arith.constant 127 : i32
    %23 = tpu.dynamic_rotate %20 by %c127_i32 dim 1 : vector<16x128xf32>, i32 -> vector<16x128xf32>
    %c0_12 = arith.constant 0 : index
    %c0_13 = arith.constant 0 : index
    %24 = vector.load %arg5[%c0_12, %c0_13] : memref<16x128xf32, #tpu.memory_space<vmem>>, vector<16x128xf32>
    %25 = arith.mulf %23, %24 : vector<16x128xf32>
    %26 = arith.addf %22, %25 : vector<16x128xf32>
    %c1_i32 = arith.constant 1 : i32
    %27 = tpu.dynamic_rotate %20 by %c1_i32 dim 1 : vector<16x128xf32>, i32 -> vector<16x128xf32>
    %c0_14 = arith.constant 0 : index
    %c0_15 = arith.constant 0 : index
    %28 = vector.load %arg6[%c0_14, %c0_15] : memref<16x128xf32, #tpu.memory_space<vmem>>, vector<16x128xf32>
    %29 = arith.mulf %27, %28 : vector<16x128xf32>
    %30 = arith.addf %26, %29 : vector<16x128xf32>
    %31 = vector.extract_strided_slice %19 {offsets = [0, 128], sizes = [16, 64], strides = [1, 1]} : vector<16x192xf32> to vector<16x64xf32>
    %c0_16 = arith.constant 0 : index
    %c0_17 = arith.constant 0 : index
    %32 = vector.load %arg7[%c0_16, %c0_17] : memref<32x64xf32, #tpu.memory_space<vmem>>, vector<32x64xf32>
    %c0_18 = arith.constant 0 : index
    %c0_19 = arith.constant 0 : index
    %33 = vector.load %arg8[%c0_18, %c0_19] : memref<32x8xf32, #tpu.memory_space<vmem>>, vector<32x8xf32>
    %c0_20 = arith.constant 0 : index
    %c0_21 = arith.constant 0 : index
    %34 = vector.load %arg9[%c0_20, %c0_21] : memref<64x64xbf16, #tpu.memory_space<vmem>>, vector<64x64xbf16>
    %35 = vector.extract_strided_slice %30 {offsets = [0, 0], sizes = [8, 64], strides = [1, 1]} : vector<16x128xf32> to vector<8x64xf32>
    %36 = vector.extract_strided_slice %30 {offsets = [0, 64], sizes = [8, 64], strides = [1, 1]} : vector<16x128xf32> to vector<8x64xf32>
    %37 = vector.extract_strided_slice %31 {offsets = [0, 0], sizes = [8, 64], strides = [1, 1]} : vector<16x64xf32> to vector<8x64xf32>
    %38 = tpu.concatenate %35, %35, %35, %35 in 0 : vector<8x64xf32>, vector<8x64xf32>, vector<8x64xf32>, vector<8x64xf32> -> vector<32x64xf32>
    %39 = arith.mulf %38, %32 : vector<32x64xf32>
    %cst_22 = arith.constant dense<0.000000e+00> : vector<32x8xf32>
    %40 = tpu.matmul %39, %36, %cst_22 {dimension_numbers = #tpu.dot_dimension_numbers<[1], [1], [0], [0], [0, 0, 1, 0], [], []>} : vector<32x64xf32>, vector<8x64xf32>, vector<32x8xf32> -> vector<32x8xf32>
    %cst_23 = arith.constant 2.500000e-01 : f32
    %41 = vector.broadcast %cst_23 : f32 to vector<32x8xf32>
    %42 = arith.mulf %40, %41 : vector<32x8xf32>
    %43 = arith.addf %42, %33 : vector<32x8xf32>
    %cst_24 = arith.constant dense<0xFF800000> : vector<32xf32>
    %44 = vector.multi_reduction <maximumf>, %43, %cst_24 [1] : vector<32x8xf32> to vector<32xf32>
    %45 = vector.shape_cast %44 : vector<32xf32> to vector<32x1xf32>
    %46 = vector.broadcast %45 : vector<32x1xf32> to vector<32x8xf32>
    %47 = arith.subf %43, %46 : vector<32x8xf32>
    %48 = math.exp %47 : vector<32x8xf32>
    %cst_25 = arith.constant dense<0.000000e+00> : vector<32xf32>
    %49 = vector.multi_reduction <add>, %48, %cst_25 [1] : vector<32x8xf32> to vector<32xf32>
    %50 = vector.shape_cast %49 : vector<32xf32> to vector<32x1xf32>
    %51 = tpu.reciprocal %50 {approx = true} : vector<32x1xf32> -> vector<32x1xf32>
    %52 = vector.broadcast %51 : vector<32x1xf32> to vector<32x8xf32>
    %53 = arith.mulf %48, %52 : vector<32x8xf32>
    %54 = vector.extract_strided_slice %53 {offsets = [0, 0], sizes = [8, 8], strides = [1, 1]} : vector<32x8xf32> to vector<8x8xf32>
    %55 = vector.extract_strided_slice %37 {offsets = [0, 0], sizes = [8, 16], strides = [1, 1]} : vector<8x64xf32> to vector<8x16xf32>
    %cst_26 = arith.constant dense<0.000000e+00> : vector<8x16xf32>
    %56 = tpu.matmul %54, %55, %cst_26 {dimension_numbers = #tpu.dot_dimension_numbers<[1], [0], [0], [1], [0, 0, 1, 1], [], []>} : vector<8x8xf32>, vector<8x16xf32>, vector<8x16xf32> -> vector<8x16xf32>
    %57 = tpu.transpose %56, [1, 0] : vector<8x16xf32> -> vector<16x8xf32>
    %58 = vector.extract_strided_slice %53 {offsets = [8, 0], sizes = [8, 8], strides = [1, 1]} : vector<32x8xf32> to vector<8x8xf32>
    %59 = vector.extract_strided_slice %37 {offsets = [0, 16], sizes = [8, 16], strides = [1, 1]} : vector<8x64xf32> to vector<8x16xf32>
    %cst_27 = arith.constant dense<0.000000e+00> : vector<8x16xf32>
    %60 = tpu.matmul %58, %59, %cst_27 {dimension_numbers = #tpu.dot_dimension_numbers<[1], [0], [0], [1], [0, 0, 1, 1], [], []>} : vector<8x8xf32>, vector<8x16xf32>, vector<8x16xf32> -> vector<8x16xf32>
    %61 = tpu.transpose %60, [1, 0] : vector<8x16xf32> -> vector<16x8xf32>
    %62 = vector.extract_strided_slice %53 {offsets = [16, 0], sizes = [8, 8], strides = [1, 1]} : vector<32x8xf32> to vector<8x8xf32>
    %63 = vector.extract_strided_slice %37 {offsets = [0, 32], sizes = [8, 16], strides = [1, 1]} : vector<8x64xf32> to vector<8x16xf32>
    %cst_28 = arith.constant dense<0.000000e+00> : vector<8x16xf32>
    %64 = tpu.matmul %62, %63, %cst_28 {dimension_numbers = #tpu.dot_dimension_numbers<[1], [0], [0], [1], [0, 0, 1, 1], [], []>} : vector<8x8xf32>, vector<8x16xf32>, vector<8x16xf32> -> vector<8x16xf32>
    %65 = tpu.transpose %64, [1, 0] : vector<8x16xf32> -> vector<16x8xf32>
    %66 = vector.extract_strided_slice %53 {offsets = [24, 0], sizes = [8, 8], strides = [1, 1]} : vector<32x8xf32> to vector<8x8xf32>
    %67 = vector.extract_strided_slice %37 {offsets = [0, 48], sizes = [8, 16], strides = [1, 1]} : vector<8x64xf32> to vector<8x16xf32>
    %cst_29 = arith.constant dense<0.000000e+00> : vector<8x16xf32>
    %68 = tpu.matmul %66, %67, %cst_29 {dimension_numbers = #tpu.dot_dimension_numbers<[1], [0], [0], [1], [0, 0, 1, 1], [], []>} : vector<8x8xf32>, vector<8x16xf32>, vector<8x16xf32> -> vector<8x16xf32>
    %69 = tpu.transpose %68, [1, 0] : vector<8x16xf32> -> vector<16x8xf32>
    %70 = tpu.concatenate %57, %61, %65, %69 in 0 : vector<16x8xf32>, vector<16x8xf32>, vector<16x8xf32>, vector<16x8xf32> -> vector<64x8xf32>
    %c0_30 = arith.constant 0 : index
    %c0_31 = arith.constant 0 : index
    %71 = vector.load %arg15[%c0_30, %c0_31] : memref<64x8xf32, #tpu.memory_space<vmem>>, vector<64x8xf32>
    tpu.vector_store %arg15[%c0_30, %c0_31], %70 {strides = array<i32>} : memref<64x8xf32, #tpu.memory_space<vmem>>, vector<64x8xf32>,
    %cst_32 = arith.constant 0.000000e+00 : f32
    %72 = vector.broadcast %cst_32 : f32 to vector<8x64xf32>
    %c0_33 = arith.constant 0 : index
    %c0_34 = arith.constant 0 : index
    %73 = tpu.strided_load %arg15[%c0_33, %c0_34] {strides = array<i32: 8, 1>} : memref<64x8xf32, #tpu.memory_space<vmem>>, vector<8x8xf32>
    %74 = arith.truncf %73 : vector<8x8xf32> to vector<8x8xbf16>
    %75 = vector.extract_strided_slice %34 {offsets = [0, 0], sizes = [8, 64], strides = [1, 1]} : vector<64x64xbf16> to vector<8x64xbf16>
    %cst_35 = arith.constant dense<0.000000e+00> : vector<8x64xf32>
    %76 = tpu.matmul %74, %75, %cst_35 {dimension_numbers = #tpu.dot_dimension_numbers<[1], [0], [0], [1], [0, 0, 1, 1], [], []>} : vector<8x8xbf16>, vector<8x64xbf16>, vector<8x64xf32> -> vector<8x64xf32>
    %77 = arith.addf %72, %76 : vector<8x64xf32>
    %c1 = arith.constant 1 : index
    %c0_36 = arith.constant 0 : index
    %78 = tpu.strided_load %arg15[%c1, %c0_36] {strides = array<i32: 8, 1>} : memref<64x8xf32, #tpu.memory_space<vmem>>, vector<8x8xf32>
    %79 = arith.truncf %78 : vector<8x8xf32> to vector<8x8xbf16>
    %80 = vector.extract_strided_slice %34 {offsets = [8, 0], sizes = [8, 64], strides = [1, 1]} : vector<64x64xbf16> to vector<8x64xbf16>
    %cst_37 = arith.constant dense<0.000000e+00> : vector<8x64xf32>
    %81 = tpu.matmul %79, %80, %cst_37 {dimension_numbers = #tpu.dot_dimension_numbers<[1], [0], [0], [1], [0, 0, 1, 1], [], []>} : vector<8x8xbf16>, vector<8x64xbf16>, vector<8x64xf32> -> vector<8x64xf32>
    %82 = arith.addf %77, %81 : vector<8x64xf32>
    %c2 = arith.constant 2 : index
    %c0_38 = arith.constant 0 : index
    %83 = tpu.strided_load %arg15[%c2, %c0_38] {strides = array<i32: 8, 1>} : memref<64x8xf32, #tpu.memory_space<vmem>>, vector<8x8xf32>
    %84 = arith.truncf %83 : vector<8x8xf32> to vector<8x8xbf16>
    %85 = vector.extract_strided_slice %34 {offsets = [16, 0], sizes = [8, 64], strides = [1, 1]} : vector<64x64xbf16> to vector<8x64xbf16>
    %cst_39 = arith.constant dense<0.000000e+00> : vector<8x64xf32>
    %86 = tpu.matmul %84, %85, %cst_39 {dimension_numbers = #tpu.dot_dimension_numbers<[1], [0], [0], [1], [0, 0, 1, 1], [], []>} : vector<8x8xbf16>, vector<8x64xbf16>, vector<8x64xf32> -> vector<8x64xf32>
    %87 = arith.addf %82, %86 : vector<8x64xf32>
    %c3 = arith.constant 3 : index
    %c0_40 = arith.constant 0 : index
    %88 = tpu.strided_load %arg15[%c3, %c0_40] {strides = array<i32: 8, 1>} : memref<64x8xf32, #tpu.memory_space<vmem>>, vector<8x8xf32>
    %89 = arith.truncf %88 : vector<8x8xf32> to vector<8x8xbf16>
    %90 = vector.extract_strided_slice %34 {offsets = [24, 0], sizes = [8, 64], strides = [1, 1]} : vector<64x64xbf16> to vector<8x64xbf16>
    %cst_41 = arith.constant dense<0.000000e+00> : vector<8x64xf32>
    %91 = tpu.matmul %89, %90, %cst_41 {dimension_numbers = #tpu.dot_dimension_numbers<[1], [0], [0], [1], [0, 0, 1, 1], [], []>} : vector<8x8xbf16>, vector<8x64xbf16>, vector<8x64xf32> -> vector<8x64xf32>
    %92 = arith.addf %87, %91 : vector<8x64xf32>
    %c4 = arith.constant 4 : index
    %c0_42 = arith.constant 0 : index
    %93 = tpu.strided_load %arg15[%c4, %c0_42] {strides = array<i32: 8, 1>} : memref<64x8xf32, #tpu.memory_space<vmem>>, vector<8x8xf32>
    %94 = arith.truncf %93 : vector<8x8xf32> to vector<8x8xbf16>
    %95 = vector.extract_strided_slice %34 {offsets = [32, 0], sizes = [8, 64], strides = [1, 1]} : vector<64x64xbf16> to vector<8x64xbf16>
    %cst_43 = arith.constant dense<0.000000e+00> : vector<8x64xf32>
    %96 = tpu.matmul %94, %95, %cst_43 {dimension_numbers = #tpu.dot_dimension_numbers<[1], [0], [0], [1], [0, 0, 1, 1], [], []>} : vector<8x8xbf16>, vector<8x64xbf16>, vector<8x64xf32> -> vector<8x64xf32>
    %97 = arith.addf %92, %96 : vector<8x64xf32>
    %c5 = arith.constant 5 : index
    %c0_44 = arith.constant 0 : index
    %98 = tpu.strided_load %arg15[%c5, %c0_44] {strides = array<i32: 8, 1>} : memref<64x8xf32, #tpu.memory_space<vmem>>, vector<8x8xf32>
    %99 = arith.truncf %98 : vector<8x8xf32> to vector<8x8xbf16>
    %100 = vector.extract_strided_slice %34 {offsets = [40, 0], sizes = [8, 64], strides = [1, 1]} : vector<64x64xbf16> to vector<8x64xbf16>
    %cst_45 = arith.constant dense<0.000000e+00> : vector<8x64xf32>
    %101 = tpu.matmul %99, %100, %cst_45 {dimension_numbers = #tpu.dot_dimension_numbers<[1], [0], [0], [1], [0, 0, 1, 1], [], []>} : vector<8x8xbf16>, vector<8x64xbf16>, vector<8x64xf32> -> vector<8x64xf32>
    %102 = arith.addf %97, %101 : vector<8x64xf32>
    %c6 = arith.constant 6 : index
    %c0_46 = arith.constant 0 : index
    %103 = tpu.strided_load %arg15[%c6, %c0_46] {strides = array<i32: 8, 1>} : memref<64x8xf32, #tpu.memory_space<vmem>>, vector<8x8xf32>
    %104 = arith.truncf %103 : vector<8x8xf32> to vector<8x8xbf16>
    %105 = vector.extract_strided_slice %34 {offsets = [48, 0], sizes = [8, 64], strides = [1, 1]} : vector<64x64xbf16> to vector<8x64xbf16>
    %cst_47 = arith.constant dense<0.000000e+00> : vector<8x64xf32>
    %106 = tpu.matmul %104, %105, %cst_47 {dimension_numbers = #tpu.dot_dimension_numbers<[1], [0], [0], [1], [0, 0, 1, 1], [], []>} : vector<8x8xbf16>, vector<8x64xbf16>, vector<8x64xf32> -> vector<8x64xf32>
    %107 = arith.addf %102, %106 : vector<8x64xf32>
    %c7 = arith.constant 7 : index
    %c0_48 = arith.constant 0 : index
    %108 = tpu.strided_load %arg15[%c7, %c0_48] {strides = array<i32: 8, 1>} : memref<64x8xf32, #tpu.memory_space<vmem>>, vector<8x8xf32>
    %109 = arith.truncf %108 : vector<8x8xf32> to vector<8x8xbf16>
    %110 = vector.extract_strided_slice %34 {offsets = [56, 0], sizes = [8, 64], strides = [1, 1]} : vector<64x64xbf16> to vector<8x64xbf16>
    %cst_49 = arith.constant dense<0.000000e+00> : vector<8x64xf32>
    %111 = tpu.matmul %109, %110, %cst_49 {dimension_numbers = #tpu.dot_dimension_numbers<[1], [0], [0], [1], [0, 0, 1, 1], [], []>} : vector<8x8xbf16>, vector<8x64xbf16>, vector<8x64xf32> -> vector<8x64xf32>
    %112 = arith.addf %107, %111 : vector<8x64xf32>
    %113 = vector.extract_strided_slice %30 {offsets = [8, 0], sizes = [8, 64], strides = [1, 1]} : vector<16x128xf32> to vector<8x64xf32>
    %114 = vector.extract_strided_slice %30 {offsets = [8, 64], sizes = [8, 64], strides = [1, 1]} : vector<16x128xf32> to vector<8x64xf32>
    %115 = vector.extract_strided_slice %31 {offsets = [8, 0], sizes = [8, 64], strides = [1, 1]} : vector<16x64xf32> to vector<8x64xf32>
    %116 = tpu.concatenate %113, %113, %113, %113 in 0 : vector<8x64xf32>, vector<8x64xf32>, vector<8x64xf32>, vector<8x64xf32> -> vector<32x64xf32>
    %117 = arith.mulf %116, %32 : vector<32x64xf32>
    %cst_50 = arith.constant dense<0.000000e+00> : vector<32x8xf32>
    %118 = tpu.matmul %117, %114, %cst_50 {dimension_numbers = #tpu.dot_dimension_numbers<[1], [1], [0], [0], [0, 0, 1, 0], [], []>} : vector<32x64xf32>, vector<8x64xf32>, vector<32x8xf32> -> vector<32x8xf32>
    %cst_51 = arith.constant 2.500000e-01 : f32
    %119 = vector.broadcast %cst_51 : f32 to vector<32x8xf32>
    %120 = arith.mulf %118, %119 : vector<32x8xf32>
    %121 = arith.addf %120, %33 : vector<32x8xf32>
    %cst_52 = arith.constant dense<0xFF800000> : vector<32xf32>
    %122 = vector.multi_reduction <maximumf>, %121, %cst_52 [1] : vector<32x8xf32> to vector<32xf32>
    %123 = vector.shape_cast %122 : vector<32xf32> to vector<32x1xf32>
    %124 = vector.broadcast %123 : vector<32x1xf32> to vector<32x8xf32>
    %125 = arith.subf %121, %124 : vector<32x8xf32>
    %126 = math.exp %125 : vector<32x8xf32>
    %cst_53 = arith.constant dense<0.000000e+00> : vector<32xf32>
    %127 = vector.multi_reduction <add>, %126, %cst_53 [1] : vector<32x8xf32> to vector<32xf32>
    %128 = vector.shape_cast %127 : vector<32xf32> to vector<32x1xf32>
    %129 = tpu.reciprocal %128 {approx = true} : vector<32x1xf32> -> vector<32x1xf32>
    %130 = vector.broadcast %129 : vector<32x1xf32> to vector<32x8xf32>
    %131 = arith.mulf %126, %130 : vector<32x8xf32>
    %132 = vector.extract_strided_slice %131 {offsets = [0, 0], sizes = [8, 8], strides = [1, 1]} : vector<32x8xf32> to vector<8x8xf32>
    %133 = vector.extract_strided_slice %115 {offsets = [0, 0], sizes = [8, 16], strides = [1, 1]} : vector<8x64xf32> to vector<8x16xf32>
    %cst_54 = arith.constant dense<0.000000e+00> : vector<8x16xf32>
    %134 = tpu.matmul %132, %133, %cst_54 {dimension_numbers = #tpu.dot_dimension_numbers<[1], [0], [0], [1], [0, 0, 1, 1], [], []>} : vector<8x8xf32>, vector<8x16xf32>, vector<8x16xf32> -> vector<8x16xf32>
    %135 = tpu.transpose %134, [1, 0] : vector<8x16xf32> -> vector<16x8xf32>
    %136 = vector.extract_strided_slice %131 {offsets = [8, 0], sizes = [8, 8], strides = [1, 1]} : vector<32x8xf32> to vector<8x8xf32>
    %137 = vector.extract_strided_slice %115 {offsets = [0, 16], sizes = [8, 16], strides = [1, 1]} : vector<8x64xf32> to vector<8x16xf32>
    %cst_55 = arith.constant dense<0.000000e+00> : vector<8x16xf32>
    %138 = tpu.matmul %136, %137, %cst_55 {dimension_numbers = #tpu.dot_dimension_numbers<[1], [0], [0], [1], [0, 0, 1, 1], [], []>} : vector<8x8xf32>, vector<8x16xf32>, vector<8x16xf32> -> vector<8x16xf32>
    %139 = tpu.transpose %138, [1, 0] : vector<8x16xf32> -> vector<16x8xf32>
    %140 = vector.extract_strided_slice %131 {offsets = [16, 0], sizes = [8, 8], strides = [1, 1]} : vector<32x8xf32> to vector<8x8xf32>
    %141 = vector.extract_strided_slice %115 {offsets = [0, 32], sizes = [8, 16], strides = [1, 1]} : vector<8x64xf32> to vector<8x16xf32>
    %cst_56 = arith.constant dense<0.000000e+00> : vector<8x16xf32>
    %142 = tpu.matmul %140, %141, %cst_56 {dimension_numbers = #tpu.dot_dimension_numbers<[1], [0], [0], [1], [0, 0, 1, 1], [], []>} : vector<8x8xf32>, vector<8x16xf32>, vector<8x16xf32> -> vector<8x16xf32>
    %143 = tpu.transpose %142, [1, 0] : vector<8x16xf32> -> vector<16x8xf32>
    %144 = vector.extract_strided_slice %131 {offsets = [24, 0], sizes = [8, 8], strides = [1, 1]} : vector<32x8xf32> to vector<8x8xf32>
    %145 = vector.extract_strided_slice %115 {offsets = [0, 48], sizes = [8, 16], strides = [1, 1]} : vector<8x64xf32> to vector<8x16xf32>
    %cst_57 = arith.constant dense<0.000000e+00> : vector<8x16xf32>
    %146 = tpu.matmul %144, %145, %cst_57 {dimension_numbers = #tpu.dot_dimension_numbers<[1], [0], [0], [1], [0, 0, 1, 1], [], []>} : vector<8x8xf32>, vector<8x16xf32>, vector<8x16xf32> -> vector<8x16xf32>
    %147 = tpu.transpose %146, [1, 0] : vector<8x16xf32> -> vector<16x8xf32>
    %148 = tpu.concatenate %135, %139, %143, %147 in 0 : vector<16x8xf32>, vector<16x8xf32>, vector<16x8xf32>, vector<16x8xf32> -> vector<64x8xf32>
    %c0_58 = arith.constant 0 : index
    %c0_59 = arith.constant 0 : index
    %149 = vector.load %arg15[%c0_58, %c0_59] : memref<64x8xf32, #tpu.memory_space<vmem>>, vector<64x8xf32>
    tpu.vector_store %arg15[%c0_58, %c0_59], %148 {strides = array<i32>} : memref<64x8xf32, #tpu.memory_space<vmem>>, vector<64x8xf32>,
    %cst_60 = arith.constant 0.000000e+00 : f32
    %150 = vector.broadcast %cst_60 : f32 to vector<8x64xf32>
    %c0_61 = arith.constant 0 : index
    %c0_62 = arith.constant 0 : index
    %151 = tpu.strided_load %arg15[%c0_61, %c0_62] {strides = array<i32: 8, 1>} : memref<64x8xf32, #tpu.memory_space<vmem>>, vector<8x8xf32>
    %152 = arith.truncf %151 : vector<8x8xf32> to vector<8x8xbf16>
    %153 = vector.extract_strided_slice %34 {offsets = [0, 0], sizes = [8, 64], strides = [1, 1]} : vector<64x64xbf16> to vector<8x64xbf16>
    %cst_63 = arith.constant dense<0.000000e+00> : vector<8x64xf32>
    %154 = tpu.matmul %152, %153, %cst_63 {dimension_numbers = #tpu.dot_dimension_numbers<[1], [0], [0], [1], [0, 0, 1, 1], [], []>} : vector<8x8xbf16>, vector<8x64xbf16>, vector<8x64xf32> -> vector<8x64xf32>
    %155 = arith.addf %150, %154 : vector<8x64xf32>
    %c1_64 = arith.constant 1 : index
    %c0_65 = arith.constant 0 : index
    %156 = tpu.strided_load %arg15[%c1_64, %c0_65] {strides = array<i32: 8, 1>} : memref<64x8xf32, #tpu.memory_space<vmem>>, vector<8x8xf32>
    %157 = arith.truncf %156 : vector<8x8xf32> to vector<8x8xbf16>
    %158 = vector.extract_strided_slice %34 {offsets = [8, 0], sizes = [8, 64], strides = [1, 1]} : vector<64x64xbf16> to vector<8x64xbf16>
    %cst_66 = arith.constant dense<0.000000e+00> : vector<8x64xf32>
    %159 = tpu.matmul %157, %158, %cst_66 {dimension_numbers = #tpu.dot_dimension_numbers<[1], [0], [0], [1], [0, 0, 1, 1], [], []>} : vector<8x8xbf16>, vector<8x64xbf16>, vector<8x64xf32> -> vector<8x64xf32>
    %160 = arith.addf %155, %159 : vector<8x64xf32>
    %c2_67 = arith.constant 2 : index
    %c0_68 = arith.constant 0 : index
    %161 = tpu.strided_load %arg15[%c2_67, %c0_68] {strides = array<i32: 8, 1>} : memref<64x8xf32, #tpu.memory_space<vmem>>, vector<8x8xf32>
    %162 = arith.truncf %161 : vector<8x8xf32> to vector<8x8xbf16>
    %163 = vector.extract_strided_slice %34 {offsets = [16, 0], sizes = [8, 64], strides = [1, 1]} : vector<64x64xbf16> to vector<8x64xbf16>
    %cst_69 = arith.constant dense<0.000000e+00> : vector<8x64xf32>
    %164 = tpu.matmul %162, %163, %cst_69 {dimension_numbers = #tpu.dot_dimension_numbers<[1], [0], [0], [1], [0, 0, 1, 1], [], []>} : vector<8x8xbf16>, vector<8x64xbf16>, vector<8x64xf32> -> vector<8x64xf32>
    %165 = arith.addf %160, %164 : vector<8x64xf32>
    %c3_70 = arith.constant 3 : index
    %c0_71 = arith.constant 0 : index
    %166 = tpu.strided_load %arg15[%c3_70, %c0_71] {strides = array<i32: 8, 1>} : memref<64x8xf32, #tpu.memory_space<vmem>>, vector<8x8xf32>
    %167 = arith.truncf %166 : vector<8x8xf32> to vector<8x8xbf16>
    %168 = vector.extract_strided_slice %34 {offsets = [24, 0], sizes = [8, 64], strides = [1, 1]} : vector<64x64xbf16> to vector<8x64xbf16>
    %cst_72 = arith.constant dense<0.000000e+00> : vector<8x64xf32>
    %169 = tpu.matmul %167, %168, %cst_72 {dimension_numbers = #tpu.dot_dimension_numbers<[1], [0], [0], [1], [0, 0, 1, 1], [], []>} : vector<8x8xbf16>, vector<8x64xbf16>, vector<8x64xf32> -> vector<8x64xf32>
    %170 = arith.addf %165, %169 : vector<8x64xf32>
    %c4_73 = arith.constant 4 : index
    %c0_74 = arith.constant 0 : index
    %171 = tpu.strided_load %arg15[%c4_73, %c0_74] {strides = array<i32: 8, 1>} : memref<64x8xf32, #tpu.memory_space<vmem>>, vector<8x8xf32>
    %172 = arith.truncf %171 : vector<8x8xf32> to vector<8x8xbf16>
    %173 = vector.extract_strided_slice %34 {offsets = [32, 0], sizes = [8, 64], strides = [1, 1]} : vector<64x64xbf16> to vector<8x64xbf16>
    %cst_75 = arith.constant dense<0.000000e+00> : vector<8x64xf32>
    %174 = tpu.matmul %172, %173, %cst_75 {dimension_numbers = #tpu.dot_dimension_numbers<[1], [0], [0], [1], [0, 0, 1, 1], [], []>} : vector<8x8xbf16>, vector<8x64xbf16>, vector<8x64xf32> -> vector<8x64xf32>
    %175 = arith.addf %170, %174 : vector<8x64xf32>
    %c5_76 = arith.constant 5 : index
    %c0_77 = arith.constant 0 : index
    %176 = tpu.strided_load %arg15[%c5_76, %c0_77] {strides = array<i32: 8, 1>} : memref<64x8xf32, #tpu.memory_space<vmem>>, vector<8x8xf32>
    %177 = arith.truncf %176 : vector<8x8xf32> to vector<8x8xbf16>
    %178 = vector.extract_strided_slice %34 {offsets = [40, 0], sizes = [8, 64], strides = [1, 1]} : vector<64x64xbf16> to vector<8x64xbf16>
    %cst_78 = arith.constant dense<0.000000e+00> : vector<8x64xf32>
    %179 = tpu.matmul %177, %178, %cst_78 {dimension_numbers = #tpu.dot_dimension_numbers<[1], [0], [0], [1], [0, 0, 1, 1], [], []>} : vector<8x8xbf16>, vector<8x64xbf16>, vector<8x64xf32> -> vector<8x64xf32>
    %180 = arith.addf %175, %179 : vector<8x64xf32>
    %c6_79 = arith.constant 6 : index
    %c0_80 = arith.constant 0 : index
    %181 = tpu.strided_load %arg15[%c6_79, %c0_80] {strides = array<i32: 8, 1>} : memref<64x8xf32, #tpu.memory_space<vmem>>, vector<8x8xf32>
    %182 = arith.truncf %181 : vector<8x8xf32> to vector<8x8xbf16>
    %183 = vector.extract_strided_slice %34 {offsets = [48, 0], sizes = [8, 64], strides = [1, 1]} : vector<64x64xbf16> to vector<8x64xbf16>
    %cst_81 = arith.constant dense<0.000000e+00> : vector<8x64xf32>
    %184 = tpu.matmul %182, %183, %cst_81 {dimension_numbers = #tpu.dot_dimension_numbers<[1], [0], [0], [1], [0, 0, 1, 1], [], []>} : vector<8x8xbf16>, vector<8x64xbf16>, vector<8x64xf32> -> vector<8x64xf32>
    %185 = arith.addf %180, %184 : vector<8x64xf32>
    %c7_82 = arith.constant 7 : index
    %c0_83 = arith.constant 0 : index
    %186 = tpu.strided_load %arg15[%c7_82, %c0_83] {strides = array<i32: 8, 1>} : memref<64x8xf32, #tpu.memory_space<vmem>>, vector<8x8xf32>
    %187 = arith.truncf %186 : vector<8x8xf32> to vector<8x8xbf16>
    %188 = vector.extract_strided_slice %34 {offsets = [56, 0], sizes = [8, 64], strides = [1, 1]} : vector<64x64xbf16> to vector<8x64xbf16>
    %cst_84 = arith.constant dense<0.000000e+00> : vector<8x64xf32>
    %189 = tpu.matmul %187, %188, %cst_84 {dimension_numbers = #tpu.dot_dimension_numbers<[1], [0], [0], [1], [0, 0, 1, 1], [], []>} : vector<8x8xbf16>, vector<8x64xbf16>, vector<8x64xf32> -> vector<8x64xf32>
    %190 = arith.addf %185, %189 : vector<8x64xf32>
    %191 = tpu.concatenate %112, %190 in 0 : vector<8x64xf32>, vector<8x64xf32> -> vector<16x64xf32>
    %192 = arith.addf %0, %191 : vector<16x64xf32>
    %c0_85 = arith.constant 0 : index
    %c0_86 = arith.constant 0 : index
    %193 = vector.load %arg10[%c0_85, %c0_86] : memref<1x64xf32, #tpu.memory_space<vmem>>, vector<1x64xf32>
    %194 = vector.broadcast %193 : vector<1x64xf32> to vector<16x64xf32>
    %195 = arith.addf %192, %194 : vector<16x64xf32>
    %196 = arith.mulf %195, %195 : vector<16x64xf32>
    %cst_87 = arith.constant dense<0.000000e+00> : vector<16xf32>
    %197 = vector.multi_reduction <add>, %196, %cst_87 [1] : vector<16x64xf32> to vector<16xf32>
    %198 = vector.shape_cast %197 : vector<16xf32> to vector<16x1xf32>
    %cst_88 = arith.constant 6.400000e+01 : f32
    %199 = vector.broadcast %cst_88 : f32 to vector<16x1xf32>
    %200 = arith.divf %198, %199 : vector<16x1xf32>
    %cst_89 = arith.constant 1.1920929E-7 : f32
    %201 = vector.broadcast %cst_89 : f32 to vector<16x1xf32>
    %202 = arith.addf %200, %201 : vector<16x1xf32>
    %203 = math.rsqrt %202 : vector<16x1xf32>
    %204 = vector.broadcast %203 : vector<16x1xf32> to vector<16x64xf32>
    %205 = arith.mulf %195, %204 : vector<16x64xf32>
    %c0_90 = arith.constant 0 : index
    %c0_91 = arith.constant 0 : index
    %206 = vector.load %arg11[%c0_90, %c0_91] : memref<1x64xf32, #tpu.memory_space<vmem>>, vector<1x64xf32>
    %207 = vector.broadcast %206 : vector<1x64xf32> to vector<16x64xf32>
    %208 = arith.mulf %205, %207 : vector<16x64xf32>
    %209 = arith.truncf %208 : vector<16x64xf32> to vector<16x64xbf16>
    %c0_92 = arith.constant 0 : index
    %c0_93 = arith.constant 0 : index
    %210 = vector.load %arg12[%c0_92, %c0_93] : memref<64x512xbf16, #tpu.memory_space<vmem>>, vector<64x512xbf16>
    %cst_94 = arith.constant dense<0.000000e+00> : vector<16x512xf32>
    %211 = tpu.matmul %209, %210, %cst_94 {dimension_numbers = #tpu.dot_dimension_numbers<[1], [0], [0], [1], [0, 0, 1, 1], [], []>} : vector<16x64xbf16>, vector<64x512xbf16>, vector<16x512xf32> -> vector<16x512xf32>
    %212 = vector.extract_strided_slice %211 {offsets = [0, 0], sizes = [16, 256], strides = [1, 1]} : vector<16x512xf32> to vector<16x256xf32>
    %213 = vector.extract_strided_slice %211 {offsets = [0, 256], sizes = [16, 256], strides = [1, 1]} : vector<16x512xf32> to vector<16x256xf32>
    %214 = arith.negf %212 : vector<16x256xf32>
    %215 = math.exp %214 : vector<16x256xf32>
    %cst_95 = arith.constant 1.000000e+00 : f32
    %216 = vector.broadcast %cst_95 : f32 to vector<16x256xf32>
    %217 = arith.addf %216, %215 : vector<16x256xf32>
    %218 = arith.divf %216, %217 : vector<16x256xf32>
    %219 = arith.mulf %212, %218 : vector<16x256xf32>
    %220 = arith.mulf %219, %213 : vector<16x256xf32>
    %221 = arith.truncf %220 : vector<16x256xf32> to vector<16x256xbf16>
    %c0_96 = arith.constant 0 : index
    %c0_97 = arith.constant 0 : index
    %222 = vector.load %arg13[%c0_96, %c0_97] : memref<256x64xbf16, #tpu.memory_space<vmem>>, vector<256x64xbf16>
    %cst_98 = arith.constant dense<0.000000e+00> : vector<16x64xf32>
    %223 = tpu.matmul %221, %222, %cst_98 {dimension_numbers = #tpu.dot_dimension_numbers<[1], [0], [0], [1], [0, 0, 1, 1], [], []>} : vector<16x256xbf16>, vector<256x64xbf16>, vector<16x64xf32> -> vector<16x64xf32>
    %224 = arith.addf %195, %223 : vector<16x64xf32>
    %c0_99 = arith.constant 0 : index
    %c0_100 = arith.constant 0 : index
    %225 = vector.load %arg14[%c0_99, %c0_100] : memref<16x64xf32, #tpu.memory_space<vmem>>, vector<16x64xf32>
    tpu.vector_store %arg14[%c0_99, %c0_100], %224 {strides = array<i32>} : memref<16x64xf32, #tpu.memory_space<vmem>>, vector<16x64xf32>,
    return
  }
}

</mosaic_0001>

<llo_original>
// kernel: tpu_custom_call.1
$region0: #{tpu_custom_call.1}
  #allocation0 [shape = 'u32[]', space=smem, size = 0x4, offset = 0x4, fixed_abs, tag = 'smem constant byte address 0x4 - core index']
  #allocation1 [shape = 'u32[144,128]{1,0:T(1,128)}', space=vmem, size = 0x12000, scoped, tag = 'internal scratch']
  #allocation2 [shape = 'f32[64,8]{1,0:T(8,128)}', space=vmem, size = 0x8000, scoped, tag = 'scratch operand']
  %s0 = inlined_call_operand.vmem [shape: f32[16,64], index: 0, kind: input, shape index: {}]
  %s1 = inlined_call_operand.vmem [shape: f32[1,64], index: 1, kind: input, shape index: {}]
  %s2 = inlined_call_operand.vmem [shape: bf16[64,192], index: 2, kind: input, shape index: {}]
  %s3 = inlined_call_operand.vmem [shape: f32[1,192], index: 3, kind: input, shape index: {}]
  %s4 = inlined_call_operand.hbm [shape: f32[16,128], index: 4, kind: input, shape index: {}]
  %s5 = inlined_call_operand.hbm [shape: f32[16,128], index: 5, kind: input, shape index: {}]
  %s6 = inlined_call_operand.hbm [shape: f32[16,128], index: 6, kind: input, shape index: {}]
  %s7 = inlined_call_operand.vmem [shape: f32[32,64], index: 7, kind: input, shape index: {}]
  %s8 = inlined_call_operand.vmem [shape: f32[32,8], index: 8, kind: input, shape index: {}]
  %s9 = inlined_call_operand.hbm [shape: bf16[64,64], index: 9, kind: input, shape index: {}]
  %s10 = inlined_call_operand.vmem [shape: f32[1,64], index: 10, kind: input, shape index: {}]
  %s11 = inlined_call_operand.vmem [shape: f32[1,64], index: 11, kind: input, shape index: {}]
  %s12 = inlined_call_operand.vmem [shape: bf16[64,512], index: 12, kind: input, shape index: {}]
  %s13 = inlined_call_operand.vmem [shape: bf16[256,64], index: 13, kind: input, shape index: {}]
  %s14 = inlined_call_operand.hbm [shape: f32[16,64], index: 14, kind: output, shape index: {}]
  %s15 = sld [smem:[#allocation0]]
  $region82: #{tpu_custom_call.1} parent=0
    _
  %s17 = ssub.s32 1, %s15
  %s18 = scalar_select 0, %s17, %s15
  $region1: #{tpu_custom_call.1} parent=0
    #allocation3 [shape = 'u8[8192]{0}', space=vmem, size = 0x2000, scoped, tag = 'input window, operand 4, single buffered']
    #allocation4 [shape = 's32[1]{0}', space=sflag, size = 0x4, scoped, tag = 'scoped memory for tpu_custom_call.1']
    #allocation5 [shape = 's32[1]{0}', space=sflag, size = 0x4, scoped, tag = 'scoped memory for tpu_custom_call.1']
    #allocation6 [shape = 'u8[8192]{0}', space=vmem, size = 0x2000, scoped, tag = 'input window, operand 5, single buffered']
    #allocation7 [shape = 's32[1]{0}', space=sflag, size = 0x4, scoped, tag = 'scoped memory for tpu_custom_call.1']
    #allocation8 [shape = 'u8[8192]{0}', space=vmem, size = 0x2000, scoped, tag = 'input window, operand 6, single buffered']
    #allocation9 [shape = 'u8[16384]{0}', space=vmem, size = 0x4000, scoped, tag = 'input window, operand 9, single buffered']
    #allocation10 [shape = 's32[1]{0}', space=sflag, size = 0x4, scoped, tag = 'scoped memory for tpu_custom_call.1']
    #allocation11 [shape = 'u8[8192]{0}', space=vmem, size = 0x2000, scoped, tag = 'output window, operand 0, single buffered']
    %19 = vsyncpa [#allocation4], 0
    %20 = vsyncpa [#allocation7], 0
    %21 = vsyncpa [#allocation10], 0
    %22 = vsyncpa [#allocation5], 0
    // Predicated region
    $region2: #{tpu_custom_call.1} parent=1 // pred_check
      _
    $region3: #{tpu_custom_call.1} parent=1 // pred_check_branch
      %24 = sbr.rel (0) target = $region5
    $region4: #{tpu_custom_call.1} parent=1 // pred_region
      _
    $region5: #{tpu_custom_call.1} parent=1 // pred_fallthru
      _
    // Predicated region
    $region6: #{tpu_custom_call.1} parent=1 // pred_check
      _
    $region7: #{tpu_custom_call.1} parent=1 // pred_check_branch
      %26 = sbr.rel (0) target = $region9
    $region8: #{tpu_custom_call.1} parent=1 // pred_region
      _
    $region9: #{tpu_custom_call.1} parent=1 // pred_fallthru
      _
    // Predicated region
    $region10: #{tpu_custom_call.1} parent=1 // pred_check
      _
    $region11: #{tpu_custom_call.1} parent=1 // pred_check_branch
      %28 = sbr.rel (0) target = $region13
    $region12: #{tpu_custom_call.1} parent=1 // pred_region
      _
    $region13: #{tpu_custom_call.1} parent=1 // pred_fallthru
      _
    // Predicated region
    $region14: #{tpu_custom_call.1} parent=1 // pred_check
      _
    $region15: #{tpu_custom_call.1} parent=1 // pred_check_branch
      %30 = sbr.rel (0) target = $region17
    $region16: #{tpu_custom_call.1} parent=1 // pred_region
      _
    $region17: #{tpu_custom_call.1} parent=1 // pred_fallthru
      _
    // Predicated region
    $region18: #{tpu_custom_call.1} parent=1 // pred_check
      _
    $region19: #{tpu_custom_call.1} parent=1 // pred_check_branch
      %32 = sbr.rel (0) target = $region21
    $region20: #{tpu_custom_call.1} parent=1 // pred_region
      %s34 = ssub.s32 256, 256
      %35 = vsyncadd [#allocation4], %s34
      %s36 = sshll.u32 [#allocation3], 4
      %s37 = int_to_ptr.vmem [resolvable:$true] %s36
      %42 = dma.hbm_to_vmem [thread:$0]  %s4, 256, %s37, [#allocation4], 128, 128, 8
    $region21: #{tpu_custom_call.1} parent=1 // pred_fallthru
      _
    // Predicated region
    $region22: #{tpu_custom_call.1} parent=1 // pred_check
      _
    $region23: #{tpu_custom_call.1} parent=1 // pred_check_branch
      %44 = sbr.rel (0) target = $region25
    $region24: #{tpu_custom_call.1} parent=1 // pred_region
      %s46 = ssub.s32 256, 256
      %47 = vsyncadd [#allocation7], %s46
      %s48 = sshll.u32 [#allocation6], 4
      %s49 = int_to_ptr.vmem [resolvable:$true] %s48
      %54 = dma.hbm_to_vmem [thread:$0]  %s5, 256, %s49, [#allocation7], 128, 128, 8
    $region25: #{tpu_custom_call.1} parent=1 // pred_fallthru
      _
    // Predicated region
    $region26: #{tpu_custom_call.1} parent=1 // pred_check
      _
    $region27: #{tpu_custom_call.1} parent=1 // pred_check_branch
      %56 = sbr.rel (0) target = $region29
    $region28: #{tpu_custom_call.1} parent=1 // pred_region
      %s58 = ssub.s32 256, 256
      %59 = vsyncadd [#allocation7], %s58
      %s60 = sshll.u32 [#allocation8], 4
      %s61 = int_to_ptr.vmem [resolvable:$true] %s60
      %66 = dma.hbm_to_vmem [thread:$0]  %s6, 256, %s61, [#allocation7], 128, 128, 8
    $region29: #{tpu_custom_call.1} parent=1 // pred_fallthru
      _
    // Predicated region
    $region30: #{tpu_custom_call.1} parent=1 // pred_check
      _
    $region31: #{tpu_custom_call.1} parent=1 // pred_check_branch
      %68 = sbr.rel (0) target = $region33
    $region32: #{tpu_custom_call.1} parent=1 // pred_region
      _
    $region33: #{tpu_custom_call.1} parent=1 // pred_fallthru
      _
    // Predicated region
    $region34: #{tpu_custom_call.1} parent=1 // pred_check
      _
    $region35: #{tpu_custom_call.1} parent=1 // pred_check_branch
      %70 = sbr.rel (0) target = $region37
    $region36: #{tpu_custom_call.1} parent=1 // pred_region
      _
    $region37: #{tpu_custom_call.1} parent=1 // pred_fallthru
      _
    // Predicated region
    $region38: #{tpu_custom_call.1} parent=1 // pred_check
      _
    $region39: #{tpu_custom_call.1} parent=1 // pred_check_branch
      %72 = sbr.rel (0) target = $region41
    $region40: #{tpu_custom_call.1} parent=1 // pred_region
      %s74 = ssub.s32 512, 512
      %75 = vsyncadd [#allocation10], %s74
      %s76 = sshll.u32 [#allocation9], 4
      %s77 = int_to_ptr.vmem [resolvable:$true] %s76
      %82 = dma.hbm_to_vmem [thread:$0]  %s9, 512, %s77, [#allocation10], 64, 64, 4
    $region41: #{tpu_custom_call.1} parent=1 // pred_fallthru
      _
    // Predicated region
    $region42: #{tpu_custom_call.1} parent=1 // pred_check
      _
    $region43: #{tpu_custom_call.1} parent=1 // pred_check_branch
      %84 = sbr.rel (0) target = $region45
    $region44: #{tpu_custom_call.1} parent=1 // pred_region
      _
    $region45: #{tpu_custom_call.1} parent=1 // pred_fallthru
      _
    // Predicated region
    $region46: #{tpu_custom_call.1} parent=1 // pred_check
      _
    $region47: #{tpu_custom_call.1} parent=1 // pred_check_branch
      %86 = sbr.rel (0) target = $region49
    $region48: #{tpu_custom_call.1} parent=1 // pred_region
      _
    $region49: #{tpu_custom_call.1} parent=1 // pred_fallthru
      _
    // Predicated region
    $region50: #{tpu_custom_call.1} parent=1 // pred_check
      _
    $region51: #{tpu_custom_call.1} parent=1 // pred_check_branch
      %88 = sbr.rel (0) target = $region53
    $region52: #{tpu_custom_call.1} parent=1 // pred_region
      _
    $region53: #{tpu_custom_call.1} parent=1 // pred_fallthru
      _
    // Predicated region
    $region54: #{tpu_custom_call.1} parent=1 // pred_check
      _
    $region55: #{tpu_custom_call.1} parent=1 // pred_check_branch
      %90 = sbr.rel (0) target = $region57
    $region56: #{tpu_custom_call.1} parent=1 // pred_region
      _
    $region57: #{tpu_custom_call.1} parent=1 // pred_fallthru
      _
    // Predicated region
    $region58: #{tpu_custom_call.1} parent=1 // pred_check
      _
    $region59: #{tpu_custom_call.1} parent=1 // pred_check_branch
      %92 = sbr.rel (0) target = $region61
    $region60: #{tpu_custom_call.1} parent=1 // pred_region
      %93 = dma.done [#allocation4], 256
    $region61: #{tpu_custom_call.1} parent=1 // pred_fallthru
      _
    // Predicated region
    $region62: #{tpu_custom_call.1} parent=1 // pred_check
      _
    $region63: #{tpu_custom_call.1} parent=1 // pred_check_branch
      %95 = sbr.rel (0) target = $region65
    $region64: #{tpu_custom_call.1} parent=1 // pred_region
      %96 = dma.done [#allocation7], 256
    $region65: #{tpu_custom_call.1} parent=1 // pred_fallthru
      _
    // Predicated region
    $region66: #{tpu_custom_call.1} parent=1 // pred_check
      _
    $region67: #{tpu_custom_call.1} parent=1 // pred_check_branch
      %98 = sbr.rel (0) target = $region69
    $region68: #{tpu_custom_call.1} parent=1 // pred_region
      %99 = dma.done [#allocation7], 256
    $region69: #{tpu_custom_call.1} parent=1 // pred_fallthru
      _
    // Predicated region
    $region70: #{tpu_custom_call.1} parent=1 // pred_check
      _
    $region71: #{tpu_custom_call.1} parent=1 // pred_check_branch
      %101 = sbr.rel (0) target = $region73
    $region72: #{tpu_custom_call.1} parent=1 // pred_region
      %102 = dma.done [#allocation10], 512
    $region73: #{tpu_custom_call.1} parent=1 // pred_fallthru
      _
    %v104 = vld [vmem:[%s0] sm:$0xff]
    %v105 = vld [vmem:[%s0 + $0x8] sm:$0xff]
    %v106 = vmul.f32 %v104, %v104
    %v107 = vmul.f32 %v105, %v105
    %vm108 = vcmask 523264
    %v109 = vsel %vm108, %v106, 0.0
    %110 = vadd.xlane.f32.xlu0 %v109
    %v111 = vpop.xlane.xlu0 %110
    %v112 = vsel %vm108, %v107, 0.0
    %113 = vadd.xlane.f32.xlu0 %v112
    %v114 = vpop.xlane.xlu0 %113
    %v115 = vrcp.pop 64.0
    %v116 = vmul.f32 %v111, %v115
    %v117 = vmul.f32 %v114, %v115
    %v118 = vadd.f32 %v116, 1.1920929e-07
    %v119 = vadd.f32 %v117, 1.1920929e-07
    %v120 = vrsqrt.pop %v118
    %v121 = vrsqrt.pop %v119
    %v122 = vmul.f32 %v104, %v120
    %v123 = vmul.f32 %v105, %v121
    %v124 = vld [vmem:[%s1] sm:$0x1]
    %v126 = vlaneseq
    %v127 = vshrl.u32 %v126, 7
    %v128 = vsub.s32 0, %v127
    %v129 = vrot.slane %v124, %v128
    %v131 = vmul.f32 %v122, %v129
    %v132 = vmul.f32 %v123, %v129
    %v133 = vpack.c.bf16 %v132, %v131
    %v134 = vld [vmem:[%s2] sm:$0xff]
    %v135 = vld [vmem:[%s2 + $0x8] sm:$0xff]
    %v136 = vld [vmem:[%s2 + $0x10] sm:$0xff]
    %v137 = vld [vmem:[%s2 + $0x18] sm:$0xff]
    %v138 = vld [vmem:[%s2 + $0x20] sm:$0xff]
    %v139 = vld [vmem:[%s2 + $0x28] sm:$0xff]
    %v140 = vld [vmem:[%s2 + $0x30] sm:$0xff]
    %v141 = vld [vmem:[%s2 + $0x38] sm:$0xff]
    %v142 = vld [vmem:[%s3] sm:$0x3]
    %v144 = vlaneseq
    %v145 = vshrl.u32 %v144, 7
    %v146 = vsub.s32 0, %v145
    %v147 = vrot.slane %v142, %v146
    %v148 = vlaneseq
    %v149 = vshrl.u32 %v148, 7
    %v150 = vsub.s32 1, %v149
    %v151 = vrot.slane %v142, %v150
    %v162 = vunpack.c.l.b16 %v134
    %v163 = vunpack.c.h.b16 %v134
    %v164 = vunpack.c.l.b16 %v135
    %v165 = vunpack.c.h.b16 %v135
    %v166 = vunpack.c.l.b16 %v136
    %v167 = vunpack.c.h.b16 %v136
    %v168 = vunpack.c.l.b16 %v137
    %v169 = vunpack.c.h.b16 %v137
    %v170 = vunpack.c.l.b16 %v138
    %v171 = vunpack.c.h.b16 %v138
    %v172 = vunpack.c.l.b16 %v139
    %v173 = vunpack.c.h.b16 %v139
    %v174 = vunpack.c.l.b16 %v140
    %v175 = vunpack.c.h.b16 %v140
    %v176 = vunpack.c.l.b16 %v141
    %v177 = vunpack.c.h.b16 %v141
    %v178 = vpack.c.b16 %v164, %v162
    %v179 = vpack.c.b16 %v165, %v163
    %v180 = vpack.c.b16 %v168, %v166
    %v181 = vpack.c.b16 %v169, %v167
    %v182 = vpack.c.b16 %v172, %v170
    %v183 = vpack.c.b16 %v173, %v171
    %v184 = vpack.c.b16 %v176, %v174
    %v185 = vpack.c.b16 %v177, %v175
    %v195 = vsel %vm108, %v133, 0
    %197 = vmatprep.subr.bf16.mxu0 0
    %198 = vmatpush1.bf16.msra.mxu0 0
    %199 = vmatprep.subr.bf16.mxu0 0
    %200 = vmatpush1.bf16.msra.mxu0 0
    %201 = vmatprep.subr.bf16.mxu0 0
    %202 = vmatpush1.bf16.msra.mxu0 0
    %203 = vmatprep.subr.bf16.mxu0 0
    %204 = vmatpush1.bf16.msra.mxu0 0
    %205 = vmatprep.subr.bf16.mxu0 %v185
    %206 = vmatpush1.bf16.msra.mxu0 %v184
    %207 = vmatprep.subr.bf16.mxu0 %v183
    %208 = vmatpush1.bf16.msra.mxu0 %v182
    %209 = vmatprep.subr.bf16.mxu0 %v181
    %210 = vmatpush1.bf16.msra.mxu0 %v180
    %211 = vmatprep.subr.bf16.mxu0 %v179
    %212 = vmatpush1.bf16.msra.mxu0 %v178
    %213 = vmatprep.subr.bf16.mxu0 0
    %214 = vmatpush2.bf16.msra.mxu0 0
    %215 = vmatprep.subr.bf16.mxu0 0
    %216 = vmatpush2.bf16.msra.mxu0 0
    %217 = vmatprep.subr.bf16.mxu0 0
    %218 = vmatpush2.bf16.msra.mxu0 0
    %219 = vmatprep.subr.bf16.mxu0 0
    %220 = vmatpush2.bf16.msra.mxu0 0
    %221 = vmatprep.subr.bf16.mxu0 0
    %222 = vmatpush2.bf16.msra.mxu0 0
    %223 = vmatprep.subr.bf16.mxu0 0
    %224 = vmatpush2.bf16.msra.mxu0 0
    %225 = vmatprep.subr.bf16.mxu0 0
    %226 = vmatpush2.bf16.msra.mxu0 0
    %227 = vmatprep.subr.bf16.mxu0 0
    %228 = vmatpush2.bf16.msra.mxu0 0
    %229 = vmatprep.mubr.bf16.mxu0 0
    %230 = vmatmul.mubr.bf16.gmra.mxu0 %v195
    %v231 = vpop.f32.mrf.mxu0
    %v232 = vadd.f32 %v147, %v231
    %v233 = vpop.f32.mrf.mxu0
    %v234 = vadd.f32 %v151, %v233
    %v235 = vpop.f32.mrf.mxu0
    %v236 = vadd.f32 %v147, %v235
    %v237 = vpop.f32.mrf.mxu0
    %v238 = vadd.f32 %v151, %v237
    %239 = vdwg.mxu0
    %v240 = vld [vmem:[#allocation3] sm:$0xff]
    %v241 = vld [vmem:[#allocation3 + $0x8] sm:$0xff]
    %v242 = vmul.f32 %v232, %v240
    %v243 = vmul.f32 %v236, %v241
    %244 = vrot.lane.b32.xlu0 %v232, 127
    %v245 = vpop.permute.xlu0 %244
    %246 = vrot.lane.b32.xlu0 %v236, 127
    %v247 = vpop.permute.xlu0 %246
    %v248 = vld [vmem:[#allocation6] sm:$0xff]
    %v249 = vld [vmem:[#allocation6 + $0x8] sm:$0xff]
    %v250 = vmul.f32 %v245, %v248
    %v251 = vmul.f32 %v247, %v249
    %v252 = vadd.f32 %v242, %v250
    %v253 = vadd.f32 %v243, %v251
    %254 = vrot.lane.b32.xlu0 %v232, 1
    %v255 = vpop.permute.xlu0 %254
    %256 = vrot.lane.b32.xlu0 %v236, 1
    %v257 = vpop.permute.xlu0 %256
    %v258 = vld [vmem:[#allocation8] sm:$0xff]
    %v259 = vld [vmem:[#allocation8 + $0x8] sm:$0xff]
    %v260 = vmul.f32 %v255, %v258
    %v261 = vmul.f32 %v257, %v259
    %v262 = vadd.f32 %v252, %v260
    %v263 = vadd.f32 %v253, %v261
    %v264 = vld [vmem:[%s7] sm:$0xff]
    %v265 = vld [vmem:[%s7 + $0x8] sm:$0xff]
    %v266 = vld [vmem:[%s7 + $0x10] sm:$0xff]
    %v267 = vld [vmem:[%s7 + $0x18] sm:$0xff]
    %v268 = vld [vmem:[%s8] sm:$0xff]
    %v269 = vld [vmem:[%s8 + $0x8] sm:$0xff]
    %v270 = vld [vmem:[%s8 + $0x10] sm:$0xff]
    %v271 = vld [vmem:[%s8 + $0x18] sm:$0xff]
    %v272 = vld [vmem:[#allocation9] sm:$0xf]
    %v273 = vld [vmem:[#allocation9 + $0x4] sm:$0xf]
    %v274 = vld [vmem:[#allocation9 + $0x8] sm:$0xf]
    %v275 = vld [vmem:[#allocation9 + $0xc] sm:$0xf]
    %v276 = vld [vmem:[#allocation9 + $0x10] sm:$0xf]
    %v277 = vld [vmem:[#allocation9 + $0x14] sm:$0xf]
    %v278 = vld [vmem:[#allocation9 + $0x18] sm:$0xf]
    %v279 = vld [vmem:[#allocation9 + $0x1c] sm:$0xf]
    %v280 = vmul.f32 %v262, %v264
    %v281 = vmul.f32 %v262, %v265
    %v282 = vmul.f32 %v262, %v266
    %v283 = vmul.f32 %v262, %v267
    %285 = vrot.lane.b32.xlu0 %v262, 64
    %v286 = vpop.permute.xlu0 %285
    %v288 = vsel %vm108, %v280, 0
    %v291 = vsel %vm108, %v281, 0
    %v294 = vsel %vm108, %v282, 0
    %v297 = vsel %vm108, %v283, 0
    %v299 = vsel %vm108, %v286, 0
    %301 = vmatprep.subr.mxu0 0.0
    %302 = vmatpush1.xpose.msra.mxu0 0.0
    %303 = vmatprep.subr.mxu0 0.0
    %304 = vmatpush1.xpose.msra.mxu0 0.0
    %305 = vmatprep.subr.mxu0 0.0
    %306 = vmatpush1.xpose.msra.mxu0 0.0
    %307 = vmatprep.subr.mxu0 0.0
    %308 = vmatpush1.xpose.msra.mxu0 0.0
    %309 = vmatprep.subr.mxu0 0.0
    %310 = vmatpush1.xpose.msra.mxu0 0.0
    %311 = vmatprep.subr.mxu0 0.0
    %312 = vmatpush1.xpose.msra.mxu0 0.0
    %313 = vmatprep.subr.mxu0 0.0
    %314 = vmatpush1.xpose.msra.mxu0 0.0
    %315 = vmatprep.subr.mxu0 0.0
    %316 = vmatpush1.xpose.msra.mxu0 0.0
    %317 = vmatprep.subr.mxu0 0.0
    %318 = vmatpush1.xpose.msra.mxu0 0.0
    %319 = vmatprep.subr.mxu0 0.0
    %320 = vmatpush1.xpose.msra.mxu0 0.0
    %321 = vmatprep.subr.mxu0 0.0
    %322 = vmatpush1.xpose.msra.mxu0 0.0
    %323 = vmatprep.subr.mxu0 0.0
    %324 = vmatpush1.xpose.msra.mxu0 0.0
    %325 = vmatprep.subr.mxu0 0.0
    %326 = vmatpush1.xpose.msra.mxu0 0.0
    %327 = vmatprep.subr.mxu0 0.0
    %328 = vmatpush1.xpose.msra.mxu0 0.0
    %329 = vmatprep.subr.mxu0 0.0
    %330 = vmatpush1.xpose.msra.mxu0 0.0
    %331 = vmatprep.subr.mxu0 0.0
    %332 = vmatpush1.xpose.msra.mxu0 %v299
    %333 = vmatprep.subr.mxu0 0.0
    %334 = vmatpush2.xpose.msra.mxu0 0.0
    %335 = vmatprep.subr.mxu0 0.0
    %336 = vmatpush2.xpose.msra.mxu0 0.0
    %337 = vmatprep.subr.mxu0 0.0
    %338 = vmatpush2.xpose.msra.mxu0 0.0
    %339 = vmatprep.subr.mxu0 0.0
    %340 = vmatpush2.xpose.msra.mxu0 0.0
    %341 = vmatprep.subr.mxu0 0.0
    %342 = vmatpush2.xpose.msra.mxu0 0.0
    %343 = vmatprep.subr.mxu0 0.0
    %344 = vmatpush2.xpose.msra.mxu0 0.0
    %345 = vmatprep.subr.mxu0 0.0
    %346 = vmatpush2.xpose.msra.mxu0 0.0
    %347 = vmatprep.subr.mxu0 0.0
    %348 = vmatpush2.xpose.msra.mxu0 0.0
    %349 = vmatprep.subr.mxu0 0.0
    %350 = vmatpush2.xpose.msra.mxu0 0.0
    %351 = vmatprep.subr.mxu0 0.0
    %352 = vmatpush2.xpose.msra.mxu0 0.0
    %353 = vmatprep.subr.mxu0 0.0
    %354 = vmatpush2.xpose.msra.mxu0 0.0
    %355 = vmatprep.subr.mxu0 0.0
    %356 = vmatpush2.xpose.msra.mxu0 0.0
    %357 = vmatprep.subr.mxu0 0.0
    %358 = vmatpush2.xpose.msra.mxu0 0.0
    %359 = vmatprep.subr.mxu0 0.0
    %360 = vmatpush2.xpose.msra.mxu0 0.0
    %361 = vmatprep.subr.mxu0 0.0
    %362 = vmatpush2.xpose.msra.mxu0 0.0
    %363 = vmatprep.subr.mxu0 0.0
    %364 = vmatpush2.xpose.msra.mxu0 0.0
    %365 = vmatprep.mubr.f32.mxu0 0.0
    %366 = vmatmul.mubr.f32.gmra.mxu0 %v288
    %v367 = vpop.f32.mrf.mxu0
    %v368 = vadd.f32 0.0, %v367
    %v369 = vpop.f32.mrf.mxu0
    %370 = vmatprep.mubr.f32.mxu0 0.0
    %371 = vmatmul.mubr.f32.gmra.mxu0 %v291
    %v372 = vpop.f32.mrf.mxu0
    %v373 = vadd.f32 0.0, %v372
    %v374 = vpop.f32.mrf.mxu0
    %375 = vmatprep.mubr.f32.mxu0 0.0
    %376 = vmatmul.mubr.f32.gmra.mxu0 %v294
    %v377 = vpop.f32.mrf.mxu0
    %v378 = vadd.f32 0.0, %v377
    %v379 = vpop.f32.mrf.mxu0
    %380 = vmatprep.mubr.f32.mxu0 0.0
    %381 = vmatmul.mubr.f32.gmra.mxu0 %v297
    %v382 = vpop.f32.mrf.mxu0
    %v383 = vadd.f32 0.0, %v382
    %v384 = vpop.f32.mrf.mxu0
    %385 = vdwg.mxu0
    %v386 = vmul.f32 %v368, 0.25
    %v387 = vmul.f32 %v373, 0.25
    %v388 = vmul.f32 %v378, 0.25
    %v389 = vmul.f32 %v383, 0.25
    %v390 = vadd.f32 %v386, %v268
    %v391 = vadd.f32 %v387, %v269
    %v392 = vadd.f32 %v388, %v270
    %v393 = vadd.f32 %v389, %v271
    %vm394 = vcmask 64512
    %v395 = vsel %vm394, %v390, -inf
    %396 = vmax.xlane.f32.xlu0 %v395
    %v397 = vpop.xlane.xlu0 %396
    %v398 = vsel %vm394, %v391, -inf
    %399 = vmax.xlane.f32.xlu0 %v398
    %v400 = vpop.xlane.xlu0 %399
    %v401 = vsel %vm394, %v392, -inf
    %402 = vmax.xlane.f32.xlu0 %v401
    %v403 = vpop.xlane.xlu0 %402
    %v404 = vsel %vm394, %v393, -inf
    %405 = vmax.xlane.f32.xlu0 %v404
    %v406 = vpop.xlane.xlu0 %405
    %v407 = vsub.f32 %v390, %v397
    %v408 = vsub.f32 %v391, %v400
    %v409 = vsub.f32 %v392, %v403
    %v410 = vsub.f32 %v393, %v406
    %v411 = vmul.f32 %v407, 1.442695
    %v412 = vpow.pop %v411
    %v413 = vmul.f32 %v408, 1.442695
    %v414 = vpow.pop %v413
    %v415 = vmul.f32 %v409, 1.442695
    %v416 = vpow.pop %v415
    %v417 = vmul.f32 %v410, 1.442695
    %v418 = vpow.pop %v417
    %v419 = vsel %vm394, %v412, 0.0
    %420 = vadd.xlane.f32.xlu0 %v419
    %v421 = vpop.xlane.xlu0 %420
    %v422 = vsel %vm394, %v414, 0.0
    %423 = vadd.xlane.f32.xlu0 %v422
    %v424 = vpop.xlane.xlu0 %423
    %v425 = vsel %vm394, %v416, 0.0
    %426 = vadd.xlane.f32.xlu0 %v425
    %v427 = vpop.xlane.xlu0 %426
    %v428 = vsel %vm394, %v418, 0.0
    %429 = vadd.xlane.f32.xlu0 %v428
    %v430 = vpop.xlane.xlu0 %429
    %v431 = vrcp.pop %v421
    %v432 = vrcp.pop %v424
    %v433 = vrcp.pop %v427
    %v434 = vrcp.pop %v430
    %v435 = vmul.f32 %v412, %v431
    %v436 = vmul.f32 %v414, %v432
    %v437 = vmul.f32 %v416, %v433
    %v438 = vmul.f32 %v418, %v434
    %v440 = vsel %vm394, %v435, 0
    %442 = vmatprep.subr.mxu0 0.0
    %443 = vmatpush1.msra.mxu0 0.0
    %444 = vmatprep.subr.mxu0 0.0
    %445 = vmatpush1.msra.mxu0 0.0
    %446 = vmatprep.subr.mxu0 0.0
    %447 = vmatpush1.msra.mxu0 0.0
    %448 = vmatprep.subr.mxu0 0.0
    %449 = vmatpush1.msra.mxu0 0.0
    %450 = vmatprep.subr.mxu0 0.0
    %451 = vmatpush1.msra.mxu0 0.0
    %452 = vmatprep.subr.mxu0 0.0
    %453 = vmatpush1.msra.mxu0 0.0
    %454 = vmatprep.subr.mxu0 0.0
    %455 = vmatpush1.msra.mxu0 0.0
    %456 = vmatprep.subr.mxu0 0.0
    %457 = vmatpush1.msra.mxu0 0.0
    %458 = vmatprep.subr.mxu0 0.0
    %459 = vmatpush1.msra.mxu0 0.0
    %460 = vmatprep.subr.mxu0 0.0
    %461 = vmatpush1.msra.mxu0 0.0
    %462 = vmatprep.subr.mxu0 0.0
    %463 = vmatpush1.msra.mxu0 0.0
    %464 = vmatprep.subr.mxu0 0.0
    %465 = vmatpush1.msra.mxu0 0.0
    %466 = vmatprep.subr.mxu0 0.0
    %467 = vmatpush1.msra.mxu0 0.0
    %468 = vmatprep.subr.mxu0 0.0
    %469 = vmatpush1.msra.mxu0 0.0
    %470 = vmatprep.subr.mxu0 0.0
    %471 = vmatpush1.msra.mxu0 0.0
    %472 = vmatprep.subr.mxu0 0.0
    %473 = vmatpush1.msra.mxu0 %v234
    %474 = vmatprep.subr.mxu0 0.0
    %475 = vmatpush2.msra.mxu0 0.0
    %476 = vmatprep.subr.mxu0 0.0
    %477 = vmatpush2.msra.mxu0 0.0
    %478 = vmatprep.subr.mxu0 0.0
    %479 = vmatpush2.msra.mxu0 0.0
    %480 = vmatprep.subr.mxu0 0.0
    %481 = vmatpush2.msra.mxu0 0.0
    %482 = vmatprep.subr.mxu0 0.0
    %483 = vmatpush2.msra.mxu0 0.0
    %484 = vmatprep.subr.mxu0 0.0
    %485 = vmatpush2.msra.mxu0 0.0
    %486 = vmatprep.subr.mxu0 0.0
    %487 = vmatpush2.msra.mxu0 0.0
    %488 = vmatprep.subr.mxu0 0.0
    %489 = vmatpush2.msra.mxu0 0.0
    %490 = vmatprep.subr.mxu0 0.0
    %491 = vmatpush2.msra.mxu0 0.0
    %492 = vmatprep.subr.mxu0 0.0
    %493 = vmatpush2.msra.mxu0 0.0
    %494 = vmatprep.subr.mxu0 0.0
    %495 = vmatpush2.msra.mxu0 0.0
    %496 = vmatprep.subr.mxu0 0.0
    %497 = vmatpush2.msra.mxu0 0.0
    %498 = vmatprep.subr.mxu0 0.0
    %499 = vmatpush2.msra.mxu0 0.0
    %500 = vmatprep.subr.mxu0 0.0
    %501 = vmatpush2.msra.mxu0 0.0
    %502 = vmatprep.subr.mxu0 0.0
    %503 = vmatpush2.msra.mxu0 0.0
    %504 = vmatprep.subr.mxu0 0.0
    %505 = vmatpush2.msra.mxu0 0.0
    %506 = vmatprep.mubr.f32.mxu0 0.0
    %507 = vmatmul.mubr.f32.gmra.mxu0 %v440
    %v508 = vpop.f32.mrf.mxu0
    %v509 = vadd.f32 0.0, %v508
    %v510 = vpop.f32.mrf.mxu0
    %511 = vdwg.mxu0
    %512 = vxpose.xlu0.b32.start [1/16] %v509, 128
    %513 = vxpose.xlu0.b32.cont [2/16] 0.0, 128
    %514 = vxpose.xlu0.b32.cont [3/16] 0.0, 128
    %515 = vxpose.xlu0.b32.cont [4/16] 0.0, 128
    %516 = vxpose.xlu0.b32.cont [5/16] 0.0, 128
    %517 = vxpose.xlu0.b32.cont [6/16] 0.0, 128
    %518 = vxpose.xlu0.b32.cont [7/16] 0.0, 128
    %519 = vxpose.xlu0.b32.cont [8/16] 0.0, 128
    %520 = vxpose.xlu0.b32.cont [9/16] 0.0, 128
    %521 = vxpose.xlu0.b32.cont [10/16] 0.0, 128
    %522 = vxpose.xlu0.b32.cont [11/16] 0.0, 128
    %523 = vxpose.xlu0.b32.cont [12/16] 0.0, 128
    %524 = vxpose.xlu0.b32.cont [13/16] 0.0, 128
    %525 = vxpose.xlu0.b32.cont [14/16] 0.0, 128
    %526 = vxpose.xlu0.b32.cont [15/16] 0.0, 128
    %527 = vxpose.xlu0.b32.end [16/16] 0.0, 128
    %v528 = vpop.trf.xlu0
    %v529 = vpop.trf.xlu0
    %v530 = vpop.trf.xlu0
    %v531 = vpop.trf.xlu0
    %v532 = vpop.trf.xlu0
    %v533 = vpop.trf.xlu0
    %v534 = vpop.trf.xlu0
    %v535 = vpop.trf.xlu0
    %v536 = vpop.trf.xlu0
    %v537 = vpop.trf.xlu0
    %v538 = vpop.trf.xlu0
    %v539 = vpop.trf.xlu0
    %v540 = vpop.trf.xlu0
    %v541 = vpop.trf.xlu0
    %v542 = vpop.trf.xlu0
    %v543 = vpop.trf.xlu0
    %545 = vrot.lane.b32.xlu0 %v234, 112
    %v546 = vpop.permute.xlu0 %545
    %v549 = vsel %vm394, %v436, 0
    %551 = vmatprep.subr.mxu0 0.0
    %552 = vmatpush1.msra.mxu0 0.0
    %553 = vmatprep.subr.mxu0 0.0
    %554 = vmatpush1.msra.mxu0 0.0
    %555 = vmatprep.subr.mxu0 0.0
    %556 = vmatpush1.msra.mxu0 0.0
    %557 = vmatprep.subr.mxu0 0.0
    %558 = vmatpush1.msra.mxu0 0.0
    %559 = vmatprep.subr.mxu0 0.0
    %560 = vmatpush1.msra.mxu0 0.0
    %561 = vmatprep.subr.mxu0 0.0
    %562 = vmatpush1.msra.mxu0 0.0
    %563 = vmatprep.subr.mxu0 0.0
    %564 = vmatpush1.msra.mxu0 0.0
    %565 = vmatprep.subr.mxu0 0.0
    %566 = vmatpush1.msra.mxu0 0.0
    %567 = vmatprep.subr.mxu0 0.0
    %568 = vmatpush1.msra.mxu0 0.0
    %569 = vmatprep.subr.mxu0 0.0
    %570 = vmatpush1.msra.mxu0 0.0
    %571 = vmatprep.subr.mxu0 0.0
    %572 = vmatpush1.msra.mxu0 0.0
    %573 = vmatprep.subr.mxu0 0.0
    %574 = vmatpush1.msra.mxu0 0.0
    %575 = vmatprep.subr.mxu0 0.0
    %576 = vmatpush1.msra.mxu0 0.0
    %577 = vmatprep.subr.mxu0 0.0
    %578 = vmatpush1.msra.mxu0 0.0
    %579 = vmatprep.subr.mxu0 0.0
    %580 = vmatpush1.msra.mxu0 0.0
    %581 = vmatprep.subr.mxu0 0.0
    %582 = vmatpush1.msra.mxu0 %v546
    %583 = vmatprep.subr.mxu0 0.0
    %584 = vmatpush2.msra.mxu0 0.0
    %585 = vmatprep.subr.mxu0 0.0
    %586 = vmatpush2.msra.mxu0 0.0
    %587 = vmatprep.subr.mxu0 0.0
    %588 = vmatpush2.msra.mxu0 0.0
    %589 = vmatprep.subr.mxu0 0.0
    %590 = vmatpush2.msra.mxu0 0.0
    %591 = vmatprep.subr.mxu0 0.0
    %592 = vmatpush2.msra.mxu0 0.0
    %593 = vmatprep.subr.mxu0 0.0
    %594 = vmatpush2.msra.mxu0 0.0
    %595 = vmatprep.subr.mxu0 0.0
    %596 = vmatpush2.msra.mxu0 0.0
    %597 = vmatprep.subr.mxu0 0.0
    %598 = vmatpush2.msra.mxu0 0.0
    %599 = vmatprep.subr.mxu0 0.0
    %600 = vmatpush2.msra.mxu0 0.0
    %601 = vmatprep.subr.mxu0 0.0
    %602 = vmatpush2.msra.mxu0 0.0
    %603 = vmatprep.subr.mxu0 0.0
    %604 = vmatpush2.msra.mxu0 0.0
    %605 = vmatprep.subr.mxu0 0.0
    %606 = vmatpush2.msra.mxu0 0.0
    %607 = vmatprep.subr.mxu0 0.0
    %608 = vmatpush2.msra.mxu0 0.0
    %609 = vmatprep.subr.mxu0 0.0
    %610 = vmatpush2.msra.mxu0 0.0
    %611 = vmatprep.subr.mxu0 0.0
    %612 = vmatpush2.msra.mxu0 0.0
    %613 = vmatprep.subr.mxu0 0.0
    %614 = vmatpush2.msra.mxu0 0.0
    %615 = vmatprep.mubr.f32.mxu0 0.0
    %616 = vmatmul.mubr.f32.gmra.mxu0 %v549
    %v617 = vpop.f32.mrf.mxu0
    %v618 = vadd.f32 0.0, %v617
    %v619 = vpop.f32.mrf.mxu0
    %620 = vdwg.mxu0
    %621 = vxpose.xlu0.b32.start [1/16] %v618, 128
    %622 = vxpose.xlu0.b32.cont [2/16] 0.0, 128
    %623 = vxpose.xlu0.b32.cont [3/16] 0.0, 128
    %624 = vxpose.xlu0.b32.cont [4/16] 0.0, 128
    %625 = vxpose.xlu0.b32.cont [5/16] 0.0, 128
    %626 = vxpose.xlu0.b32.cont [6/16] 0.0, 128
    %627 = vxpose.xlu0.b32.cont [7/16] 0.0, 128
    %628 = vxpose.xlu0.b32.cont [8/16] 0.0, 128
    %629 = vxpose.xlu0.b32.cont [9/16] 0.0, 128
    %630 = vxpose.xlu0.b32.cont [10/16] 0.0, 128
    %631 = vxpose.xlu0.b32.cont [11/16] 0.0, 128
    %632 = vxpose.xlu0.b32.cont [12/16] 0.0, 128
    %633 = vxpose.xlu0.b32.cont [13/16] 0.0, 128
    %634 = vxpose.xlu0.b32.cont [14/16] 0.0, 128
    %635 = vxpose.xlu0.b32.cont [15/16] 0.0, 128
    %636 = vxpose.xlu0.b32.end [16/16] 0.0, 128
    %v637 = vpop.trf.xlu0
    %v638 = vpop.trf.xlu0
    %v639 = vpop.trf.xlu0
    %v640 = vpop.trf.xlu0
    %v641 = vpop.trf.xlu0
    %v642 = vpop.trf.xlu0
    %v643 = vpop.trf.xlu0
    %v644 = vpop.trf.xlu0
    %v645 = vpop.trf.xlu0
    %v646 = vpop.trf.xlu0
    %v647 = vpop.trf.xlu0
    %v648 = vpop.trf.xlu0
    %v649 = vpop.trf.xlu0
    %v650 = vpop.trf.xlu0
    %v651 = vpop.trf.xlu0
    %v652 = vpop.trf.xlu0
    %653 = vrot.lane.b32.xlu0 %v234, 96
    %v654 = vpop.permute.xlu0 %653
    %v657 = vsel %vm394, %v437, 0
    %659 = vmatprep.subr.mxu0 0.0
    %660 = vmatpush1.msra.mxu0 0.0
    %661 = vmatprep.subr.mxu0 0.0
    %662 = vmatpush1.msra.mxu0 0.0
    %663 = vmatprep.subr.mxu0 0.0
    %664 = vmatpush1.msra.mxu0 0.0
    %665 = vmatprep.subr.mxu0 0.0
    %666 = vmatpush1.msra.mxu0 0.0
    %667 = vmatprep.subr.mxu0 0.0
    %668 = vmatpush1.msra.mxu0 0.0
    %669 = vmatprep.subr.mxu0 0.0
    %670 = vmatpush1.msra.mxu0 0.0
    %671 = vmatprep.subr.mxu0 0.0
    %672 = vmatpush1.msra.mxu0 0.0
    %673 = vmatprep.subr.mxu0 0.0
    %674 = vmatpush1.msra.mxu0 0.0
    %675 = vmatprep.subr.mxu0 0.0
    %676 = vmatpush1.msra.mxu0 0.0
    %677 = vmatprep.subr.mxu0 0.0
    %678 = vmatpush1.msra.mxu0 0.0
    %679 = vmatprep.subr.mxu0 0.0
    %680 = vmatpush1.msra.mxu0 0.0
    %681 = vmatprep.subr.mxu0 0.0
    %682 = vmatpush1.msra.mxu0 0.0
    %683 = vmatprep.subr.mxu0 0.0
    %684 = vmatpush1.msra.mxu0 0.0
    %685 = vmatprep.subr.mxu0 0.0
    %686 = vmatpush1.msra.mxu0 0.0
    %687 = vmatprep.subr.mxu0 0.0
    %688 = vmatpush1.msra.mxu0 0.0
    %689 = vmatprep.subr.mxu0 0.0
    %690 = vmatpush1.msra.mxu0 %v654
    %691 = vmatprep.subr.mxu0 0.0
    %692 = vmatpush2.msra.mxu0 0.0
    %693 = vmatprep.subr.mxu0 0.0
    %694 = vmatpush2.msra.mxu0 0.0
    %695 = vmatprep.subr.mxu0 0.0
    %696 = vmatpush2.msra.mxu0 0.0
    %697 = vmatprep.subr.mxu0 0.0
    %698 = vmatpush2.msra.mxu0 0.0
    %699 = vmatprep.subr.mxu0 0.0
    %700 = vmatpush2.msra.mxu0 0.0
    %701 = vmatprep.subr.mxu0 0.0
    %702 = vmatpush2.msra.mxu0 0.0
    %703 = vmatprep.subr.mxu0 0.0
    %704 = vmatpush2.msra.mxu0 0.0
    %705 = vmatprep.subr.mxu0 0.0
    %706 = vmatpush2.msra.mxu0 0.0
    %707 = vmatprep.subr.mxu0 0.0
    %708 = vmatpush2.msra.mxu0 0.0
    %709 = vmatprep.subr.mxu0 0.0
    %710 = vmatpush2.msra.mxu0 0.0
    %711 = vmatprep.subr.mxu0 0.0
    %712 = vmatpush2.msra.mxu0 0.0
    %713 = vmatprep.subr.mxu0 0.0
    %714 = vmatpush2.msra.mxu0 0.0
    %715 = vmatprep.subr.mxu0 0.0
    %716 = vmatpush2.msra.mxu0 0.0
    %717 = vmatprep.subr.mxu0 0.0
    %718 = vmatpush2.msra.mxu0 0.0
    %719 = vmatprep.subr.mxu0 0.0
    %720 = vmatpush2.msra.mxu0 0.0
    %721 = vmatprep.subr.mxu0 0.0
    %722 = vmatpush2.msra.mxu0 0.0
    %723 = vmatprep.mubr.f32.mxu0 0.0
    %724 = vmatmul.mubr.f32.gmra.mxu0 %v657
    %v725 = vpop.f32.mrf.mxu0
    %v726 = vadd.f32 0.0, %v725
    %v727 = vpop.f32.mrf.mxu0
    %728 = vdwg.mxu0
    %729 = vxpose.xlu0.b32.start [1/16] %v726, 128
    %730 = vxpose.xlu0.b32.cont [2/16] 0.0, 128
    %731 = vxpose.xlu0.b32.cont [3/16] 0.0, 128
    %732 = vxpose.xlu0.b32.cont [4/16] 0.0, 128
    %733 = vxpose.xlu0.b32.cont [5/16] 0.0, 128
    %734 = vxpose.xlu0.b32.cont [6/16] 0.0, 128
    %735 = vxpose.xlu0.b32.cont [7/16] 0.0, 128
    %736 = vxpose.xlu0.b32.cont [8/16] 0.0, 128
    %737 = vxpose.xlu0.b32.cont [9/16] 0.0, 128
    %738 = vxpose.xlu0.b32.cont [10/16] 0.0, 128
    %739 = vxpose.xlu0.b32.cont [11/16] 0.0, 128
    %740 = vxpose.xlu0.b32.cont [12/16] 0.0, 128
    %741 = vxpose.xlu0.b32.cont [13/16] 0.0, 128
    %742 = vxpose.xlu0.b32.cont [14/16] 0.0, 128
    %743 = vxpose.xlu0.b32.cont [15/16] 0.0, 128
    %744 = vxpose.xlu0.b32.end [16/16] 0.0, 128
    %v745 = vpop.trf.xlu0
    %v746 = vpop.trf.xlu0
    %v747 = vpop.trf.xlu0
    %v748 = vpop.trf.xlu0
    %v749 = vpop.trf.xlu0
    %v750 = vpop.trf.xlu0
    %v751 = vpop.trf.xlu0
    %v752 = vpop.trf.xlu0
    %v753 = vpop.trf.xlu0
    %v754 = vpop.trf.xlu0
    %v755 = vpop.trf.xlu0
    %v756 = vpop.trf.xlu0
    %v757 = vpop.trf.xlu0
    %v758 = vpop.trf.xlu0
    %v759 = vpop.trf.xlu0
    %v760 = vpop.trf.xlu0
    %761 = vrot.lane.b32.xlu0 %v234, 80
    %v762 = vpop.permute.xlu0 %761
    %v765 = vsel %vm394, %v438, 0
    %767 = vmatprep.subr.mxu0 0.0
    %768 = vmatpush1.msra.mxu0 0.0
    %769 = vmatprep.subr.mxu0 0.0
    %770 = vmatpush1.msra.mxu0 0.0
    %771 = vmatprep.subr.mxu0 0.0
    %772 = vmatpush1.msra.mxu0 0.0
    %773 = vmatprep.subr.mxu0 0.0
    %774 = vmatpush1.msra.mxu0 0.0
    %775 = vmatprep.subr.mxu0 0.0
    %776 = vmatpush1.msra.mxu0 0.0
    %777 = vmatprep.subr.mxu0 0.0
    %778 = vmatpush1.msra.mxu0 0.0
    %779 = vmatprep.subr.mxu0 0.0
    %780 = vmatpush1.msra.mxu0 0.0
    %781 = vmatprep.subr.mxu0 0.0
    %782 = vmatpush1.msra.mxu0 0.0
    %783 = vmatprep.subr.mxu0 0.0
    %784 = vmatpush1.msra.mxu0 0.0
    %785 = vmatprep.subr.mxu0 0.0
    %786 = vmatpush1.msra.mxu0 0.0
    %787 = vmatprep.subr.mxu0 0.0
    %788 = vmatpush1.msra.mxu0 0.0
    %789 = vmatprep.subr.mxu0 0.0
    %790 = vmatpush1.msra.mxu0 0.0
    %791 = vmatprep.subr.mxu0 0.0
    %792 = vmatpush1.msra.mxu0 0.0
    %793 = vmatprep.subr.mxu0 0.0
    %794 = vmatpush1.msra.mxu0 0.0
    %795 = vmatprep.subr.mxu0 0.0
    %796 = vmatpush1.msra.mxu0 0.0
    %797 = vmatprep.subr.mxu0 0.0
    %798 = vmatpush1.msra.mxu0 %v762
    %799 = vmatprep.subr.mxu0 0.0
    %800 = vmatpush2.msra.mxu0 0.0
    %801 = vmatprep.subr.mxu0 0.0
    %802 = vmatpush2.msra.mxu0 0.0
    %803 = vmatprep.subr.mxu0 0.0
    %804 = vmatpush2.msra.mxu0 0.0
    %805 = vmatprep.subr.mxu0 0.0
    %806 = vmatpush2.msra.mxu0 0.0
    %807 = vmatprep.subr.mxu0 0.0
    %808 = vmatpush2.msra.mxu0 0.0
    %809 = vmatprep.subr.mxu0 0.0
    %810 = vmatpush2.msra.mxu0 0.0
    %811 = vmatprep.subr.mxu0 0.0
    %812 = vmatpush2.msra.mxu0 0.0
    %813 = vmatprep.subr.mxu0 0.0
    %814 = vmatpush2.msra.mxu0 0.0
    %815 = vmatprep.subr.mxu0 0.0
    %816 = vmatpush2.msra.mxu0 0.0
    %817 = vmatprep.subr.mxu0 0.0
    %818 = vmatpush2.msra.mxu0 0.0
    %819 = vmatprep.subr.mxu0 0.0
    %820 = vmatpush2.msra.mxu0 0.0
    %821 = vmatprep.subr.mxu0 0.0
    %822 = vmatpush2.msra.mxu0 0.0
    %823 = vmatprep.subr.mxu0 0.0
    %824 = vmatpush2.msra.mxu0 0.0
    %825 = vmatprep.subr.mxu0 0.0
    %826 = vmatpush2.msra.mxu0 0.0
    %827 = vmatprep.subr.mxu0 0.0
    %828 = vmatpush2.msra.mxu0 0.0
    %829 = vmatprep.subr.mxu0 0.0
    %830 = vmatpush2.msra.mxu0 0.0
    %831 = vmatprep.mubr.f32.mxu0 0.0
    %832 = vmatmul.mubr.f32.gmra.mxu0 %v765
    %v833 = vpop.f32.mrf.mxu0
    %v834 = vadd.f32 0.0, %v833
    %v835 = vpop.f32.mrf.mxu0
    %836 = vdwg.mxu0
    %837 = vxpose.xlu0.b32.start [1/16] %v834, 128
    %838 = vxpose.xlu0.b32.cont [2/16] 0.0, 128
    %839 = vxpose.xlu0.b32.cont [3/16] 0.0, 128
    %840 = vxpose.xlu0.b32.cont [4/16] 0.0, 128
    %841 = vxpose.xlu0.b32.cont [5/16] 0.0, 128
    %842 = vxpose.xlu0.b32.cont [6/16] 0.0, 128
    %843 = vxpose.xlu0.b32.cont [7/16] 0.0, 128
    %844 = vxpose.xlu0.b32.cont [8/16] 0.0, 128
    %845 = vxpose.xlu0.b32.cont [9/16] 0.0, 128
    %846 = vxpose.xlu0.b32.cont [10/16] 0.0, 128
    %847 = vxpose.xlu0.b32.cont [11/16] 0.0, 128
    %848 = vxpose.xlu0.b32.cont [12/16] 0.0, 128
    %849 = vxpose.xlu0.b32.cont [13/16] 0.0, 128
    %850 = vxpose.xlu0.b32.cont [14/16] 0.0, 128
    %851 = vxpose.xlu0.b32.cont [15/16] 0.0, 128
    %852 = vxpose.xlu0.b32.end [16/16] 0.0, 128
    %v853 = vpop.trf.xlu0
    %v854 = vpop.trf.xlu0
    %v855 = vpop.trf.xlu0
    %v856 = vpop.trf.xlu0
    %v857 = vpop.trf.xlu0
    %v858 = vpop.trf.xlu0
    %v859 = vpop.trf.xlu0
    %v860 = vpop.trf.xlu0
    %v861 = vpop.trf.xlu0
    %v862 = vpop.trf.xlu0
    %v863 = vpop.trf.xlu0
    %v864 = vpop.trf.xlu0
    %v865 = vpop.trf.xlu0
    %v866 = vpop.trf.xlu0
    %v867 = vpop.trf.xlu0
    %v868 = vpop.trf.xlu0
    %869 = vst.msk [vmem:[#allocation2] sm:$0xff] %vm394, %v528
    %870 = vst.msk [vmem:[#allocation2 + $0x8] sm:$0xff] %vm394, %v529
    %871 = vst.msk [vmem:[#allocation2 + $0x10] sm:$0xff] %vm394, %v637
    %872 = vst.msk [vmem:[#allocation2 + $0x18] sm:$0xff] %vm394, %v638
    %873 = vst.msk [vmem:[#allocation2 + $0x20] sm:$0xff] %vm394, %v745
    %874 = vst.msk [vmem:[#allocation2 + $0x28] sm:$0xff] %vm394, %v746
    %875 = vst.msk [vmem:[#allocation2 + $0x30] sm:$0xff] %vm394, %v853
    %876 = vst.msk [vmem:[#allocation2 + $0x38] sm:$0xff] %vm394, %v854
    %v877 = vld [vmem:[#allocation2] ss:$8 sm:$0xf]
    %v878 = vld [vmem:[#allocation2] ss:$8 sm:$0xf0]
    %v879 = vor.u32 %v877, %v878
    %v880 = vpack.c.bf16 %v879, %v879
    %s881 = scalar_lea.vmem [#allocation2], 1
    %v882 = vld [vmem:[%s881] ss:$8 sm:$0xf]
    %v883 = vld [vmem:[%s881] ss:$8 sm:$0xf0]
    %v884 = vor.u32 %v882, %v883
    %v885 = vpack.c.bf16 %v884, %v884
    %v887 = vsel %vm394, %v885, 0
    %vm889 = vcmask 1043456
    %v891 = vsel %vm889, %v273, 0
    %893 = vmatprep.subr.bf16.mxu0 0
    %894 = vmatpush1.bf16.msra.mxu0 0
    %895 = vmatprep.subr.bf16.mxu0 0
    %896 = vmatpush1.bf16.msra.mxu0 0
    %897 = vmatprep.subr.bf16.mxu0 0
    %898 = vmatpush1.bf16.msra.mxu0 0
    %899 = vmatprep.subr.bf16.mxu0 0
    %900 = vmatpush1.bf16.msra.mxu0 0
    %901 = vmatprep.subr.bf16.mxu0 0
    %902 = vmatpush1.bf16.msra.mxu0 0
    %903 = vmatprep.subr.bf16.mxu0 0
    %904 = vmatpush1.bf16.msra.mxu0 0
    %905 = vmatprep.subr.bf16.mxu0 0
    %906 = vmatpush1.bf16.msra.mxu0 0
    %907 = vmatprep.subr.bf16.mxu0 0
    %908 = vmatpush1.bf16.msra.mxu0 %v891
    %909 = vmatprep.subr.bf16.mxu0 0
    %910 = vmatpush2.bf16.msra.mxu0 0
    %911 = vmatprep.subr.bf16.mxu0 0
    %912 = vmatpush2.bf16.msra.mxu0 0
    %913 = vmatprep.subr.bf16.mxu0 0
    %914 = vmatpush2.bf16.msra.mxu0 0
    %915 = vmatprep.subr.bf16.mxu0 0
    %916 = vmatpush2.bf16.msra.mxu0 0
    %917 = vmatprep.subr.bf16.mxu0 0
    %918 = vmatpush2.bf16.msra.mxu0 0
    %919 = vmatprep.subr.bf16.mxu0 0
    %920 = vmatpush2.bf16.msra.mxu0 0
    %921 = vmatprep.subr.bf16.mxu0 0
    %922 = vmatpush2.bf16.msra.mxu0 0
    %923 = vmatprep.subr.bf16.mxu0 0
    %924 = vmatpush2.bf16.msra.mxu0 0
    %925 = vmatprep.mubr.bf16.mxu0 0
    %926 = vmatmul.mubr.bf16.gmra.mxu0 %v887
    %v927 = vpop.f32.mrf.mxu0
    %v928 = vadd.f32 0.0, %v927
    %v929 = vpop.f32.mrf.mxu0
    %v930 = vpop.f32.mrf.mxu0
    %v931 = vpop.f32.mrf.mxu0
    %932 = vdwg.mxu0
    %v934 = vsel %vm394, %v880, 0
    %v937 = vsel %vm889, %v272, 0
    %939 = vmatprep.subr.bf16.mxu0 0
    %940 = vmatpush1.bf16.msra.mxu0 0
    %941 = vmatprep.subr.bf16.mxu0 0
    %942 = vmatpush1.bf16.msra.mxu0 0
    %943 = vmatprep.subr.bf16.mxu0 0
    %944 = vmatpush1.bf16.msra.mxu0 0
    %945 = vmatprep.subr.bf16.mxu0 0
    %946 = vmatpush1.bf16.msra.mxu0 0
    %947 = vmatprep.subr.bf16.mxu0 0
    %948 = vmatpush1.bf16.msra.mxu0 0
    %949 = vmatprep.subr.bf16.mxu0 0
    %950 = vmatpush1.bf16.msra.mxu0 0
    %951 = vmatprep.subr.bf16.mxu0 0
    %952 = vmatpush1.bf16.msra.mxu0 0
    %953 = vmatprep.subr.bf16.mxu0 0
    %954 = vmatpush1.bf16.msra.mxu0 %v937
    %955 = vmatprep.subr.bf16.mxu0 0
    %956 = vmatpush2.bf16.msra.mxu0 0
    %957 = vmatprep.subr.bf16.mxu0 0
    %958 = vmatpush2.bf16.msra.mxu0 0
    %959 = vmatprep.subr.bf16.mxu0 0
    %960 = vmatpush2.bf16.msra.mxu0 0
    %961 = vmatprep.subr.bf16.mxu0 0
    %962 = vmatpush2.bf16.msra.mxu0 0
    %963 = vmatprep.subr.bf16.mxu0 0
    %964 = vmatpush2.bf16.msra.mxu0 0
    %965 = vmatprep.subr.bf16.mxu0 0
    %966 = vmatpush2.bf16.msra.mxu0 0
    %967 = vmatprep.subr.bf16.mxu0 0
    %968 = vmatpush2.bf16.msra.mxu0 0
    %969 = vmatprep.subr.bf16.mxu0 0
    %970 = vmatpush2.bf16.msra.mxu0 0
    %971 = vmatprep.mubr.bf16.mxu0 0
    %972 = vmatmul.mubr.bf16.gmra.mxu0 %v934
    %v973 = vpop.f32.mrf.mxu0
    %v974 = vadd.f32 %v928, %v973
    %v975 = vpop.f32.mrf.mxu0
    %v976 = vpop.f32.mrf.mxu0
    %v977 = vpop.f32.mrf.mxu0
    %978 = vdwg.mxu0
    %s979 = scalar_lea.vmem [#allocation2], 2
    %v980 = vld [vmem:[%s979] ss:$8 sm:$0xf]
    %v981 = vld [vmem:[%s979] ss:$8 sm:$0xf0]
    %v982 = vor.u32 %v980, %v981
    %v983 = vpack.c.bf16 %v982, %v982
    %v985 = vsel %vm394, %v983, 0
    %v988 = vsel %vm889, %v274, 0
    %990 = vmatprep.subr.bf16.mxu0 0
    %991 = vmatpush1.bf16.msra.mxu0 0
    %992 = vmatprep.subr.bf16.mxu0 0
    %993 = vmatpush1.bf16.msra.mxu0 0
    %994 = vmatprep.subr.bf16.mxu0 0
    %995 = vmatpush1.bf16.msra.mxu0 0
    %996 = vmatprep.subr.bf16.mxu0 0
    %997 = vmatpush1.bf16.msra.mxu0 0
    %998 = vmatprep.subr.bf16.mxu0 0
    %999 = vmatpush1.bf16.msra.mxu0 0
    %1000 = vmatprep.subr.bf16.mxu0 0
    %1001 = vmatpush1.bf16.msra.mxu0 0
    %1002 = vmatprep.subr.bf16.mxu0 0
    %1003 = vmatpush1.bf16.msra.mxu0 0
    %1004 = vmatprep.subr.bf16.mxu0 0
    %1005 = vmatpush1.bf16.msra.mxu0 %v988
    %1006 = vmatprep.subr.bf16.mxu0 0
    %1007 = vmatpush2.bf16.msra.mxu0 0
    %1008 = vmatprep.subr.bf16.mxu0 0
    %1009 = vmatpush2.bf16.msra.mxu0 0
    %1010 = vmatprep.subr.bf16.mxu0 0
    %1011 = vmatpush2.bf16.msra.mxu0 0
    %1012 = vmatprep.subr.bf16.mxu0 0
    %1013 = vmatpush2.bf16.msra.mxu0 0
    %1014 = vmatprep.subr.bf16.mxu0 0
    %1015 = vmatpush2.bf16.msra.mxu0 0
    %1016 = vmatprep.subr.bf16.mxu0 0
    %1017 = vmatpush2.bf16.msra.mxu0 0
    %1018 = vmatprep.subr.bf16.mxu0 0
    %1019 = vmatpush2.bf16.msra.mxu0 0
    %1020 = vmatprep.subr.bf16.mxu0 0
    %1021 = vmatpush2.bf16.msra.mxu0 0
    %1022 = vmatprep.mubr.bf16.mxu0 0
    %1023 = vmatmul.mubr.bf16.gmra.mxu0 %v985
    %v1024 = vpop.f32.mrf.mxu0
    %v1025 = vadd.f32 0.0, %v1024
    %v1026 = vpop.f32.mrf.mxu0
    %v1027 = vpop.f32.mrf.mxu0
    %v1028 = vpop.f32.mrf.mxu0
    %1029 = vdwg.mxu0
    %v1030 = vadd.f32 %v974, %v1025
    %s1031 = scalar_lea.vmem [#allocation2], 3
    %v1032 = vld [vmem:[%s1031] ss:$8 sm:$0xf]
    %v1033 = vld [vmem:[%s1031] ss:$8 sm:$0xf0]
    %v1034 = vor.u32 %v1032, %v1033
    %v1035 = vpack.c.bf16 %v1034, %v1034
    %v1037 = vsel %vm394, %v1035, 0
    %v1040 = vsel %vm889, %v275, 0
    %1042 = vmatprep.subr.bf16.mxu0 0
    %1043 = vmatpush1.bf16.msra.mxu0 0
    %1044 = vmatprep.subr.bf16.mxu0 0
    %1045 = vmatpush1.bf16.msra.mxu0 0
    %1046 = vmatprep.subr.bf16.mxu0 0
    %1047 = vmatpush1.bf16.msra.mxu0 0
    %1048 = vmatprep.subr.bf16.mxu0 0
    %1049 = vmatpush1.bf16.msra.mxu0 0
    %1050 = vmatprep.subr.bf16.mxu0 0
    %1051 = vmatpush1.bf16.msra.mxu0 0
    %1052 = vmatprep.subr.bf16.mxu0 0
    %1053 = vmatpush1.bf16.msra.mxu0 0
    %1054 = vmatprep.subr.bf16.mxu0 0
    %1055 = vmatpush1.bf16.msra.mxu0 0
    %1056 = vmatprep.subr.bf16.mxu0 0
    %1057 = vmatpush1.bf16.msra.mxu0 %v1040
    %1058 = vmatprep.subr.bf16.mxu0 0
    %1059 = vmatpush2.bf16.msra.mxu0 0
    %1060 = vmatprep.subr.bf16.mxu0 0
    %1061 = vmatpush2.bf16.msra.mxu0 0
    %1062 = vmatprep.subr.bf16.mxu0 0
    %1063 = vmatpush2.bf16.msra.mxu0 0
    %1064 = vmatprep.subr.bf16.mxu0 0
    %1065 = vmatpush2.bf16.msra.mxu0 0
    %1066 = vmatprep.subr.bf16.mxu0 0
    %1067 = vmatpush2.bf16.msra.mxu0 0
    %1068 = vmatprep.subr.bf16.mxu0 0
    %1069 = vmatpush2.bf16.msra.mxu0 0
    %1070 = vmatprep.subr.bf16.mxu0 0
    %1071 = vmatpush2.bf16.msra.mxu0 0
    %1072 = vmatprep.subr.bf16.mxu0 0
    %1073 = vmatpush2.bf16.msra.mxu0 0
    %1074 = vmatprep.mubr.bf16.mxu0 0
    %1075 = vmatmul.mubr.bf16.gmra.mxu0 %v1037
    %v1076 = vpop.f32.mrf.mxu0
    %v1077 = vadd.f32 0.0, %v1076
    %v1078 = vpop.f32.mrf.mxu0
    %v1079 = vpop.f32.mrf.mxu0
    %v1080 = vpop.f32.mrf.mxu0
    %1081 = vdwg.mxu0
    %v1082 = vadd.f32 %v1030, %v1077
    %s1083 = scalar_lea.vmem [#allocation2], 4
    %v1084 = vld [vmem:[%s1083] ss:$8 sm:$0xf]
    %v1085 = vld [vmem:[%s1083] ss:$8 sm:$0xf0]
    %v1086 = vor.u32 %v1084, %v1085
    %v1087 = vpack.c.bf16 %v1086, %v1086
    %v1089 = vsel %vm394, %v1087, 0
    %v1092 = vsel %vm889, %v276, 0
    %1094 = vmatprep.subr.bf16.mxu0 0
    %1095 = vmatpush1.bf16.msra.mxu0 0
    %1096 = vmatprep.subr.bf16.mxu0 0
    %1097 = vmatpush1.bf16.msra.mxu0 0
    %1098 = vmatprep.subr.bf16.mxu0 0
    %1099 = vmatpush1.bf16.msra.mxu0 0
    %1100 = vmatprep.subr.bf16.mxu0 0
    %1101 = vmatpush1.bf16.msra.mxu0 0
    %1102 = vmatprep.subr.bf16.mxu0 0
    %1103 = vmatpush1.bf16.msra.mxu0 0
    %1104 = vmatprep.subr.bf16.mxu0 0
    %1105 = vmatpush1.bf16.msra.mxu0 0
    %1106 = vmatprep.subr.bf16.mxu0 0
    %1107 = vmatpush1.bf16.msra.mxu0 0
    %1108 = vmatprep.subr.bf16.mxu0 0
    %1109 = vmatpush1.bf16.msra.mxu0 %v1092
    %1110 = vmatprep.subr.bf16.mxu0 0
    %1111 = vmatpush2.bf16.msra.mxu0 0
    %1112 = vmatprep.subr.bf16.mxu0 0
    %1113 = vmatpush2.bf16.msra.mxu0 0
    %1114 = vmatprep.subr.bf16.mxu0 0
    %1115 = vmatpush2.bf16.msra.mxu0 0
    %1116 = vmatprep.subr.bf16.mxu0 0
    %1117 = vmatpush2.bf16.msra.mxu0 0
    %1118 = vmatprep.subr.bf16.mxu0 0
    %1119 = vmatpush2.bf16.msra.mxu0 0
    %1120 = vmatprep.subr.bf16.mxu0 0
    %1121 = vmatpush2.bf16.msra.mxu0 0
    %1122 = vmatprep.subr.bf16.mxu0 0
    %1123 = vmatpush2.bf16.msra.mxu0 0
    %1124 = vmatprep.subr.bf16.mxu0 0
    %1125 = vmatpush2.bf16.msra.mxu0 0
    %1126 = vmatprep.mubr.bf16.mxu0 0
    %1127 = vmatmul.mubr.bf16.gmra.mxu0 %v1089
    %v1128 = vpop.f32.mrf.mxu0
    %v1129 = vadd.f32 0.0, %v1128
    %v1130 = vpop.f32.mrf.mxu0
    %v1131 = vpop.f32.mrf.mxu0
    %v1132 = vpop.f32.mrf.mxu0
    %1133 = vdwg.mxu0
    %v1134 = vadd.f32 %v1082, %v1129
    %s1135 = scalar_lea.vmem [#allocation2], 5
    %v1136 = vld [vmem:[%s1135] ss:$8 sm:$0xf]
    %v1137 = vld [vmem:[%s1135] ss:$8 sm:$0xf0]
    %v1138 = vor.u32 %v1136, %v1137
    %v1139 = vpack.c.bf16 %v1138, %v1138
    %v1141 = vsel %vm394, %v1139, 0
    %v1144 = vsel %vm889, %v277, 0
    %1146 = vmatprep.subr.bf16.mxu0 0
    %1147 = vmatpush1.bf16.msra.mxu0 0
    %1148 = vmatprep.subr.bf16.mxu0 0
    %1149 = vmatpush1.bf16.msra.mxu0 0
    %1150 = vmatprep.subr.bf16.mxu0 0
    %1151 = vmatpush1.bf16.msra.mxu0 0
    %1152 = vmatprep.subr.bf16.mxu0 0
    %1153 = vmatpush1.bf16.msra.mxu0 0
    %1154 = vmatprep.subr.bf16.mxu0 0
    %1155 = vmatpush1.bf16.msra.mxu0 0
    %1156 = vmatprep.subr.bf16.mxu0 0
    %1157 = vmatpush1.bf16.msra.mxu0 0
    %1158 = vmatprep.subr.bf16.mxu0 0
    %1159 = vmatpush1.bf16.msra.mxu0 0
    %1160 = vmatprep.subr.bf16.mxu0 0
    %1161 = vmatpush1.bf16.msra.mxu0 %v1144
    %1162 = vmatprep.subr.bf16.mxu0 0
    %1163 = vmatpush2.bf16.msra.mxu0 0
    %1164 = vmatprep.subr.bf16.mxu0 0
    %1165 = vmatpush2.bf16.msra.mxu0 0
    %1166 = vmatprep.subr.bf16.mxu0 0
    %1167 = vmatpush2.bf16.msra.mxu0 0
    %1168 = vmatprep.subr.bf16.mxu0 0
    %1169 = vmatpush2.bf16.msra.mxu0 0
    %1170 = vmatprep.subr.bf16.mxu0 0
    %1171 = vmatpush2.bf16.msra.mxu0 0
    %1172 = vmatprep.subr.bf16.mxu0 0
    %1173 = vmatpush2.bf16.msra.mxu0 0
    %1174 = vmatprep.subr.bf16.mxu0 0
    %1175 = vmatpush2.bf16.msra.mxu0 0
    %1176 = vmatprep.subr.bf16.mxu0 0
    %1177 = vmatpush2.bf16.msra.mxu0 0
    %1178 = vmatprep.mubr.bf16.mxu0 0
    %1179 = vmatmul.mubr.bf16.gmra.mxu0 %v1141
    %v1180 = vpop.f32.mrf.mxu0
    %v1181 = vadd.f32 0.0, %v1180
    %v1182 = vpop.f32.mrf.mxu0
    %v1183 = vpop.f32.mrf.mxu0
    %v1184 = vpop.f32.mrf.mxu0
    %1185 = vdwg.mxu0
    %v1186 = vadd.f32 %v1134, %v1181
    %s1187 = scalar_lea.vmem [#allocation2], 6
    %v1188 = vld [vmem:[%s1187] ss:$8 sm:$0xf]
    %v1189 = vld [vmem:[%s1187] ss:$8 sm:$0xf0]
    %v1190 = vor.u32 %v1188, %v1189
    %v1191 = vpack.c.bf16 %v1190, %v1190
    %v1193 = vsel %vm394, %v1191, 0
    %v1196 = vsel %vm889, %v278, 0
    %1198 = vmatprep.subr.bf16.mxu0 0
    %1199 = vmatpush1.bf16.msra.mxu0 0
    %1200 = vmatprep.subr.bf16.mxu0 0
    %1201 = vmatpush1.bf16.msra.mxu0 0
    %1202 = vmatprep.subr.bf16.mxu0 0
    %1203 = vmatpush1.bf16.msra.mxu0 0
    %1204 = vmatprep.subr.bf16.mxu0 0
    %1205 = vmatpush1.bf16.msra.mxu0 0
    %1206 = vmatprep.subr.bf16.mxu0 0
    %1207 = vmatpush1.bf16.msra.mxu0 0
    %1208 = vmatprep.subr.bf16.mxu0 0
    %1209 = vmatpush1.bf16.msra.mxu0 0
    %1210 = vmatprep.subr.bf16.mxu0 0
    %1211 = vmatpush1.bf16.msra.mxu0 0
    %1212 = vmatprep.subr.bf16.mxu0 0
    %1213 = vmatpush1.bf16.msra.mxu0 %v1196
    %1214 = vmatprep.subr.bf16.mxu0 0
    %1215 = vmatpush2.bf16.msra.mxu0 0
    %1216 = vmatprep.subr.bf16.mxu0 0
    %1217 = vmatpush2.bf16.msra.mxu0 0
    %1218 = vmatprep.subr.bf16.mxu0 0
    %1219 = vmatpush2.bf16.msra.mxu0 0
    %1220 = vmatprep.subr.bf16.mxu0 0
    %1221 = vmatpush2.bf16.msra.mxu0 0
    %1222 = vmatprep.subr.bf16.mxu0 0
    %1223 = vmatpush2.bf16.msra.mxu0 0
    %1224 = vmatprep.subr.bf16.mxu0 0
    %1225 = vmatpush2.bf16.msra.mxu0 0
    %1226 = vmatprep.subr.bf16.mxu0 0
    %1227 = vmatpush2.bf16.msra.mxu0 0
    %1228 = vmatprep.subr.bf16.mxu0 0
    %1229 = vmatpush2.bf16.msra.mxu0 0
    %1230 = vmatprep.mubr.bf16.mxu0 0
    %1231 = vmatmul.mubr.bf16.gmra.mxu0 %v1193
    %v1232 = vpop.f32.mrf.mxu0
    %v1233 = vadd.f32 0.0, %v1232
    %v1234 = vpop.f32.mrf.mxu0
    %v1235 = vpop.f32.mrf.mxu0
    %v1236 = vpop.f32.mrf.mxu0
    %1237 = vdwg.mxu0
    %v1238 = vadd.f32 %v1186, %v1233
    %s1239 = scalar_lea.vmem [#allocation2], 7
    %v1240 = vld [vmem:[%s1239] ss:$8 sm:$0xf]
    %v1241 = vld [vmem:[%s1239] ss:$8 sm:$0xf0]
    %v1242 = vor.u32 %v1240, %v1241
    %v1243 = vpack.c.bf16 %v1242, %v1242
    %v1245 = vsel %vm394, %v1243, 0
    %v1248 = vsel %vm889, %v279, 0
    %1250 = vmatprep.subr.bf16.mxu0 0
    %1251 = vmatpush1.bf16.msra.mxu0 0
    %1252 = vmatprep.subr.bf16.mxu0 0
    %1253 = vmatpush1.bf16.msra.mxu0 0
    %1254 = vmatprep.subr.bf16.mxu0 0
    %1255 = vmatpush1.bf16.msra.mxu0 0
    %1256 = vmatprep.subr.bf16.mxu0 0
    %1257 = vmatpush1.bf16.msra.mxu0 0
    %1258 = vmatprep.subr.bf16.mxu0 0
    %1259 = vmatpush1.bf16.msra.mxu0 0
    %1260 = vmatprep.subr.bf16.mxu0 0
    %1261 = vmatpush1.bf16.msra.mxu0 0
    %1262 = vmatprep.subr.bf16.mxu0 0
    %1263 = vmatpush1.bf16.msra.mxu0 0
    %1264 = vmatprep.subr.bf16.mxu0 0
    %1265 = vmatpush1.bf16.msra.mxu0 %v1248
    %1266 = vmatprep.subr.bf16.mxu0 0
    %1267 = vmatpush2.bf16.msra.mxu0 0
    %1268 = vmatprep.subr.bf16.mxu0 0
    %1269 = vmatpush2.bf16.msra.mxu0 0
    %1270 = vmatprep.subr.bf16.mxu0 0
    %1271 = vmatpush2.bf16.msra.mxu0 0
    %1272 = vmatprep.subr.bf16.mxu0 0
    %1273 = vmatpush2.bf16.msra.mxu0 0
    %1274 = vmatprep.subr.bf16.mxu0 0
    %1275 = vmatpush2.bf16.msra.mxu0 0
    %1276 = vmatprep.subr.bf16.mxu0 0
    %1277 = vmatpush2.bf16.msra.mxu0 0
    %1278 = vmatprep.subr.bf16.mxu0 0
    %1279 = vmatpush2.bf16.msra.mxu0 0
    %1280 = vmatprep.subr.bf16.mxu0 0
    %1281 = vmatpush2.bf16.msra.mxu0 0
    %1282 = vmatprep.mubr.bf16.mxu0 0
    %1283 = vmatmul.mubr.bf16.gmra.mxu0 %v1245
    %v1284 = vpop.f32.mrf.mxu0
    %v1285 = vadd.f32 0.0, %v1284
    %v1286 = vpop.f32.mrf.mxu0
    %v1287 = vpop.f32.mrf.mxu0
    %v1288 = vpop.f32.mrf.mxu0
    %1289 = vdwg.mxu0
    %v1290 = vadd.f32 %v1238, %v1285
    %v1291 = vmul.f32 %v263, %v264
    %v1292 = vmul.f32 %v263, %v265
    %v1293 = vmul.f32 %v263, %v266
    %v1294 = vmul.f32 %v263, %v267
    %1296 = vrot.lane.b32.xlu0 %v263, 64
    %v1297 = vpop.permute.xlu0 %1296
    %v1299 = vsel %vm108, %v1291, 0
    %v1302 = vsel %vm108, %v1292, 0
    %v1305 = vsel %vm108, %v1293, 0
    %v1308 = vsel %vm108, %v1294, 0
    %v1310 = vsel %vm108, %v1297, 0
    %1312 = vmatprep.subr.mxu0 0.0
    %1313 = vmatpush1.xpose.msra.mxu0 0.0
    %1314 = vmatprep.subr.mxu0 0.0
    %1315 = vmatpush1.xpose.msra.mxu0 0.0
    %1316 = vmatprep.subr.mxu0 0.0
    %1317 = vmatpush1.xpose.msra.mxu0 0.0
    %1318 = vmatprep.subr.mxu0 0.0
    %1319 = vmatpush1.xpose.msra.mxu0 0.0
    %1320 = vmatprep.subr.mxu0 0.0
    %1321 = vmatpush1.xpose.msra.mxu0 0.0
    %1322 = vmatprep.subr.mxu0 0.0
    %1323 = vmatpush1.xpose.msra.mxu0 0.0
    %1324 = vmatprep.subr.mxu0 0.0
    %1325 = vmatpush1.xpose.msra.mxu0 0.0
    %1326 = vmatprep.subr.mxu0 0.0
    %1327 = vmatpush1.xpose.msra.mxu0 0.0
    %1328 = vmatprep.subr.mxu0 0.0
    %1329 = vmatpush1.xpose.msra.mxu0 0.0
    %1330 = vmatprep.subr.mxu0 0.0
    %1331 = vmatpush1.xpose.msra.mxu0 0.0
    %1332 = vmatprep.subr.mxu0 0.0
    %1333 = vmatpush1.xpose.msra.mxu0 0.0
    %1334 = vmatprep.subr.mxu0 0.0
    %1335 = vmatpush1.xpose.msra.mxu0 0.0
    %1336 = vmatprep.subr.mxu0 0.0
    %1337 = vmatpush1.xpose.msra.mxu0 0.0
    %1338 = vmatprep.subr.mxu0 0.0
    %1339 = vmatpush1.xpose.msra.mxu0 0.0
    %1340 = vmatprep.subr.mxu0 0.0
    %1341 = vmatpush1.xpose.msra.mxu0 0.0
    %1342 = vmatprep.subr.mxu0 0.0
    %1343 = vmatpush1.xpose.msra.mxu0 %v1310
    %1344 = vmatprep.subr.mxu0 0.0
    %1345 = vmatpush2.xpose.msra.mxu0 0.0
    %1346 = vmatprep.subr.mxu0 0.0
    %1347 = vmatpush2.xpose.msra.mxu0 0.0
    %1348 = vmatprep.subr.mxu0 0.0
    %1349 = vmatpush2.xpose.msra.mxu0 0.0
    %1350 = vmatprep.subr.mxu0 0.0
    %1351 = vmatpush2.xpose.msra.mxu0 0.0
    %1352 = vmatprep.subr.mxu0 0.0
    %1353 = vmatpush2.xpose.msra.mxu0 0.0
    %1354 = vmatprep.subr.mxu0 0.0
    %1355 = vmatpush2.xpose.msra.mxu0 0.0
    %1356 = vmatprep.subr.mxu0 0.0
    %1357 = vmatpush2.xpose.msra.mxu0 0.0
    %1358 = vmatprep.subr.mxu0 0.0
    %1359 = vmatpush2.xpose.msra.mxu0 0.0
    %1360 = vmatprep.subr.mxu0 0.0
    %1361 = vmatpush2.xpose.msra.mxu0 0.0
    %1362 = vmatprep.subr.mxu0 0.0
    %1363 = vmatpush2.xpose.msra.mxu0 0.0
    %1364 = vmatprep.subr.mxu0 0.0
    %1365 = vmatpush2.xpose.msra.mxu0 0.0
    %1366 = vmatprep.subr.mxu0 0.0
    %1367 = vmatpush2.xpose.msra.mxu0 0.0
    %1368 = vmatprep.subr.mxu0 0.0
    %1369 = vmatpush2.xpose.msra.mxu0 0.0
    %1370 = vmatprep.subr.mxu0 0.0
    %1371 = vmatpush2.xpose.msra.mxu0 0.0
    %1372 = vmatprep.subr.mxu0 0.0
    %1373 = vmatpush2.xpose.msra.mxu0 0.0
    %1374 = vmatprep.subr.mxu0 0.0
    %1375 = vmatpush2.xpose.msra.mxu0 0.0
    %1376 = vmatprep.mubr.f32.mxu0 0.0
    %1377 = vmatmul.mubr.f32.gmra.mxu0 %v1299
    %v1378 = vpop.f32.mrf.mxu0
    %v1379 = vadd.f32 0.0, %v1378
    %v1380 = vpop.f32.mrf.mxu0
    %1381 = vmatprep.mubr.f32.mxu0 0.0
    %1382 = vmatmul.mubr.f32.gmra.mxu0 %v1302
    %v1383 = vpop.f32.mrf.mxu0
    %v1384 = vadd.f32 0.0, %v1383
    %v1385 = vpop.f32.mrf.mxu0
    %1386 = vmatprep.mubr.f32.mxu0 0.0
    %1387 = vmatmul.mubr.f32.gmra.mxu0 %v1305
    %v1388 = vpop.f32.mrf.mxu0
    %v1389 = vadd.f32 0.0, %v1388
    %v1390 = vpop.f32.mrf.mxu0
    %1391 = vmatprep.mubr.f32.mxu0 0.0
    %1392 = vmatmul.mubr.f32.gmra.mxu0 %v1308
    %v1393 = vpop.f32.mrf.mxu0
    %v1394 = vadd.f32 0.0, %v1393
    %v1395 = vpop.f32.mrf.mxu0
    %1396 = vdwg.mxu0
    %v1397 = vmul.f32 %v1379, 0.25
    %v1398 = vmul.f32 %v1384, 0.25
    %v1399 = vmul.f32 %v1389, 0.25
    %v1400 = vmul.f32 %v1394, 0.25
    %v1401 = vadd.f32 %v1397, %v268
    %v1402 = vadd.f32 %v1398, %v269
    %v1403 = vadd.f32 %v1399, %v270
    %v1404 = vadd.f32 %v1400, %v271
    %v1405 = vsel %vm394, %v1401, -inf
    %1406 = vmax.xlane.f32.xlu0 %v1405
    %v1407 = vpop.xlane.xlu0 %1406
    %v1408 = vsel %vm394, %v1402, -inf
    %1409 = vmax.xlane.f32.xlu0 %v1408
    %v1410 = vpop.xlane.xlu0 %1409
    %v1411 = vsel %vm394, %v1403, -inf
    %1412 = vmax.xlane.f32.xlu0 %v1411
    %v1413 = vpop.xlane.xlu0 %1412
    %v1414 = vsel %vm394, %v1404, -inf
    %1415 = vmax.xlane.f32.xlu0 %v1414
    %v1416 = vpop.xlane.xlu0 %1415
    %v1417 = vsub.f32 %v1401, %v1407
    %v1418 = vsub.f32 %v1402, %v1410
    %v1419 = vsub.f32 %v1403, %v1413
    %v1420 = vsub.f32 %v1404, %v1416
    %v1421 = vmul.f32 %v1417, 1.442695
    %v1422 = vpow.pop %v1421
    %v1423 = vmul.f32 %v1418, 1.442695
    %v1424 = vpow.pop %v1423
    %v1425 = vmul.f32 %v1419, 1.442695
    %v1426 = vpow.pop %v1425
    %v1427 = vmul.f32 %v1420, 1.442695
    %v1428 = vpow.pop %v1427
    %v1429 = vsel %vm394, %v1422, 0.0
    %1430 = vadd.xlane.f32.xlu0 %v1429
    %v1431 = vpop.xlane.xlu0 %1430
    %v1432 = vsel %vm394, %v1424, 0.0
    %1433 = vadd.xlane.f32.xlu0 %v1432
    %v1434 = vpop.xlane.xlu0 %1433
    %v1435 = vsel %vm394, %v1426, 0.0
    %1436 = vadd.xlane.f32.xlu0 %v1435
    %v1437 = vpop.xlane.xlu0 %1436
    %v1438 = vsel %vm394, %v1428, 0.0
    %1439 = vadd.xlane.f32.xlu0 %v1438
    %v1440 = vpop.xlane.xlu0 %1439
    %v1441 = vrcp.pop %v1431
    %v1442 = vrcp.pop %v1434
    %v1443 = vrcp.pop %v1437
    %v1444 = vrcp.pop %v1440
    %v1445 = vmul.f32 %v1422, %v1441
    %v1446 = vmul.f32 %v1424, %v1442
    %v1447 = vmul.f32 %v1426, %v1443
    %v1448 = vmul.f32 %v1428, %v1444
    %v1450 = vsel %vm394, %v1445, 0
    %1452 = vmatprep.subr.mxu0 0.0
    %1453 = vmatpush1.msra.mxu0 0.0
    %1454 = vmatprep.subr.mxu0 0.0
    %1455 = vmatpush1.msra.mxu0 0.0
    %1456 = vmatprep.subr.mxu0 0.0
    %1457 = vmatpush1.msra.mxu0 0.0
    %1458 = vmatprep.subr.mxu0 0.0
    %1459 = vmatpush1.msra.mxu0 0.0
    %1460 = vmatprep.subr.mxu0 0.0
    %1461 = vmatpush1.msra.mxu0 0.0
    %1462 = vmatprep.subr.mxu0 0.0
    %1463 = vmatpush1.msra.mxu0 0.0
    %1464 = vmatprep.subr.mxu0 0.0
    %1465 = vmatpush1.msra.mxu0 0.0
    %1466 = vmatprep.subr.mxu0 0.0
    %1467 = vmatpush1.msra.mxu0 0.0
    %1468 = vmatprep.subr.mxu0 0.0
    %1469 = vmatpush1.msra.mxu0 0.0
    %1470 = vmatprep.subr.mxu0 0.0
    %1471 = vmatpush1.msra.mxu0 0.0
    %1472 = vmatprep.subr.mxu0 0.0
    %1473 = vmatpush1.msra.mxu0 0.0
    %1474 = vmatprep.subr.mxu0 0.0
    %1475 = vmatpush1.msra.mxu0 0.0
    %1476 = vmatprep.subr.mxu0 0.0
    %1477 = vmatpush1.msra.mxu0 0.0
    %1478 = vmatprep.subr.mxu0 0.0
    %1479 = vmatpush1.msra.mxu0 0.0
    %1480 = vmatprep.subr.mxu0 0.0
    %1481 = vmatpush1.msra.mxu0 0.0
    %1482 = vmatprep.subr.mxu0 0.0
    %1483 = vmatpush1.msra.mxu0 %v238
    %1484 = vmatprep.subr.mxu0 0.0
    %1485 = vmatpush2.msra.mxu0 0.0
    %1486 = vmatprep.subr.mxu0 0.0
    %1487 = vmatpush2.msra.mxu0 0.0
    %1488 = vmatprep.subr.mxu0 0.0
    %1489 = vmatpush2.msra.mxu0 0.0
    %1490 = vmatprep.subr.mxu0 0.0
    %1491 = vmatpush2.msra.mxu0 0.0
    %1492 = vmatprep.subr.mxu0 0.0
    %1493 = vmatpush2.msra.mxu0 0.0
    %1494 = vmatprep.subr.mxu0 0.0
    %1495 = vmatpush2.msra.mxu0 0.0
    %1496 = vmatprep.subr.mxu0 0.0
    %1497 = vmatpush2.msra.mxu0 0.0
    %1498 = vmatprep.subr.mxu0 0.0
    %1499 = vmatpush2.msra.mxu0 0.0
    %1500 = vmatprep.subr.mxu0 0.0
    %1501 = vmatpush2.msra.mxu0 0.0
    %1502 = vmatprep.subr.mxu0 0.0
    %1503 = vmatpush2.msra.mxu0 0.0
    %1504 = vmatprep.subr.mxu0 0.0
    %1505 = vmatpush2.msra.mxu0 0.0
    %1506 = vmatprep.subr.mxu0 0.0
    %1507 = vmatpush2.msra.mxu0 0.0
    %1508 = vmatprep.subr.mxu0 0.0
    %1509 = vmatpush2.msra.mxu0 0.0
    %1510 = vmatprep.subr.mxu0 0.0
    %1511 = vmatpush2.msra.mxu0 0.0
    %1512 = vmatprep.subr.mxu0 0.0
    %1513 = vmatpush2.msra.mxu0 0.0
    %1514 = vmatprep.subr.mxu0 0.0
    %1515 = vmatpush2.msra.mxu0 0.0
    %1516 = vmatprep.mubr.f32.mxu0 0.0
    %1517 = vmatmul.mubr.f32.gmra.mxu0 %v1450
    %v1518 = vpop.f32.mrf.mxu0
    %v1519 = vadd.f32 0.0, %v1518
    %v1520 = vpop.f32.mrf.mxu0
    %1521 = vdwg.mxu0
    %1522 = vxpose.xlu0.b32.start [1/16] %v1519, 128
    %1523 = vxpose.xlu0.b32.cont [2/16] 0.0, 128
    %1524 = vxpose.xlu0.b32.cont [3/16] 0.0, 128
    %1525 = vxpose.xlu0.b32.cont [4/16] 0.0, 128
    %1526 = vxpose.xlu0.b32.cont [5/16] 0.0, 128
    %1527 = vxpose.xlu0.b32.cont [6/16] 0.0, 128
    %1528 = vxpose.xlu0.b32.cont [7/16] 0.0, 128
    %1529 = vxpose.xlu0.b32.cont [8/16] 0.0, 128
    %1530 = vxpose.xlu0.b32.cont [9/16] 0.0, 128
    %1531 = vxpose.xlu0.b32.cont [10/16] 0.0, 128
    %1532 = vxpose.xlu0.b32.cont [11/16] 0.0, 128
    %1533 = vxpose.xlu0.b32.cont [12/16] 0.0, 128
    %1534 = vxpose.xlu0.b32.cont [13/16] 0.0, 128
    %1535 = vxpose.xlu0.b32.cont [14/16] 0.0, 128
    %1536 = vxpose.xlu0.b32.cont [15/16] 0.0, 128
    %1537 = vxpose.xlu0.b32.end [16/16] 0.0, 128
    %v1538 = vpop.trf.xlu0
    %v1539 = vpop.trf.xlu0
    %v1540 = vpop.trf.xlu0
    %v1541 = vpop.trf.xlu0
    %v1542 = vpop.trf.xlu0
    %v1543 = vpop.trf.xlu0
    %v1544 = vpop.trf.xlu0
    %v1545 = vpop.trf.xlu0
    %v1546 = vpop.trf.xlu0
    %v1547 = vpop.trf.xlu0
    %v1548 = vpop.trf.xlu0
    %v1549 = vpop.trf.xlu0
    %v1550 = vpop.trf.xlu0
    %v1551 = vpop.trf.xlu0
    %v1552 = vpop.trf.xlu0
    %v1553 = vpop.trf.xlu0
    %1555 = vrot.lane.b32.xlu0 %v238, 112
    %v1556 = vpop.permute.xlu0 %1555
    %v1559 = vsel %vm394, %v1446, 0
    %1561 = vmatprep.subr.mxu0 0.0
    %1562 = vmatpush1.msra.mxu0 0.0
    %1563 = vmatprep.subr.mxu0 0.0
    %1564 = vmatpush1.msra.mxu0 0.0
    %1565 = vmatprep.subr.mxu0 0.0
    %1566 = vmatpush1.msra.mxu0 0.0
    %1567 = vmatprep.subr.mxu0 0.0
    %1568 = vmatpush1.msra.mxu0 0.0
    %1569 = vmatprep.subr.mxu0 0.0
    %1570 = vmatpush1.msra.mxu0 0.0
    %1571 = vmatprep.subr.mxu0 0.0
    %1572 = vmatpush1.msra.mxu0 0.0
    %1573 = vmatprep.subr.mxu0 0.0
    %1574 = vmatpush1.msra.mxu0 0.0
    %1575 = vmatprep.subr.mxu0 0.0
    %1576 = vmatpush1.msra.mxu0 0.0
    %1577 = vmatprep.subr.mxu0 0.0
    %1578 = vmatpush1.msra.mxu0 0.0
    %1579 = vmatprep.subr.mxu0 0.0
    %1580 = vmatpush1.msra.mxu0 0.0
    %1581 = vmatprep.subr.mxu0 0.0
    %1582 = vmatpush1.msra.mxu0 0.0
    %1583 = vmatprep.subr.mxu0 0.0
    %1584 = vmatpush1.msra.mxu0 0.0
    %1585 = vmatprep.subr.mxu0 0.0
    %1586 = vmatpush1.msra.mxu0 0.0
    %1587 = vmatprep.subr.mxu0 0.0
    %1588 = vmatpush1.msra.mxu0 0.0
    %1589 = vmatprep.subr.mxu0 0.0
    %1590 = vmatpush1.msra.mxu0 0.0
    %1591 = vmatprep.subr.mxu0 0.0
    %1592 = vmatpush1.msra.mxu0 %v1556
    %1593 = vmatprep.subr.mxu0 0.0
    %1594 = vmatpush2.msra.mxu0 0.0
    %1595 = vmatprep.subr.mxu0 0.0
    %1596 = vmatpush2.msra.mxu0 0.0
    %1597 = vmatprep.subr.mxu0 0.0
    %1598 = vmatpush2.msra.mxu0 0.0
    %1599 = vmatprep.subr.mxu0 0.0
    %1600 = vmatpush2.msra.mxu0 0.0
    %1601 = vmatprep.subr.mxu0 0.0
    %1602 = vmatpush2.msra.mxu0 0.0
    %1603 = vmatprep.subr.mxu0 0.0
    %1604 = vmatpush2.msra.mxu0 0.0
    %1605 = vmatprep.subr.mxu0 0.0
    %1606 = vmatpush2.msra.mxu0 0.0
    %1607 = vmatprep.subr.mxu0 0.0
    %1608 = vmatpush2.msra.mxu0 0.0
    %1609 = vmatprep.subr.mxu0 0.0
    %1610 = vmatpush2.msra.mxu0 0.0
    %1611 = vmatprep.subr.mxu0 0.0
    %1612 = vmatpush2.msra.mxu0 0.0
    %1613 = vmatprep.subr.mxu0 0.0
    %1614 = vmatpush2.msra.mxu0 0.0
    %1615 = vmatprep.subr.mxu0 0.0
    %1616 = vmatpush2.msra.mxu0 0.0
    %1617 = vmatprep.subr.mxu0 0.0
    %1618 = vmatpush2.msra.mxu0 0.0
    %1619 = vmatprep.subr.mxu0 0.0
    %1620 = vmatpush2.msra.mxu0 0.0
    %1621 = vmatprep.subr.mxu0 0.0
    %1622 = vmatpush2.msra.mxu0 0.0
    %1623 = vmatprep.subr.mxu0 0.0
    %1624 = vmatpush2.msra.mxu0 0.0
    %1625 = vmatprep.mubr.f32.mxu0 0.0
    %1626 = vmatmul.mubr.f32.gmra.mxu0 %v1559
    %v1627 = vpop.f32.mrf.mxu0
    %v1628 = vadd.f32 0.0, %v1627
    %v1629 = vpop.f32.mrf.mxu0
    %1630 = vdwg.mxu0
    %1631 = vxpose.xlu0.b32.start [1/16] %v1628, 128
    %1632 = vxpose.xlu0.b32.cont [2/16] 0.0, 128
    %1633 = vxpose.xlu0.b32.cont [3/16] 0.0, 128
    %1634 = vxpose.xlu0.b32.cont [4/16] 0.0, 128
    %1635 = vxpose.xlu0.b32.cont [5/16] 0.0, 128
    %1636 = vxpose.xlu0.b32.cont [6/16] 0.0, 128
    %1637 = vxpose.xlu0.b32.cont [7/16] 0.0, 128
    %1638 = vxpose.xlu0.b32.cont [8/16] 0.0, 128
    %1639 = vxpose.xlu0.b32.cont [9/16] 0.0, 128
    %1640 = vxpose.xlu0.b32.cont [10/16] 0.0, 128
    %1641 = vxpose.xlu0.b32.cont [11/16] 0.0, 128
    %1642 = vxpose.xlu0.b32.cont [12/16] 0.0, 128
    %1643 = vxpose.xlu0.b32.cont [13/16] 0.0, 128
    %1644 = vxpose.xlu0.b32.cont [14/16] 0.0, 128
    %1645 = vxpose.xlu0.b32.cont [15/16] 0.0, 128
    %1646 = vxpose.xlu0.b32.end [16/16] 0.0, 128
    %v1647 = vpop.trf.xlu0
    %v1648 = vpop.trf.xlu0
    %v1649 = vpop.trf.xlu0
    %v1650 = vpop.trf.xlu0
    %v1651 = vpop.trf.xlu0
    %v1652 = vpop.trf.xlu0
    %v1653 = vpop.trf.xlu0
    %v1654 = vpop.trf.xlu0
    %v1655 = vpop.trf.xlu0
    %v1656 = vpop.trf.xlu0
    %v1657 = vpop.trf.xlu0
    %v1658 = vpop.trf.xlu0
    %v1659 = vpop.trf.xlu0
    %v1660 = vpop.trf.xlu0
    %v1661 = vpop.trf.xlu0
    %v1662 = vpop.trf.xlu0
    %1663 = vrot.lane.b32.xlu0 %v238, 96
    %v1664 = vpop.permute.xlu0 %1663
    %v1667 = vsel %vm394, %v1447, 0
    %1669 = vmatprep.subr.mxu0 0.0
    %1670 = vmatpush1.msra.mxu0 0.0
    %1671 = vmatprep.subr.mxu0 0.0
    %1672 = vmatpush1.msra.mxu0 0.0
    %1673 = vmatprep.subr.mxu0 0.0
    %1674 = vmatpush1.msra.mxu0 0.0
    %1675 = vmatprep.subr.mxu0 0.0
    %1676 = vmatpush1.msra.mxu0 0.0
    %1677 = vmatprep.subr.mxu0 0.0
    %1678 = vmatpush1.msra.mxu0 0.0
    %1679 = vmatprep.subr.mxu0 0.0
    %1680 = vmatpush1.msra.mxu0 0.0
    %1681 = vmatprep.subr.mxu0 0.0
    %1682 = vmatpush1.msra.mxu0 0.0
    %1683 = vmatprep.subr.mxu0 0.0
    %1684 = vmatpush1.msra.mxu0 0.0
    %1685 = vmatprep.subr.mxu0 0.0
    %1686 = vmatpush1.msra.mxu0 0.0
    %1687 = vmatprep.subr.mxu0 0.0
    %1688 = vmatpush1.msra.mxu0 0.0
    %1689 = vmatprep.subr.mxu0 0.0
    %1690 = vmatpush1.msra.mxu0 0.0
    %1691 = vmatprep.subr.mxu0 0.0
    %1692 = vmatpush1.msra.mxu0 0.0
    %1693 = vmatprep.subr.mxu0 0.0
    %1694 = vmatpush1.msra.mxu0 0.0
    %1695 = vmatprep.subr.mxu0 0.0
    %1696 = vmatpush1.msra.mxu0 0.0
    %1697 = vmatprep.subr.mxu0 0.0
    %1698 = vmatpush1.msra.mxu0 0.0
    %1699 = vmatprep.subr.mxu0 0.0
    %1700 = vmatpush1.msra.mxu0 %v1664
    %1701 = vmatprep.subr.mxu0 0.0
    %1702 = vmatpush2.msra.mxu0 0.0
    %1703 = vmatprep.subr.mxu0 0.0
    %1704 = vmatpush2.msra.mxu0 0.0
    %1705 = vmatprep.subr.mxu0 0.0
    %1706 = vmatpush2.msra.mxu0 0.0
    %1707 = vmatprep.subr.mxu0 0.0
    %1708 = vmatpush2.msra.mxu0 0.0
    %1709 = vmatprep.subr.mxu0 0.0
    %1710 = vmatpush2.msra.mxu0 0.0
    %1711 = vmatprep.subr.mxu0 0.0
    %1712 = vmatpush2.msra.mxu0 0.0
    %1713 = vmatprep.subr.mxu0 0.0
    %1714 = vmatpush2.msra.mxu0 0.0
    %1715 = vmatprep.subr.mxu0 0.0
    %1716 = vmatpush2.msra.mxu0 0.0
    %1717 = vmatprep.subr.mxu0 0.0
    %1718 = vmatpush2.msra.mxu0 0.0
    %1719 = vmatprep.subr.mxu0 0.0
    %1720 = vmatpush2.msra.mxu0 0.0
    %1721 = vmatprep.subr.mxu0 0.0
    %1722 = vmatpush2.msra.mxu0 0.0
    %1723 = vmatprep.subr.mxu0 0.0
    %1724 = vmatpush2.msra.mxu0 0.0
    %1725 = vmatprep.subr.mxu0 0.0
    %1726 = vmatpush2.msra.mxu0 0.0
    %1727 = vmatprep.subr.mxu0 0.0
    %1728 = vmatpush2.msra.mxu0 0.0
    %1729 = vmatprep.subr.mxu0 0.0
    %1730 = vmatpush2.msra.mxu0 0.0
    %1731 = vmatprep.subr.mxu0 0.0
    %1732 = vmatpush2.msra.mxu0 0.0
    %1733 = vmatprep.mubr.f32.mxu0 0.0
    %1734 = vmatmul.mubr.f32.gmra.mxu0 %v1667
    %v1735 = vpop.f32.mrf.mxu0
    %v1736 = vadd.f32 0.0, %v1735
    %v1737 = vpop.f32.mrf.mxu0
    %1738 = vdwg.mxu0
    %1739 = vxpose.xlu0.b32.start [1/16] %v1736, 128
    %1740 = vxpose.xlu0.b32.cont [2/16] 0.0, 128
    %1741 = vxpose.xlu0.b32.cont [3/16] 0.0, 128
    %1742 = vxpose.xlu0.b32.cont [4/16] 0.0, 128
    %1743 = vxpose.xlu0.b32.cont [5/16] 0.0, 128
    %1744 = vxpose.xlu0.b32.cont [6/16] 0.0, 128
    %1745 = vxpose.xlu0.b32.cont [7/16] 0.0, 128
    %1746 = vxpose.xlu0.b32.cont [8/16] 0.0, 128
    %1747 = vxpose.xlu0.b32.cont [9/16] 0.0, 128
    %1748 = vxpose.xlu0.b32.cont [10/16] 0.0, 128
    %1749 = vxpose.xlu0.b32.cont [11/16] 0.0, 128
    %1750 = vxpose.xlu0.b32.cont [12/16] 0.0, 128
    %1751 = vxpose.xlu0.b32.cont [13/16] 0.0, 128
    %1752 = vxpose.xlu0.b32.cont [14/16] 0.0, 128
    %1753 = vxpose.xlu0.b32.cont [15/16] 0.0, 128
    %1754 = vxpose.xlu0.b32.end [16/16] 0.0, 128
    %v1755 = vpop.trf.xlu0
    %v1756 = vpop.trf.xlu0
    %v1757 = vpop.trf.xlu0
    %v1758 = vpop.trf.xlu0
    %v1759 = vpop.trf.xlu0
    %v1760 = vpop.trf.xlu0
    %v1761 = vpop.trf.xlu0
    %v1762 = vpop.trf.xlu0
    %v1763 = vpop.trf.xlu0
    %v1764 = vpop.trf.xlu0
    %v1765 = vpop.trf.xlu0
    %v1766 = vpop.trf.xlu0
    %v1767 = vpop.trf.xlu0
    %v1768 = vpop.trf.xlu0
    %v1769 = vpop.trf.xlu0
    %v1770 = vpop.trf.xlu0
    %1771 = vrot.lane.b32.xlu0 %v238, 80
    %v1772 = vpop.permute.xlu0 %1771
    %v1775 = vsel %vm394, %v1448, 0
    %1777 = vmatprep.subr.mxu0 0.0
    %1778 = vmatpush1.msra.mxu0 0.0
    %1779 = vmatprep.subr.mxu0 0.0
    %1780 = vmatpush1.msra.mxu0 0.0
    %1781 = vmatprep.subr.mxu0 0.0
    %1782 = vmatpush1.msra.mxu0 0.0
    %1783 = vmatprep.subr.mxu0 0.0
    %1784 = vmatpush1.msra.mxu0 0.0
    %1785 = vmatprep.subr.mxu0 0.0
    %1786 = vmatpush1.msra.mxu0 0.0
    %1787 = vmatprep.subr.mxu0 0.0
    %1788 = vmatpush1.msra.mxu0 0.0
    %1789 = vmatprep.subr.mxu0 0.0
    %1790 = vmatpush1.msra.mxu0 0.0
    %1791 = vmatprep.subr.mxu0 0.0
    %1792 = vmatpush1.msra.mxu0 0.0
    %1793 = vmatprep.subr.mxu0 0.0
    %1794 = vmatpush1.msra.mxu0 0.0
    %1795 = vmatprep.subr.mxu0 0.0
    %1796 = vmatpush1.msra.mxu0 0.0
    %1797 = vmatprep.subr.mxu0 0.0
    %1798 = vmatpush1.msra.mxu0 0.0
    %1799 = vmatprep.subr.mxu0 0.0
    %1800 = vmatpush1.msra.mxu0 0.0
    %1801 = vmatprep.subr.mxu0 0.0
    %1802 = vmatpush1.msra.mxu0 0.0
    %1803 = vmatprep.subr.mxu0 0.0
    %1804 = vmatpush1.msra.mxu0 0.0
    %1805 = vmatprep.subr.mxu0 0.0
    %1806 = vmatpush1.msra.mxu0 0.0
    %1807 = vmatprep.subr.mxu0 0.0
    %1808 = vmatpush1.msra.mxu0 %v1772
    %1809 = vmatprep.subr.mxu0 0.0
    %1810 = vmatpush2.msra.mxu0 0.0
    %1811 = vmatprep.subr.mxu0 0.0
    %1812 = vmatpush2.msra.mxu0 0.0
    %1813 = vmatprep.subr.mxu0 0.0
    %1814 = vmatpush2.msra.mxu0 0.0
    %1815 = vmatprep.subr.mxu0 0.0
    %1816 = vmatpush2.msra.mxu0 0.0
    %1817 = vmatprep.subr.mxu0 0.0
    %1818 = vmatpush2.msra.mxu0 0.0
    %1819 = vmatprep.subr.mxu0 0.0
    %1820 = vmatpush2.msra.mxu0 0.0
    %1821 = vmatprep.subr.mxu0 0.0
    %1822 = vmatpush2.msra.mxu0 0.0
    %1823 = vmatprep.subr.mxu0 0.0
    %1824 = vmatpush2.msra.mxu0 0.0
    %1825 = vmatprep.subr.mxu0 0.0
    %1826 = vmatpush2.msra.mxu0 0.0
    %1827 = vmatprep.subr.mxu0 0.0
    %1828 = vmatpush2.msra.mxu0 0.0
    %1829 = vmatprep.subr.mxu0 0.0
    %1830 = vmatpush2.msra.mxu0 0.0
    %1831 = vmatprep.subr.mxu0 0.0
    %1832 = vmatpush2.msra.mxu0 0.0
    %1833 = vmatprep.subr.mxu0 0.0
    %1834 = vmatpush2.msra.mxu0 0.0
    %1835 = vmatprep.subr.mxu0 0.0
    %1836 = vmatpush2.msra.mxu0 0.0
    %1837 = vmatprep.subr.mxu0 0.0
    %1838 = vmatpush2.msra.mxu0 0.0
    %1839 = vmatprep.subr.mxu0 0.0
    %1840 = vmatpush2.msra.mxu0 0.0
    %1841 = vmatprep.mubr.f32.mxu0 0.0
    %1842 = vmatmul.mubr.f32.gmra.mxu0 %v1775
    %v1843 = vpop.f32.mrf.mxu0
    %v1844 = vadd.f32 0.0, %v1843
    %v1845 = vpop.f32.mrf.mxu0
    %1846 = vdwg.mxu0
    %1847 = vxpose.xlu0.b32.start [1/16] %v1844, 128
    %1848 = vxpose.xlu0.b32.cont [2/16] 0.0, 128
    %1849 = vxpose.xlu0.b32.cont [3/16] 0.0, 128
    %1850 = vxpose.xlu0.b32.cont [4/16] 0.0, 128
    %1851 = vxpose.xlu0.b32.cont [5/16] 0.0, 128
    %1852 = vxpose.xlu0.b32.cont [6/16] 0.0, 128
    %1853 = vxpose.xlu0.b32.cont [7/16] 0.0, 128
    %1854 = vxpose.xlu0.b32.cont [8/16] 0.0, 128
    %1855 = vxpose.xlu0.b32.cont [9/16] 0.0, 128
    %1856 = vxpose.xlu0.b32.cont [10/16] 0.0, 128
    %1857 = vxpose.xlu0.b32.cont [11/16] 0.0, 128
    %1858 = vxpose.xlu0.b32.cont [12/16] 0.0, 128
    %1859 = vxpose.xlu0.b32.cont [13/16] 0.0, 128
    %1860 = vxpose.xlu0.b32.cont [14/16] 0.0, 128
    %1861 = vxpose.xlu0.b32.cont [15/16] 0.0, 128
    %1862 = vxpose.xlu0.b32.end [16/16] 0.0, 128
    %v1863 = vpop.trf.xlu0
    %v1864 = vpop.trf.xlu0
    %v1865 = vpop.trf.xlu0
    %v1866 = vpop.trf.xlu0
    %v1867 = vpop.trf.xlu0
    %v1868 = vpop.trf.xlu0
    %v1869 = vpop.trf.xlu0
    %v1870 = vpop.trf.xlu0
    %v1871 = vpop.trf.xlu0
    %v1872 = vpop.trf.xlu0
    %v1873 = vpop.trf.xlu0
    %v1874 = vpop.trf.xlu0
    %v1875 = vpop.trf.xlu0
    %v1876 = vpop.trf.xlu0
    %v1877 = vpop.trf.xlu0
    %v1878 = vpop.trf.xlu0
    %1879 = vst.msk [vmem:[#allocation2] sm:$0xff] %vm394, %v1538
    %1880 = vst.msk [vmem:[#allocation2 + $0x8] sm:$0xff] %vm394, %v1539
    %1881 = vst.msk [vmem:[#allocation2 + $0x10] sm:$0xff] %vm394, %v1647
    %1882 = vst.msk [vmem:[#allocation2 + $0x18] sm:$0xff] %vm394, %v1648
    %1883 = vst.msk [vmem:[#allocation2 + $0x20] sm:$0xff] %vm394, %v1755
    %1884 = vst.msk [vmem:[#allocation2 + $0x28] sm:$0xff] %vm394, %v1756
    %1885 = vst.msk [vmem:[#allocation2 + $0x30] sm:$0xff] %vm394, %v1863
    %1886 = vst.msk [vmem:[#allocation2 + $0x38] sm:$0xff] %vm394, %v1864
    %v1887 = vld [vmem:[#allocation2] ss:$8 sm:$0xf]
    %v1888 = vld [vmem:[#allocation2] ss:$8 sm:$0xf0]
    %v1889 = vor.u32 %v1887, %v1888
    %v1890 = vpack.c.bf16 %v1889, %v1889
    %v1891 = vld [vmem:[%s881] ss:$8 sm:$0xf]
    %v1892 = vld [vmem:[%s881] ss:$8 sm:$0xf0]
    %v1893 = vor.u32 %v1891, %v1892
    %v1894 = vpack.c.bf16 %v1893, %v1893
    %v1896 = vsel %vm394, %v1894, 0
    %1898 = vmatprep.subr.bf16.mxu0 0
    %1899 = vmatpush1.bf16.msra.mxu0 0
    %1900 = vmatprep.subr.bf16.mxu0 0
    %1901 = vmatpush1.bf16.msra.mxu0 0
    %1902 = vmatprep.subr.bf16.mxu0 0
    %1903 = vmatpush1.bf16.msra.mxu0 0
    %1904 = vmatprep.subr.bf16.mxu0 0
    %1905 = vmatpush1.bf16.msra.mxu0 0
    %1906 = vmatprep.subr.bf16.mxu0 0
    %1907 = vmatpush1.bf16.msra.mxu0 0
    %1908 = vmatprep.subr.bf16.mxu0 0
    %1909 = vmatpush1.bf16.msra.mxu0 0
    %1910 = vmatprep.subr.bf16.mxu0 0
    %1911 = vmatpush1.bf16.msra.mxu0 0
    %1912 = vmatprep.subr.bf16.mxu0 0
    %1913 = vmatpush1.bf16.msra.mxu0 %v891
    %1914 = vmatprep.subr.bf16.mxu0 0
    %1915 = vmatpush2.bf16.msra.mxu0 0
    %1916 = vmatprep.subr.bf16.mxu0 0
    %1917 = vmatpush2.bf16.msra.mxu0 0
    %1918 = vmatprep.subr.bf16.mxu0 0
    %1919 = vmatpush2.bf16.msra.mxu0 0
    %1920 = vmatprep.subr.bf16.mxu0 0
    %1921 = vmatpush2.bf16.msra.mxu0 0
    %1922 = vmatprep.subr.bf16.mxu0 0
    %1923 = vmatpush2.bf16.msra.mxu0 0
    %1924 = vmatprep.subr.bf16.mxu0 0
    %1925 = vmatpush2.bf16.msra.mxu0 0
    %1926 = vmatprep.subr.bf16.mxu0 0
    %1927 = vmatpush2.bf16.msra.mxu0 0
    %1928 = vmatprep.subr.bf16.mxu0 0
    %1929 = vmatpush2.bf16.msra.mxu0 0
    %1930 = vmatprep.mubr.bf16.mxu0 0
    %1931 = vmatmul.mubr.bf16.gmra.mxu0 %v1896
    %v1932 = vpop.f32.mrf.mxu0
    %v1933 = vadd.f32 0.0, %v1932
    %v1934 = vpop.f32.mrf.mxu0
    %v1935 = vpop.f32.mrf.mxu0
    %v1936 = vpop.f32.mrf.mxu0
    %1937 = vdwg.mxu0
    %v1939 = vsel %vm394, %v1890, 0
    %1941 = vmatprep.subr.bf16.mxu0 0
    %1942 = vmatpush1.bf16.msra.mxu0 0
    %1943 = vmatprep.subr.bf16.mxu0 0
    %1944 = vmatpush1.bf16.msra.mxu0 0
    %1945 = vmatprep.subr.bf16.mxu0 0
    %1946 = vmatpush1.bf16.msra.mxu0 0
    %1947 = vmatprep.subr.bf16.mxu0 0
    %1948 = vmatpush1.bf16.msra.mxu0 0
    %1949 = vmatprep.subr.bf16.mxu0 0
    %1950 = vmatpush1.bf16.msra.mxu0 0
    %1951 = vmatprep.subr.bf16.mxu0 0
    %1952 = vmatpush1.bf16.msra.mxu0 0
    %1953 = vmatprep.subr.bf16.mxu0 0
    %1954 = vmatpush1.bf16.msra.mxu0 0
    %1955 = vmatprep.subr.bf16.mxu0 0
    %1956 = vmatpush1.bf16.msra.mxu0 %v937
    %1957 = vmatprep.subr.bf16.mxu0 0
    %1958 = vmatpush2.bf16.msra.mxu0 0
    %1959 = vmatprep.subr.bf16.mxu0 0
    %1960 = vmatpush2.bf16.msra.mxu0 0
    %1961 = vmatprep.subr.bf16.mxu0 0
    %1962 = vmatpush2.bf16.msra.mxu0 0
    %1963 = vmatprep.subr.bf16.mxu0 0
    %1964 = vmatpush2.bf16.msra.mxu0 0
    %1965 = vmatprep.subr.bf16.mxu0 0
    %1966 = vmatpush2.bf16.msra.mxu0 0
    %1967 = vmatprep.subr.bf16.mxu0 0
    %1968 = vmatpush2.bf16.msra.mxu0 0
    %1969 = vmatprep.subr.bf16.mxu0 0
    %1970 = vmatpush2.bf16.msra.mxu0 0
    %1971 = vmatprep.subr.bf16.mxu0 0
    %1972 = vmatpush2.bf16.msra.mxu0 0
    %1973 = vmatprep.mubr.bf16.mxu0 0
    %1974 = vmatmul.mubr.bf16.gmra.mxu0 %v1939
    %v1975 = vpop.f32.mrf.mxu0
    %v1976 = vadd.f32 %v1933, %v1975
    %v1977 = vpop.f32.mrf.mxu0
    %v1978 = vpop.f32.mrf.mxu0
    %v1979 = vpop.f32.mrf.mxu0
    %1980 = vdwg.mxu0
    %v1981 = vld [vmem:[%s979] ss:$8 sm:$0xf]
    %v1982 = vld [vmem:[%s979] ss:$8 sm:$0xf0]
    %v1983 = vor.u32 %v1981, %v1982
    %v1984 = vpack.c.bf16 %v1983, %v1983
    %v1986 = vsel %vm394, %v1984, 0
    %1988 = vmatprep.subr.bf16.mxu0 0
    %1989 = vmatpush1.bf16.msra.mxu0 0
    %1990 = vmatprep.subr.bf16.mxu0 0
    %1991 = vmatpush1.bf16.msra.mxu0 0
    %1992 = vmatprep.subr.bf16.mxu0 0
    %1993 = vmatpush1.bf16.msra.mxu0 0
    %1994 = vmatprep.subr.bf16.mxu0 0
    %1995 = vmatpush1.bf16.msra.mxu0 0
    %1996 = vmatprep.subr.bf16.mxu0 0
    %1997 = vmatpush1.bf16.msra.mxu0 0
    %1998 = vmatprep.subr.bf16.mxu0 0
    %1999 = vmatpush1.bf16.msra.mxu0 0
    %2000 = vmatprep.subr.bf16.mxu0 0
    %2001 = vmatpush1.bf16.msra.mxu0 0
    %2002 = vmatprep.subr.bf16.mxu0 0
    %2003 = vmatpush1.bf16.msra.mxu0 %v988
    %2004 = vmatprep.subr.bf16.mxu0 0
    %2005 = vmatpush2.bf16.msra.mxu0 0
    %2006 = vmatprep.subr.bf16.mxu0 0
    %2007 = vmatpush2.bf16.msra.mxu0 0
    %2008 = vmatprep.subr.bf16.mxu0 0
    %2009 = vmatpush2.bf16.msra.mxu0 0
    %2010 = vmatprep.subr.bf16.mxu0 0
    %2011 = vmatpush2.bf16.msra.mxu0 0
    %2012 = vmatprep.subr.bf16.mxu0 0
    %2013 = vmatpush2.bf16.msra.mxu0 0
    %2014 = vmatprep.subr.bf16.mxu0 0
    %2015 = vmatpush2.bf16.msra.mxu0 0
    %2016 = vmatprep.subr.bf16.mxu0 0
    %2017 = vmatpush2.bf16.msra.mxu0 0
    %2018 = vmatprep.subr.bf16.mxu0 0
    %2019 = vmatpush2.bf16.msra.mxu0 0
    %2020 = vmatprep.mubr.bf16.mxu0 0
    %2021 = vmatmul.mubr.bf16.gmra.mxu0 %v1986
    %v2022 = vpop.f32.mrf.mxu0
    %v2023 = vadd.f32 0.0, %v2022
    %v2024 = vpop.f32.mrf.mxu0
    %v2025 = vpop.f32.mrf.mxu0
    %v2026 = vpop.f32.mrf.mxu0
    %2027 = vdwg.mxu0
    %v2028 = vadd.f32 %v1976, %v2023
    %v2029 = vld [vmem:[%s1031] ss:$8 sm:$0xf]
    %v2030 = vld [vmem:[%s1031] ss:$8 sm:$0xf0]
    %v2031 = vor.u32 %v2029, %v2030
    %v2032 = vpack.c.bf16 %v2031, %v2031
    %v2034 = vsel %vm394, %v2032, 0
    %2036 = vmatprep.subr.bf16.mxu0 0
    %2037 = vmatpush1.bf16.msra.mxu0 0
    %2038 = vmatprep.subr.bf16.mxu0 0
    %2039 = vmatpush1.bf16.msra.mxu0 0
    %2040 = vmatprep.subr.bf16.mxu0 0
    %2041 = vmatpush1.bf16.msra.mxu0 0
    %2042 = vmatprep.subr.bf16.mxu0 0
    %2043 = vmatpush1.bf16.msra.mxu0 0
    %2044 = vmatprep.subr.bf16.mxu0 0
    %2045 = vmatpush1.bf16.msra.mxu0 0
    %2046 = vmatprep.subr.bf16.mxu0 0
    %2047 = vmatpush1.bf16.msra.mxu0 0
    %2048 = vmatprep.subr.bf16.mxu0 0
    %2049 = vmatpush1.bf16.msra.mxu0 0
    %2050 = vmatprep.subr.bf16.mxu0 0
    %2051 = vmatpush1.bf16.msra.mxu0 %v1040
    %2052 = vmatprep.subr.bf16.mxu0 0
    %2053 = vmatpush2.bf16.msra.mxu0 0
    %2054 = vmatprep.subr.bf16.mxu0 0
    %2055 = vmatpush2.bf16.msra.mxu0 0
    %2056 = vmatprep.subr.bf16.mxu0 0
    %2057 = vmatpush2.bf16.msra.mxu0 0
    %2058 = vmatprep.subr.bf16.mxu0 0
    %2059 = vmatpush2.bf16.msra.mxu0 0
    %2060 = vmatprep.subr.bf16.mxu0 0
    %2061 = vmatpush2.bf16.msra.mxu0 0
    %2062 = vmatprep.subr.bf16.mxu0 0
    %2063 = vmatpush2.bf16.msra.mxu0 0
    %2064 = vmatprep.subr.bf16.mxu0 0
    %2065 = vmatpush2.bf16.msra.mxu0 0
    %2066 = vmatprep.subr.bf16.mxu0 0
    %2067 = vmatpush2.bf16.msra.mxu0 0
    %2068 = vmatprep.mubr.bf16.mxu0 0
    %2069 = vmatmul.mubr.bf16.gmra.mxu0 %v2034
    %v2070 = vpop.f32.mrf.mxu0
    %v2071 = vadd.f32 0.0, %v2070
    %v2072 = vpop.f32.mrf.mxu0
    %v2073 = vpop.f32.mrf.mxu0
    %v2074 = vpop.f32.mrf.mxu0
    %2075 = vdwg.mxu0
    %v2076 = vadd.f32 %v2028, %v2071
    %v2077 = vld [vmem:[%s1083] ss:$8 sm:$0xf]
    %v2078 = vld [vmem:[%s1083] ss:$8 sm:$0xf0]
    %v2079 = vor.u32 %v2077, %v2078
    %v2080 = vpack.c.bf16 %v2079, %v2079
    %v2082 = vsel %vm394, %v2080, 0
    %2084 = vmatprep.subr.bf16.mxu0 0
    %2085 = vmatpush1.bf16.msra.mxu0 0
    %2086 = vmatprep.subr.bf16.mxu0 0
    %2087 = vmatpush1.bf16.msra.mxu0 0
    %2088 = vmatprep.subr.bf16.mxu0 0
    %2089 = vmatpush1.bf16.msra.mxu0 0
    %2090 = vmatprep.subr.bf16.mxu0 0
    %2091 = vmatpush1.bf16.msra.mxu0 0
    %2092 = vmatprep.subr.bf16.mxu0 0
    %2093 = vmatpush1.bf16.msra.mxu0 0
    %2094 = vmatprep.subr.bf16.mxu0 0
    %2095 = vmatpush1.bf16.msra.mxu0 0
    %2096 = vmatprep.subr.bf16.mxu0 0
    %2097 = vmatpush1.bf16.msra.mxu0 0
    %2098 = vmatprep.subr.bf16.mxu0 0
    %2099 = vmatpush1.bf16.msra.mxu0 %v1092
    %2100 = vmatprep.subr.bf16.mxu0 0
    %2101 = vmatpush2.bf16.msra.mxu0 0
    %2102 = vmatprep.subr.bf16.mxu0 0
    %2103 = vmatpush2.bf16.msra.mxu0 0
    %2104 = vmatprep.subr.bf16.mxu0 0
    %2105 = vmatpush2.bf16.msra.mxu0 0
    %2106 = vmatprep.subr.bf16.mxu0 0
    %2107 = vmatpush2.bf16.msra.mxu0 0
    %2108 = vmatprep.subr.bf16.mxu0 0
    %2109 = vmatpush2.bf16.msra.mxu0 0
    %2110 = vmatprep.subr.bf16.mxu0 0
    %2111 = vmatpush2.bf16.msra.mxu0 0
    %2112 = vmatprep.subr.bf16.mxu0 0
    %2113 = vmatpush2.bf16.msra.mxu0 0
    %2114 = vmatprep.subr.bf16.mxu0 0
    %2115 = vmatpush2.bf16.msra.mxu0 0
    %2116 = vmatprep.mubr.bf16.mxu0 0
    %2117 = vmatmul.mubr.bf16.gmra.mxu0 %v2082
    %v2118 = vpop.f32.mrf.mxu0
    %v2119 = vadd.f32 0.0, %v2118
    %v2120 = vpop.f32.mrf.mxu0
    %v2121 = vpop.f32.mrf.mxu0
    %v2122 = vpop.f32.mrf.mxu0
    %2123 = vdwg.mxu0
    %v2124 = vadd.f32 %v2076, %v2119
    %v2125 = vld [vmem:[%s1135] ss:$8 sm:$0xf]
    %v2126 = vld [vmem:[%s1135] ss:$8 sm:$0xf0]
    %v2127 = vor.u32 %v2125, %v2126
    %v2128 = vpack.c.bf16 %v2127, %v2127
    %v2130 = vsel %vm394, %v2128, 0
    %2132 = vmatprep.subr.bf16.mxu0 0
    %2133 = vmatpush1.bf16.msra.mxu0 0
    %2134 = vmatprep.subr.bf16.mxu0 0
    %2135 = vmatpush1.bf16.msra.mxu0 0
    %2136 = vmatprep.subr.bf16.mxu0 0
    %2137 = vmatpush1.bf16.msra.mxu0 0
    %2138 = vmatprep.subr.bf16.mxu0 0
    %2139 = vmatpush1.bf16.msra.mxu0 0
    %2140 = vmatprep.subr.bf16.mxu0 0
    %2141 = vmatpush1.bf16.msra.mxu0 0
    %2142 = vmatprep.subr.bf16.mxu0 0
    %2143 = vmatpush1.bf16.msra.mxu0 0
    %2144 = vmatprep.subr.bf16.mxu0 0
    %2145 = vmatpush1.bf16.msra.mxu0 0
    %2146 = vmatprep.subr.bf16.mxu0 0
    %2147 = vmatpush1.bf16.msra.mxu0 %v1144
    %2148 = vmatprep.subr.bf16.mxu0 0
    %2149 = vmatpush2.bf16.msra.mxu0 0
    %2150 = vmatprep.subr.bf16.mxu0 0
    %2151 = vmatpush2.bf16.msra.mxu0 0
    %2152 = vmatprep.subr.bf16.mxu0 0
    %2153 = vmatpush2.bf16.msra.mxu0 0
    %2154 = vmatprep.subr.bf16.mxu0 0
    %2155 = vmatpush2.bf16.msra.mxu0 0
    %2156 = vmatprep.subr.bf16.mxu0 0
    %2157 = vmatpush2.bf16.msra.mxu0 0
    %2158 = vmatprep.subr.bf16.mxu0 0
    %2159 = vmatpush2.bf16.msra.mxu0 0
    %2160 = vmatprep.subr.bf16.mxu0 0
    %2161 = vmatpush2.bf16.msra.mxu0 0
    %2162 = vmatprep.subr.bf16.mxu0 0
    %2163 = vmatpush2.bf16.msra.mxu0 0
    %2164 = vmatprep.mubr.bf16.mxu0 0
    %2165 = vmatmul.mubr.bf16.gmra.mxu0 %v2130
    %v2166 = vpop.f32.mrf.mxu0
    %v2167 = vadd.f32 0.0, %v2166
    %v2168 = vpop.f32.mrf.mxu0
    %v2169 = vpop.f32.mrf.mxu0
    %v2170 = vpop.f32.mrf.mxu0
    %2171 = vdwg.mxu0
    %v2172 = vadd.f32 %v2124, %v2167
    %v2173 = vld [vmem:[%s1187] ss:$8 sm:$0xf]
    %v2174 = vld [vmem:[%s1187] ss:$8 sm:$0xf0]
    %v2175 = vor.u32 %v2173, %v2174
    %v2176 = vpack.c.bf16 %v2175, %v2175
    %v2178 = vsel %vm394, %v2176, 0
    %2180 = vmatprep.subr.bf16.mxu0 0
    %2181 = vmatpush1.bf16.msra.mxu0 0
    %2182 = vmatprep.subr.bf16.mxu0 0
    %2183 = vmatpush1.bf16.msra.mxu0 0
    %2184 = vmatprep.subr.bf16.mxu0 0
    %2185 = vmatpush1.bf16.msra.mxu0 0
    %2186 = vmatprep.subr.bf16.mxu0 0
    %2187 = vmatpush1.bf16.msra.mxu0 0
    %2188 = vmatprep.subr.bf16.mxu0 0
    %2189 = vmatpush1.bf16.msra.mxu0 0
    %2190 = vmatprep.subr.bf16.mxu0 0
    %2191 = vmatpush1.bf16.msra.mxu0 0
    %2192 = vmatprep.subr.bf16.mxu0 0
    %2193 = vmatpush1.bf16.msra.mxu0 0
    %2194 = vmatprep.subr.bf16.mxu0 0
    %2195 = vmatpush1.bf16.msra.mxu0 %v1196
    %2196 = vmatprep.subr.bf16.mxu0 0
    %2197 = vmatpush2.bf16.msra.mxu0 0
    %2198 = vmatprep.subr.bf16.mxu0 0
    %2199 = vmatpush2.bf16.msra.mxu0 0
    %2200 = vmatprep.subr.bf16.mxu0 0
    %2201 = vmatpush2.bf16.msra.mxu0 0
    %2202 = vmatprep.subr.bf16.mxu0 0
    %2203 = vmatpush2.bf16.msra.mxu0 0
    %2204 = vmatprep.subr.bf16.mxu0 0
    %2205 = vmatpush2.bf16.msra.mxu0 0
    %2206 = vmatprep.subr.bf16.mxu0 0
    %2207 = vmatpush2.bf16.msra.mxu0 0
    %2208 = vmatprep.subr.bf16.mxu0 0
    %2209 = vmatpush2.bf16.msra.mxu0 0
    %2210 = vmatprep.subr.bf16.mxu0 0
    %2211 = vmatpush2.bf16.msra.mxu0 0
    %2212 = vmatprep.mubr.bf16.mxu0 0
    %2213 = vmatmul.mubr.bf16.gmra.mxu0 %v2178
    %v2214 = vpop.f32.mrf.mxu0
    %v2215 = vadd.f32 0.0, %v2214
    %v2216 = vpop.f32.mrf.mxu0
    %v2217 = vpop.f32.mrf.mxu0
    %v2218 = vpop.f32.mrf.mxu0
    %2219 = vdwg.mxu0
    %v2220 = vadd.f32 %v2172, %v2215
    %v2221 = vld [vmem:[%s1239] ss:$8 sm:$0xf]
    %v2222 = vld [vmem:[%s1239] ss:$8 sm:$0xf0]
    %v2223 = vor.u32 %v2221, %v2222
    %v2224 = vpack.c.bf16 %v2223, %v2223
    %v2226 = vsel %vm394, %v2224, 0
    %2228 = vmatprep.subr.bf16.mxu0 0
    %2229 = vmatpush1.bf16.msra.mxu0 0
    %2230 = vmatprep.subr.bf16.mxu0 0
    %2231 = vmatpush1.bf16.msra.mxu0 0
    %2232 = vmatprep.subr.bf16.mxu0 0
    %2233 = vmatpush1.bf16.msra.mxu0 0
    %2234 = vmatprep.subr.bf16.mxu0 0
    %2235 = vmatpush1.bf16.msra.mxu0 0
    %2236 = vmatprep.subr.bf16.mxu0 0
    %2237 = vmatpush1.bf16.msra.mxu0 0
    %2238 = vmatprep.subr.bf16.mxu0 0
    %2239 = vmatpush1.bf16.msra.mxu0 0
    %2240 = vmatprep.subr.bf16.mxu0 0
    %2241 = vmatpush1.bf16.msra.mxu0 0
    %2242 = vmatprep.subr.bf16.mxu0 0
    %2243 = vmatpush1.bf16.msra.mxu0 %v1248
    %2244 = vmatprep.subr.bf16.mxu0 0
    %2245 = vmatpush2.bf16.msra.mxu0 0
    %2246 = vmatprep.subr.bf16.mxu0 0
    %2247 = vmatpush2.bf16.msra.mxu0 0
    %2248 = vmatprep.subr.bf16.mxu0 0
    %2249 = vmatpush2.bf16.msra.mxu0 0
    %2250 = vmatprep.subr.bf16.mxu0 0
    %2251 = vmatpush2.bf16.msra.mxu0 0
    %2252 = vmatprep.subr.bf16.mxu0 0
    %2253 = vmatpush2.bf16.msra.mxu0 0
    %2254 = vmatprep.subr.bf16.mxu0 0
    %2255 = vmatpush2.bf16.msra.mxu0 0
    %2256 = vmatprep.subr.bf16.mxu0 0
    %2257 = vmatpush2.bf16.msra.mxu0 0
    %2258 = vmatprep.subr.bf16.mxu0 0
    %2259 = vmatpush2.bf16.msra.mxu0 0
    %2260 = vmatprep.mubr.bf16.mxu0 0
    %2261 = vmatmul.mubr.bf16.gmra.mxu0 %v2226
    %v2262 = vpop.f32.mrf.mxu0
    %v2263 = vadd.f32 0.0, %v2262
    %v2264 = vpop.f32.mrf.mxu0
    %v2265 = vpop.f32.mrf.mxu0
    %v2266 = vpop.f32.mrf.mxu0
    %2267 = vdwg.mxu0
    %v2268 = vadd.f32 %v2220, %v2263
    %v2269 = vadd.f32 %v104, %v1290
    %v2270 = vadd.f32 %v105, %v2268
    %v2271 = vld [vmem:[%s10] sm:$0x1]
    %v2273 = vlaneseq
    %v2274 = vshrl.u32 %v2273, 7
    %v2275 = vsub.s32 0, %v2274
    %v2276 = vrot.slane %v2271, %v2275
    %v2278 = vadd.f32 %v2269, %v2276
    %v2279 = vadd.f32 %v2270, %v2276
    %v2280 = vmul.f32 %v2278, %v2278
    %v2281 = vmul.f32 %v2279, %v2279
    %v2282 = vsel %vm108, %v2280, 0.0
    %2283 = vadd.xlane.f32.xlu0 %v2282
    %v2284 = vpop.xlane.xlu0 %2283
    %v2285 = vsel %vm108, %v2281, 0.0
    %2286 = vadd.xlane.f32.xlu0 %v2285
    %v2287 = vpop.xlane.xlu0 %2286
    %v2288 = vmul.f32 %v2284, %v115
    %v2289 = vmul.f32 %v2287, %v115
    %v2290 = vadd.f32 %v2288, 1.1920929e-07
    %v2291 = vadd.f32 %v2289, 1.1920929e-07
    %v2292 = vrsqrt.pop %v2290
    %v2293 = vrsqrt.pop %v2291
    %v2294 = vmul.f32 %v2278, %v2292
    %v2295 = vmul.f32 %v2279, %v2293
    %v2296 = vld [vmem:[%s11] sm:$0x1]
    %v2298 = vlaneseq
    %v2299 = vshrl.u32 %v2298, 7
    %v2300 = vsub.s32 0, %v2299
    %v2301 = vrot.slane %v2296, %v2300
    %v2303 = vmul.f32 %v2294, %v2301
    %v2304 = vmul.f32 %v2295, %v2301
    %v2305 = vpack.c.bf16 %v2304, %v2303
    %v2306 = vld [vmem:[%s12] sm:$0xff]
    %v2307 = vld [vmem:[%s12 + $0x8] sm:$0xff]
    %v2308 = vld [vmem:[%s12 + $0x10] sm:$0xff]
    %v2309 = vld [vmem:[%s12 + $0x18] sm:$0xff]
    %v2310 = vld [vmem:[%s12 + $0x20] sm:$0xff]
    %v2311 = vld [vmem:[%s12 + $0x28] sm:$0xff]
    %v2312 = vld [vmem:[%s12 + $0x30] sm:$0xff]
    %v2313 = vld [vmem:[%s12 + $0x38] sm:$0xff]
    %v2314 = vld [vmem:[%s12 + $0x40] sm:$0xff]
    %v2315 = vld [vmem:[%s12 + $0x48] sm:$0xff]
    %v2316 = vld [vmem:[%s12 + $0x50] sm:$0xff]
    %v2317 = vld [vmem:[%s12 + $0x58] sm:$0xff]
    %v2318 = vld [vmem:[%s12 + $0x60] sm:$0xff]
    %v2319 = vld [vmem:[%s12 + $0x68] sm:$0xff]
    %v2320 = vld [vmem:[%s12 + $0x70] sm:$0xff]
    %v2321 = vld [vmem:[%s12 + $0x78] sm:$0xff]
    %v2338 = vunpack.c.l.b16 %v2306
    %v2339 = vunpack.c.h.b16 %v2306
    %v2340 = vunpack.c.l.b16 %v2307
    %v2341 = vunpack.c.h.b16 %v2307
    %v2342 = vunpack.c.l.b16 %v2308
    %v2343 = vunpack.c.h.b16 %v2308
    %v2344 = vunpack.c.l.b16 %v2309
    %v2345 = vunpack.c.h.b16 %v2309
    %v2346 = vunpack.c.l.b16 %v2310
    %v2347 = vunpack.c.h.b16 %v2310
    %v2348 = vunpack.c.l.b16 %v2311
    %v2349 = vunpack.c.h.b16 %v2311
    %v2350 = vunpack.c.l.b16 %v2312
    %v2351 = vunpack.c.h.b16 %v2312
    %v2352 = vunpack.c.l.b16 %v2313
    %v2353 = vunpack.c.h.b16 %v2313
    %v2354 = vunpack.c.l.b16 %v2314
    %v2355 = vunpack.c.h.b16 %v2314
    %v2356 = vunpack.c.l.b16 %v2315
    %v2357 = vunpack.c.h.b16 %v2315
    %v2358 = vunpack.c.l.b16 %v2316
    %v2359 = vunpack.c.h.b16 %v2316
    %v2360 = vunpack.c.l.b16 %v2317
    %v2361 = vunpack.c.h.b16 %v2317
    %v2362 = vunpack.c.l.b16 %v2318
    %v2363 = vunpack.c.h.b16 %v2318
    %v2364 = vunpack.c.l.b16 %v2319
    %v2365 = vunpack.c.h.b16 %v2319
    %v2366 = vunpack.c.l.b16 %v2320
    %v2367 = vunpack.c.h.b16 %v2320
    %v2368 = vunpack.c.l.b16 %v2321
    %v2369 = vunpack.c.h.b16 %v2321
    %v2370 = vpack.c.b16 %v2342, %v2338
    %v2371 = vpack.c.b16 %v2343, %v2339
    %v2372 = vpack.c.b16 %v2344, %v2340
    %v2373 = vpack.c.b16 %v2345, %v2341
    %v2374 = vpack.c.b16 %v2350, %v2346
    %v2375 = vpack.c.b16 %v2351, %v2347
    %v2376 = vpack.c.b16 %v2352, %v2348
    %v2377 = vpack.c.b16 %v2353, %v2349
    %v2378 = vpack.c.b16 %v2358, %v2354
    %v2379 = vpack.c.b16 %v2359, %v2355
    %v2380 = vpack.c.b16 %v2360, %v2356
    %v2381 = vpack.c.b16 %v2361, %v2357
    %v2382 = vpack.c.b16 %v2366, %v2362
    %v2383 = vpack.c.b16 %v2367, %v2363
    %v2384 = vpack.c.b16 %v2368, %v2364
    %v2385 = vpack.c.b16 %v2369, %v2365
    %v2403 = vsel %vm108, %v2305, 0
    %2405 = vmatprep.subr.bf16.mxu0 0
    %2406 = vmatpush1.bf16.msra.mxu0 0
    %2407 = vmatprep.subr.bf16.mxu0 0
    %2408 = vmatpush1.bf16.msra.mxu0 0
    %2409 = vmatprep.subr.bf16.mxu0 0
    %2410 = vmatpush1.bf16.msra.mxu0 0
    %2411 = vmatprep.subr.bf16.mxu0 0
    %2412 = vmatpush1.bf16.msra.mxu0 0
    %2413 = vmatprep.subr.bf16.mxu0 %v2383
    %2414 = vmatpush1.bf16.msra.mxu0 %v2382
    %2415 = vmatprep.subr.bf16.mxu0 %v2379
    %2416 = vmatpush1.bf16.msra.mxu0 %v2378
    %2417 = vmatprep.subr.bf16.mxu0 %v2375
    %2418 = vmatpush1.bf16.msra.mxu0 %v2374
    %2419 = vmatprep.subr.bf16.mxu0 %v2371
    %2420 = vmatpush1.bf16.msra.mxu0 %v2370
    %2421 = vmatprep.subr.bf16.mxu0 0
    %2422 = vmatpush2.bf16.msra.mxu0 0
    %2423 = vmatprep.subr.bf16.mxu0 0
    %2424 = vmatpush2.bf16.msra.mxu0 0
    %2425 = vmatprep.subr.bf16.mxu0 0
    %2426 = vmatpush2.bf16.msra.mxu0 0
    %2427 = vmatprep.subr.bf16.mxu0 0
    %2428 = vmatpush2.bf16.msra.mxu0 0
    %2429 = vmatprep.subr.bf16.mxu0 0
    %2430 = vmatpush2.bf16.msra.mxu0 0
    %2431 = vmatprep.subr.bf16.mxu0 0
    %2432 = vmatpush2.bf16.msra.mxu0 0
    %2433 = vmatprep.subr.bf16.mxu0 0
    %2434 = vmatpush2.bf16.msra.mxu0 0
    %2435 = vmatprep.subr.bf16.mxu0 0
    %2436 = vmatpush2.bf16.msra.mxu0 0
    %2437 = vmatprep.mubr.bf16.mxu0 0
    %2438 = vmatmul.mubr.bf16.gmra.mxu0 %v2403
    %v2439 = vpop.f32.mrf.mxu0
    %v2440 = vadd.f32 0.0, %v2439
    %v2441 = vpop.f32.mrf.mxu0
    %v2442 = vadd.f32 0.0, %v2441
    %v2443 = vpop.f32.mrf.mxu0
    %v2444 = vadd.f32 0.0, %v2443
    %v2445 = vpop.f32.mrf.mxu0
    %v2446 = vadd.f32 0.0, %v2445
    %2447 = vdwg.mxu0
    %2448 = vmatprep.subr.bf16.mxu0 0
    %2449 = vmatpush1.bf16.msra.mxu0 0
    %2450 = vmatprep.subr.bf16.mxu0 0
    %2451 = vmatpush1.bf16.msra.mxu0 0
    %2452 = vmatprep.subr.bf16.mxu0 0
    %2453 = vmatpush1.bf16.msra.mxu0 0
    %2454 = vmatprep.subr.bf16.mxu0 0
    %2455 = vmatpush1.bf16.msra.mxu0 0
    %2456 = vmatprep.subr.bf16.mxu0 %v2385
    %2457 = vmatpush1.bf16.msra.mxu0 %v2384
    %2458 = vmatprep.subr.bf16.mxu0 %v2381
    %2459 = vmatpush1.bf16.msra.mxu0 %v2380
    %2460 = vmatprep.subr.bf16.mxu0 %v2377
    %2461 = vmatpush1.bf16.msra.mxu0 %v2376
    %2462 = vmatprep.subr.bf16.mxu0 %v2373
    %2463 = vmatpush1.bf16.msra.mxu0 %v2372
    %2464 = vmatprep.subr.bf16.mxu0 0
    %2465 = vmatpush2.bf16.msra.mxu0 0
    %2466 = vmatprep.subr.bf16.mxu0 0
    %2467 = vmatpush2.bf16.msra.mxu0 0
    %2468 = vmatprep.subr.bf16.mxu0 0
    %2469 = vmatpush2.bf16.msra.mxu0 0
    %2470 = vmatprep.subr.bf16.mxu0 0
    %2471 = vmatpush2.bf16.msra.mxu0 0
    %2472 = vmatprep.subr.bf16.mxu0 0
    %2473 = vmatpush2.bf16.msra.mxu0 0
    %2474 = vmatprep.subr.bf16.mxu0 0
    %2475 = vmatpush2.bf16.msra.mxu0 0
    %2476 = vmatprep.subr.bf16.mxu0 0
    %2477 = vmatpush2.bf16.msra.mxu0 0
    %2478 = vmatprep.subr.bf16.mxu0 0
    %2479 = vmatpush2.bf16.msra.mxu0 0
    %2480 = vmatprep.mubr.bf16.mxu0 0
    %2481 = vmatmul.mubr.bf16.gmra.mxu0 %v2403
    %v2482 = vpop.f32.mrf.mxu0
    %v2483 = vadd.f32 0.0, %v2482
    %v2484 = vpop.f32.mrf.mxu0
    %v2485 = vadd.f32 0.0, %v2484
    %v2486 = vpop.f32.mrf.mxu0
    %v2487 = vadd.f32 0.0, %v2486
    %v2488 = vpop.f32.mrf.mxu0
    %v2489 = vadd.f32 0.0, %v2488
    %2490 = vdwg.mxu0
    %v2491 = vxor.u32 %v2440, 2147483648
    %v2492 = vxor.u32 %v2442, 2147483648
    %v2493 = vxor.u32 %v2444, 2147483648
    %v2494 = vxor.u32 %v2446, 2147483648
    %v2495 = vmul.f32 %v2491, 1.442695
    %v2496 = vpow.pop %v2495
    %v2497 = vmul.f32 %v2492, 1.442695
    %v2498 = vpow.pop %v2497
    %v2499 = vmul.f32 %v2493, 1.442695
    %v2500 = vpow.pop %v2499
    %v2501 = vmul.f32 %v2494, 1.442695
    %v2502 = vpow.pop %v2501
    %v2503 = vadd.f32 %v2496, 1.0
    %v2504 = vadd.f32 %v2498, 1.0
    %v2505 = vadd.f32 %v2500, 1.0
    %v2506 = vadd.f32 %v2502, 1.0
    %v2507 = vrcp.pop %v2503
    %v2508 = vmul.f32 1.0, %v2507
    %v2509 = vrcp.pop %v2504
    %v2510 = vmul.f32 1.0, %v2509
    %v2511 = vrcp.pop %v2505
    %v2512 = vmul.f32 1.0, %v2511
    %v2513 = vrcp.pop %v2506
    %v2514 = vmul.f32 1.0, %v2513
    %v2515 = vmul.f32 %v2440, %v2508
    %v2516 = vmul.f32 %v2442, %v2510
    %v2517 = vmul.f32 %v2444, %v2512
    %v2518 = vmul.f32 %v2446, %v2514
    %v2519 = vmul.f32 %v2515, %v2483
    %v2520 = vmul.f32 %v2516, %v2485
    %v2521 = vmul.f32 %v2517, %v2487
    %v2522 = vmul.f32 %v2518, %v2489
    %v2523 = vpack.c.bf16 %v2521, %v2519
    %v2524 = vpack.c.bf16 %v2522, %v2520
    %v2525 = vld [vmem:[%s13] sm:$0xf]
    %v2526 = vld [vmem:[%s13 + $0x4] sm:$0xf]
    %v2527 = vld [vmem:[%s13 + $0x8] sm:$0xf]
    %v2528 = vld [vmem:[%s13 + $0xc] sm:$0xf]
    %v2529 = vld [vmem:[%s13 + $0x10] sm:$0xf]
    %v2530 = vld [vmem:[%s13 + $0x14] sm:$0xf]
    %v2531 = vld [vmem:[%s13 + $0x18] sm:$0xf]
    %v2532 = vld [vmem:[%s13 + $0x1c] sm:$0xf]
    %v2533 = vld [vmem:[%s13 + $0x20] sm:$0xf]
    %v2534 = vld [vmem:[%s13 + $0x24] sm:$0xf]
    %v2535 = vld [vmem:[%s13 + $0x28] sm:$0xf]
    %v2536 = vld [vmem:[%s13 + $0x2c] sm:$0xf]
    %v2537 = vld [vmem:[%s13 + $0x30] sm:$0xf]
    %v2538 = vld [vmem:[%s13 + $0x34] sm:$0xf]
    %v2539 = vld [vmem:[%s13 + $0x38] sm:$0xf]
    %v2540 = vld [vmem:[%s13 + $0x3c] sm:$0xf]
    %v2541 = vld [vmem:[%s13 + $0x40] sm:$0xf]
    %v2542 = vld [vmem:[%s13 + $0x44] sm:$0xf]
    %v2543 = vld [vmem:[%s13 + $0x48] sm:$0xf]
    %v2544 = vld [vmem:[%s13 + $0x4c] sm:$0xf]
    %v2545 = vld [vmem:[%s13 + $0x50] sm:$0xf]
    %v2546 = vld [vmem:[%s13 + $0x54] sm:$0xf]
    %v2547 = vld [vmem:[%s13 + $0x58] sm:$0xf]
    %v2548 = vld [vmem:[%s13 + $0x5c] sm:$0xf]
    %v2549 = vld [vmem:[%s13 + $0x60] sm:$0xf]
    %v2550 = vld [vmem:[%s13 + $0x64] sm:$0xf]
    %v2551 = vld [vmem:[%s13 + $0x68] sm:$0xf]
    %v2552 = vld [vmem:[%s13 + $0x6c] sm:$0xf]
    %v2553 = vld [vmem:[%s13 + $0x70] sm:$0xf]
    %v2554 = vld [vmem:[%s13 + $0x74] sm:$0xf]
    %v2555 = vld [vmem:[%s13 + $0x78] sm:$0xf]
    %v2556 = vld [vmem:[%s13 + $0x7c] sm:$0xf]
    %v2589 = vunpack.c.l.b16 %v2525
    %v2590 = vunpack.c.l.b16 %v2526
    %v2591 = vunpack.c.l.b16 %v2527
    %v2592 = vunpack.c.l.b16 %v2528
    %v2593 = vunpack.c.l.b16 %v2529
    %v2594 = vunpack.c.l.b16 %v2530
    %v2595 = vunpack.c.l.b16 %v2531
    %v2596 = vunpack.c.l.b16 %v2532
    %v2597 = vunpack.c.l.b16 %v2533
    %v2598 = vunpack.c.l.b16 %v2534
    %v2599 = vunpack.c.l.b16 %v2535
    %v2600 = vunpack.c.l.b16 %v2536
    %v2601 = vunpack.c.l.b16 %v2537
    %v2602 = vunpack.c.l.b16 %v2538
    %v2603 = vunpack.c.l.b16 %v2539
    %v2604 = vunpack.c.l.b16 %v2540
    %v2605 = vunpack.c.l.b16 %v2541
    %v2606 = vunpack.c.l.b16 %v2542
    %v2607 = vunpack.c.l.b16 %v2543
    %v2608 = vunpack.c.l.b16 %v2544
    %v2609 = vunpack.c.l.b16 %v2545
    %v2610 = vunpack.c.l.b16 %v2546
    %v2611 = vunpack.c.l.b16 %v2547
    %v2612 = vunpack.c.l.b16 %v2548
    %v2613 = vunpack.c.l.b16 %v2549
    %v2614 = vunpack.c.l.b16 %v2550
    %v2615 = vunpack.c.l.b16 %v2551
    %v2616 = vunpack.c.l.b16 %v2552
    %v2617 = vunpack.c.l.b16 %v2553
    %v2618 = vunpack.c.l.b16 %v2554
    %v2619 = vunpack.c.l.b16 %v2555
    %v2620 = vunpack.c.l.b16 %v2556
    %v2621 = vpack.c.b16 %v2590, %v2589
    %v2622 = vpack.c.b16 %v2592, %v2591
    %v2623 = vpack.c.b16 %v2594, %v2593
    %v2624 = vpack.c.b16 %v2596, %v2595
    %v2625 = vpack.c.b16 %v2598, %v2597
    %v2626 = vpack.c.b16 %v2600, %v2599
    %v2627 = vpack.c.b16 %v2602, %v2601
    %v2628 = vpack.c.b16 %v2604, %v2603
    %v2629 = vpack.c.b16 %v2606, %v2605
    %v2630 = vpack.c.b16 %v2608, %v2607
    %v2631 = vpack.c.b16 %v2610, %v2609
    %v2632 = vpack.c.b16 %v2612, %v2611
    %v2633 = vpack.c.b16 %v2614, %v2613
    %v2634 = vpack.c.b16 %v2616, %v2615
    %v2635 = vpack.c.b16 %v2618, %v2617
    %v2636 = vpack.c.b16 %v2620, %v2619
    %2653 = vmatprep.subr.bf16.mxu0 0
    %2654 = vmatpush1.bf16.msra.mxu0 %v2628
    %2655 = vmatprep.subr.bf16.mxu0 0
    %2656 = vmatpush1.bf16.msra.mxu0 %v2627
    %2657 = vmatprep.subr.bf16.mxu0 0
    %2658 = vmatpush1.bf16.msra.mxu0 %v2626
    %2659 = vmatprep.subr.bf16.mxu0 0
    %2660 = vmatpush1.bf16.msra.mxu0 %v2625
    %2661 = vmatprep.subr.bf16.mxu0 0
    %2662 = vmatpush1.bf16.msra.mxu0 %v2624
    %2663 = vmatprep.subr.bf16.mxu0 0
    %2664 = vmatpush1.bf16.msra.mxu0 %v2623
    %2665 = vmatprep.subr.bf16.mxu0 0
    %2666 = vmatpush1.bf16.msra.mxu0 %v2622
    %2667 = vmatprep.subr.bf16.mxu0 0
    %2668 = vmatpush1.bf16.msra.mxu0 %v2621
    %2669 = vmatprep.subr.bf16.mxu0 0
    %2670 = vmatpush2.bf16.msra.mxu0 %v2636
    %2671 = vmatprep.subr.bf16.mxu0 0
    %2672 = vmatpush2.bf16.msra.mxu0 %v2635
    %2673 = vmatprep.subr.bf16.mxu0 0
    %2674 = vmatpush2.bf16.msra.mxu0 %v2634
    %2675 = vmatprep.subr.bf16.mxu0 0
    %2676 = vmatpush2.bf16.msra.mxu0 %v2633
    %2677 = vmatprep.subr.bf16.mxu0 0
    %2678 = vmatpush2.bf16.msra.mxu0 %v2632
    %2679 = vmatprep.subr.bf16.mxu0 0
    %2680 = vmatpush2.bf16.msra.mxu0 %v2631
    %2681 = vmatprep.subr.bf16.mxu0 0
    %2682 = vmatpush2.bf16.msra.mxu0 %v2630
    %2683 = vmatprep.subr.bf16.mxu0 0
    %2684 = vmatpush2.bf16.msra.mxu0 %v2629
    %2685 = vmatprep.mubr.bf16.mxu0 %v2524
    %2686 = vmatmul.mubr.bf16.gmra.mxu0 %v2523
    %v2687 = vpop.f32.mrf.mxu0
    %v2688 = vadd.f32 0.0, %v2687
    %v2689 = vpop.f32.mrf.mxu0
    %v2690 = vpop.f32.mrf.mxu0
    %v2691 = vadd.f32 0.0, %v2690
    %v2692 = vpop.f32.mrf.mxu0
    %2693 = vdwg.mxu0
    %v2694 = vadd.f32 %v2278, %v2688
    %v2695 = vadd.f32 %v2279, %v2691
    %2696 = vst.msk [vmem:[#allocation11] sm:$0xff] %vm108, %v2694
    %2697 = vst.msk [vmem:[#allocation11 + $0x8] sm:$0xff] %vm108, %v2695
    // Predicated region
    $region74: #{tpu_custom_call.1} parent=1 // pred_check
      _
    $region75: #{tpu_custom_call.1} parent=1 // pred_check_branch
      %2699 = sbr.rel (0) target = $region77
    $region76: #{tpu_custom_call.1} parent=1 // pred_region
      %s2701 = ssub.s32 256, 256
      %2702 = vsyncadd [#allocation5], %s2701
      %s2703 = sshll.u32 [#allocation11], 4
      %s2704 = int_to_ptr.vmem [resolvable:$true] %s2703
      %2709 = dma.vmem_to_hbm [thread:$0]  %s2704, 256, %s14, [#allocation5], 128, 128, 8
    $region77: #{tpu_custom_call.1} parent=1 // pred_fallthru
      _
    // Predicated region
    $region78: #{tpu_custom_call.1} parent=1 // pred_check
      _
    $region79: #{tpu_custom_call.1} parent=1 // pred_check_branch
      %2711 = sbr.rel (0) target = $region81
    $region80: #{tpu_custom_call.1} parent=1 // pred_region
      %2712 = dma.done [#allocation5], 256
    $region81: #{tpu_custom_call.1} parent=1 // pred_fallthru
      _
    %2713 = vsyncpa [#allocation4], 1
    %2714 = vsyncpa [#allocation7], 1
    %2715 = vsyncpa [#allocation10], 1
    %2716 = vsyncpa [#allocation5], 1

</llo_original>
